<compile_context>
chip_gen: v7x
topology: tpu7x:2x2x1
jax: 0.10.0
libtpu: 0.0.40
codegen_flags: <defaults>
</compile_context>

<pallas_src>
import jax
import jax.numpy as jnp
from jax.experimental import pallas as pl
from jax.experimental.pallas import tpu as pltpu

D_MODEL = 8
N_HEADS = 2
N_LAYERS = 3
DIM_FF = 2048          # nn.TransformerEncoderLayer default
NUM_CLASSES = 3
FC1_DIM = 256
LN_EPS = 1e-5
BATCH = 2              # example batch size (axis 1 of src)


def _layer_norm(x, w, b):
    """PyTorch-style LayerNorm over the last dim (biased variance), f32."""
    mu = jnp.mean(x, axis=-1, keepdims=True)
    xc = x - mu
    var = jnp.mean(xc * xc, axis=-1, keepdims=True)
    return xc * jax.lax.rsqrt(var + LN_EPS) * w + b


def transformer_kernel(src_ref,
                       w_qkv_ref, b_qkv_ref, w_out_ref, b_out_ref,
                       ln1_w_ref, ln1_b_ref, ln2_w_ref, ln2_b_ref,
                       w_ff1_ref, b_ff1_ref, w_ff2t_ref, b_ff2_ref,
                       fc1_w_ref, fc1_b_ref, fc2_wt_ref, fc2_b_ref,
                       out_ref, x_state):
    layer = pl.program_id(0)

    NS, E = x_state.shape          # (N*S, E) residual stream, batch-major rows
    S = NS // BATCH
    H = N_HEADS
    Dh = E // H

    # Initialize the persistent residual-stream scratch at the first layer.
    @pl.when(layer == 0)
    def _():
        x_state[...] = src_ref[...]

    x = x_state[...]                                   # (N*S, E) f32

    # ----- multi-head self-attention (post-norm, PyTorch semantics) -----
    w_qkv = w_qkv_ref[0]                               # (E, 3E) bf16, q-scale folded
    b_qkv = b_qkv_ref[0]                               # (1, 3E) f32 (q-scale folded)
    w_out = w_out_ref[0].astype(jnp.float32)           # (E, E)  (bf16 in HBM)
    b_out = b_out_ref[0]                               # (1, E)  f32

    qkv = jnp.dot(x.astype(jnp.bfloat16), w_qkv,
                  preferred_element_type=jnp.float32) + b_qkv       # (N*S, 3E) f32

    attn_rows = []
    for n in range(BATCH):                             # tiny unrolled attention core
        r0 = n * S
        acc = None
        for h in range(H):
            c = h * Dh
            qh = qkv[r0:r0 + S, c:c + Dh]                            # (S, Dh)
            kh = qkv[r0:r0 + S, E + c:E + c + Dh]
            vh = qkv[r0:r0 + S, 2 * E + c:2 * E + c + Dh]
            s = jax.lax.dot_general(qh, kh, (((1,), (1,)), ((), ())),
                                    preferred_element_type=jnp.float32)  # (S, S)
            m = jnp.max(s, axis=-1, keepdims=True)
            e = jnp.exp(s - m)
            p = e / jnp.sum(e, axis=-1, keepdims=True)
            ctx = jnp.dot(p, vh, preferred_element_type=jnp.float32)     # (S, Dh)
            # concat(heads) @ W_out == sum_h head_h @ W_out[h*Dh:(h+1)*Dh, :]
            contrib = jnp.dot(ctx, w_out[c:c + Dh, :],
                              preferred_element_type=jnp.float32)        # (S, E)
            acc = contrib if acc is None else acc + contrib
        attn_rows.append(acc)
    attn = jnp.concatenate(attn_rows, axis=0) + b_out                # (N*S, E)

    x = _layer_norm(x + attn, ln1_w_ref[0], ln1_b_ref[0])

    # ----- feed-forward block (bf16 weights, f32 accumulation) -----
    hdn = jnp.maximum(
        jnp.dot(x.astype(jnp.bfloat16), w_ff1_ref[0],
                preferred_element_type=jnp.float32) + b_ff1_ref[0],
        0.0)                                                         # (N*S, F)
    # w_ff2t is stored lane-dense as (E, F); contract F on both operands.
    ff = jax.lax.dot_general(hdn.astype(jnp.bfloat16), w_ff2t_ref[0],
                             (((1,), (1,)), ((), ())),
                             preferred_element_type=jnp.float32) + b_ff2_ref[0]
    x = _layer_norm(x + ff, ln2_w_ref[0], ln2_b_ref[0])

    x_state[...] = x

    # ----- classifier head + grouped softmax, only at the last layer -----
    @pl.when(layer == pl.num_programs(0) - 1)
    def _():
        x_last = x[(BATCH - 1) * S:, :]                              # batch -1: (S, E)
        h1 = jnp.maximum(
            jnp.dot(x_last.astype(jnp.bfloat16), fc1_w_ref[...],
                    preferred_element_type=jnp.float32) + fc1_b_ref[...],
            0.0)                                                     # (S, 256)
        logits = jax.lax.dot_general(h1.astype(jnp.bfloat16), fc2_wt_ref[...],
                                     (((1,), (1,)), ((), ())),
                                     preferred_element_type=jnp.float32
                                     ) + fc2_b_ref[...]              # (S, 6)
        # softmax over groups of NUM_CLASSES columns (== view(-1,2,3) + softmax(-1))
        parts = []
        for g in range(2):
            blk = logits[:, NUM_CLASSES * g:NUM_CLASSES * (g + 1)]
            m = jnp.max(blk, axis=-1, keepdims=True)
            e = jnp.exp(blk - m)
            parts.append(e / jnp.sum(e, axis=-1, keepdims=True))
        out_ref[...] = jnp.concatenate(parts, axis=-1)               # single store


def init_params(key):
    """Deterministic synthetic parameters (shapes follow the PyTorch module).
    Matmul weights are stored pre-transposed / lane-dense and in bfloat16; the
    1/sqrt(head_dim) q-scale is folded into the Q columns of the QKV proj."""
    E, L, F = D_MODEL, N_LAYERS, DIM_FF
    Dh = D_MODEL // N_HEADS
    ks = jax.random.split(key, 12)
    s = 0.05

    def rn(k, shape):
        return jax.random.normal(k, shape, jnp.float32) * s

    w_qkv = rn(ks[0], (L, E, 3 * E))            # in_proj_weight.T per layer
    b_qkv = rn(ks[1], (L, 1, 3 * E))
    q_scale = jnp.concatenate(
        [jnp.full((E,), 1.0 / (Dh ** 0.5), jnp.float32),
         jnp.ones((2 * E,), jnp.float32)])
    w_qkv = w_qkv * q_scale                     # scale Q weight columns
    b_qkv = b_qkv * q_scale                     # and the Q bias

    params = dict(
        w_qkv=w_qkv.astype(jnp.bfloat16),
        b_qkv=b_qkv,                                           # f32
        w_out=rn(ks[2], (L, E, E)).astype(jnp.bfloat16),       # out_proj.weight.T
        b_out=rn(ks[3], (L, 1, E)),
        ln1_w=jnp.ones((L, 1, E), jnp.float32),
        ln1_b=jnp.zeros((L, 1, E), jnp.float32),
        ln2_w=jnp.ones((L, 1, E), jnp.float32),
        ln2_b=jnp.zeros((L, 1, E), jnp.float32),
        w_ff1=rn(ks[4], (L, E, F)).astype(jnp.bfloat16),       # linear1.weight.T (lane-dense)
        b_ff1=rn(ks[5], (L, 1, F)),
        w_ff2t=rn(ks[6], (L, E, F)).astype(jnp.bfloat16),      # linear2.weight as-is (lane-dense)
        b_ff2=rn(ks[7], (L, 1, E)),
        fc1_w=rn(ks[8], (E, FC1_DIM)).astype(jnp.bfloat16),    # fc1.weight.T
        fc1_b=rn(ks[9], (1, FC1_DIM)),
        fc2_wt=rn(ks[10], (2 * NUM_CLASSES, FC1_DIM)).astype(jnp.bfloat16),  # fc2.weight as-is
        fc2_b=rn(ks[11], (1, 2 * NUM_CLASSES)),
    )
    order = ["w_qkv", "b_qkv", "w_out", "b_out",
             "ln1_w", "ln1_b", "ln2_w", "ln2_b",
             "w_ff1", "b_ff1", "w_ff2t", "b_ff2",
             "fc1_w", "fc1_b", "fc2_wt", "fc2_b"]
    return tuple(params[k] for k in order)


@jax.jit
def transformer_forward(src, params):
    S, N, E = src.shape
    assert N == BATCH and E == D_MODEL
    # Layout plumbing only: batch-major rows so per-batch attention is a
    # contiguous sublane slice inside the kernel.
    src2d = jnp.transpose(src, (1, 0, 2)).reshape(N * S, E)

    def per_layer(shape):
        return pl.BlockSpec(shape, lambda l: (l, 0, 0))

    def whole(shape):
        return pl.BlockSpec(shape, lambda l: (0, 0))

    in_specs = [
        whole((N * S, E)),                        # src (stacked)
        per_layer((1, E, 3 * E)),                 # w_qkv
        per_layer((1, 1, 3 * E)),                 # b_qkv
        per_layer((1, E, E)),                     # w_out
        per_layer((1, 1, E)),                     # b_out
        per_layer((1, 1, E)),                     # ln1_w
        per_layer((1, 1, E)),                     # ln1_b
        per_layer((1, 1, E)),                     # ln2_w
        per_layer((1, 1, E)),                     # ln2_b
        per_layer((1, E, DIM_FF)),                # w_ff1
        per_layer((1, 1, DIM_FF)),                # b_ff1
        per_layer((1, E, DIM_FF)),                # w_ff2t (lane-dense)
        per_layer((1, 1, E)),                     # b_ff2
        whole((E, FC1_DIM)),                      # fc1_w
        whole((1, FC1_DIM)),                      # fc1_b
        whole((2 * NUM_CLASSES, FC1_DIM)),        # fc2_wt (lane-dense)
        whole((1, 2 * NUM_CLASSES)),              # fc2_b
    ]

    out6 = pl.pallas_call(
        transformer_kernel,
        out_shape=jax.ShapeDtypeStruct((S, 2 * NUM_CLASSES), jnp.float32),
        grid_spec=pltpu.PrefetchScalarGridSpec(
            num_scalar_prefetch=0,
            grid=(N_LAYERS,),
            in_specs=in_specs,
            out_specs=pl.BlockSpec((S, 2 * NUM_CLASSES), lambda l: (0, 0)),
            scratch_shapes=[pltpu.VMEM((N * S, E), jnp.float32)]),
        compiler_params=pltpu.CompilerParams(
            dimension_semantics=("arbitrary",)),
    )(src2d, *params)
    # matches `.view(-1, 2, 3)` on the (S, 6) logits
    return out6.reshape(-1, 2, NUM_CLASSES)


if __name__ == "__main__":
    key = jax.random.PRNGKey(0)
    k_src, k_par = jax.random.split(key)

    S, N, E = 8, BATCH, D_MODEL          # (seq, batch, feature)
    src = jax.random.normal(k_src, (S, N, E), jnp.float32)
    params = init_params(k_par)

    out = transformer_forward(src, params)
    out = jax.block_until_ready(out)

    assert out.shape == (S, 2, NUM_CLASSES), out.shape
    # softmax rows must sum to 1
    row_sums = jnp.sum(out, axis=-1)
    assert jnp.allclose(row_sums, jnp.ones_like(row_sums), atol=1e-3), row_sums
    assert bool(jnp.all(jnp.isfinite(out)))
    print("KERNEL_OK")
</pallas_src>

<mosaic_0001>
module attributes {stable_mosaic.version = 11 : i64} {
  func.func @transformer_kernel(%arg0: i32, %arg1: memref<16x8xf32, #tpu.memory_space<vmem>>, %arg2: memref<1x8x24xbf16, #tpu.memory_space<vmem>>, %arg3: memref<1x1x24xf32, #tpu.memory_space<vmem>>, %arg4: memref<1x8x8xbf16, #tpu.memory_space<vmem>>, %arg5: memref<1x1x8xf32, #tpu.memory_space<vmem>>, %arg6: memref<1x1x8xf32, #tpu.memory_space<vmem>>, %arg7: memref<1x1x8xf32, #tpu.memory_space<vmem>>, %arg8: memref<1x1x8xf32, #tpu.memory_space<vmem>>, %arg9: memref<1x1x8xf32, #tpu.memory_space<vmem>>, %arg10: memref<1x8x2048xbf16, #tpu.memory_space<vmem>>, %arg11: memref<1x1x2048xf32, #tpu.memory_space<vmem>>, %arg12: memref<1x8x2048xbf16, #tpu.memory_space<vmem>>, %arg13: memref<1x1x8xf32, #tpu.memory_space<vmem>>, %arg14: memref<8x256xbf16, #tpu.memory_space<vmem>>, %arg15: memref<1x256xf32, #tpu.memory_space<vmem>>, %arg16: memref<6x256xbf16, #tpu.memory_space<vmem>>, %arg17: memref<1x6xf32, #tpu.memory_space<vmem>>, %arg18: memref<8x6xf32, #tpu.memory_space<vmem>>, %arg19: memref<16x8xf32, #tpu.memory_space<vmem>>) attributes {dimension_semantics = [#tpu.dimension_semantics<arbitrary>], iteration_bounds = array<i64: 3>, scalar_prefetch = 0 : i64, scratch_operands = 1 : i64, tpu.core_type = #tpu.core_type<tc>, window_params = [{pipeline_mode = #tpu.pipeline_mode<synchronous>, transform_indices = @transform_0, window_bounds = array<i64: 16, 8>}, {transform_indices = @transform_1, window_bounds = array<i64: 1, 8, 24>}, {transform_indices = @transform_2, window_bounds = array<i64: 1, 1, 24>}, {transform_indices = @transform_3, window_bounds = array<i64: 1, 8, 8>}, {transform_indices = @transform_4, window_bounds = array<i64: 1, 1, 8>}, {transform_indices = @transform_5, window_bounds = array<i64: 1, 1, 8>}, {transform_indices = @transform_6, window_bounds = array<i64: 1, 1, 8>}, {transform_indices = @transform_7, window_bounds = array<i64: 1, 1, 8>}, {transform_indices = @transform_8, window_bounds = array<i64: 1, 1, 8>}, {transform_indices = @transform_9, window_bounds = array<i64: 1, 8, 2048>}, {transform_indices = @transform_10, window_bounds = array<i64: 1, 1, 2048>}, {transform_indices = @transform_11, window_bounds = array<i64: 1, 8, 2048>}, {transform_indices = @transform_12, window_bounds = array<i64: 1, 1, 8>}, {pipeline_mode = #tpu.pipeline_mode<synchronous>, transform_indices = @transform_13, window_bounds = array<i64: 8, 256>}, {pipeline_mode = #tpu.pipeline_mode<synchronous>, transform_indices = @transform_14, window_bounds = array<i64: 1, 256>}, {pipeline_mode = #tpu.pipeline_mode<synchronous>, transform_indices = @transform_15, window_bounds = array<i64: 6, 256>}, {pipeline_mode = #tpu.pipeline_mode<synchronous>, transform_indices = @transform_16, window_bounds = array<i64: 1, 6>}, {pipeline_mode = #tpu.pipeline_mode<synchronous>, transform_indices = @transform_17, window_bounds = array<i64: 8, 6>}]} {
    %c0_i32 = arith.constant 0 : i32
    %0 = arith.cmpi eq, %arg0, %c0_i32 : i32
    %1 = arith.extui %0 : i1 to i32
    %c0_i32_0 = arith.constant 0 : i32
    %2 = arith.cmpi ne, %1, %c0_i32_0 : i32
    scf.if %2 {
      %c0_74 = arith.constant 0 : index
      %c0_75 = arith.constant 0 : index
      %158 = vector.load %arg1[%c0_74, %c0_75] : memref<16x8xf32, #tpu.memory_space<vmem>>, vector<16x8xf32>
      %c0_76 = arith.constant 0 : index
      %c0_77 = arith.constant 0 : index
      %159 = vector.load %arg19[%c0_76, %c0_77] : memref<16x8xf32, #tpu.memory_space<vmem>>, vector<16x8xf32>
      tpu.vector_store %arg19[%c0_76, %c0_77], %158 {strides = array<i32>} : memref<16x8xf32, #tpu.memory_space<vmem>>, vector<16x8xf32>,
    } else {
    }
    %c0 = arith.constant 0 : index
    %c0_1 = arith.constant 0 : index
    %3 = vector.load %arg19[%c0, %c0_1] : memref<16x8xf32, #tpu.memory_space<vmem>>, vector<16x8xf32>
    %c0_2 = arith.constant 0 : index
    %c0_3 = arith.constant 0 : index
    %c0_4 = arith.constant 0 : index
    %4 = vector.load %arg2[%c0_2, %c0_3, %c0_4] : memref<1x8x24xbf16, #tpu.memory_space<vmem>>, vector<1x8x24xbf16>
    %5 = vector.shape_cast %4 : vector<1x8x24xbf16> to vector<8x24xbf16>
    %c0_5 = arith.constant 0 : index
    %c0_6 = arith.constant 0 : index
    %c0_7 = arith.constant 0 : index
    %6 = vector.load %arg3[%c0_5, %c0_6, %c0_7] : memref<1x1x24xf32, #tpu.memory_space<vmem>>, vector<1x1x24xf32>
    %7 = vector.shape_cast %6 : vector<1x1x24xf32> to vector<1x24xf32>
    %c0_8 = arith.constant 0 : index
    %c0_9 = arith.constant 0 : index
    %c0_10 = arith.constant 0 : index
    %8 = vector.load %arg4[%c0_8, %c0_9, %c0_10] : memref<1x8x8xbf16, #tpu.memory_space<vmem>>, vector<1x8x8xbf16>
    %9 = vector.shape_cast %8 : vector<1x8x8xbf16> to vector<8x8xbf16>
    %10 = arith.extf %9 : vector<8x8xbf16> to vector<8x8xf32>
    %c0_11 = arith.constant 0 : index
    %c0_12 = arith.constant 0 : index
    %c0_13 = arith.constant 0 : index
    %11 = vector.load %arg5[%c0_11, %c0_12, %c0_13] : memref<1x1x8xf32, #tpu.memory_space<vmem>>, vector<1x1x8xf32>
    %12 = vector.shape_cast %11 : vector<1x1x8xf32> to vector<1x8xf32>
    %13 = arith.truncf %3 : vector<16x8xf32> to vector<16x8xbf16>
    %cst = arith.constant dense<0.000000e+00> : vector<16x24xf32>
    %14 = tpu.matmul %13, %5, %cst {dimension_numbers = #tpu.dot_dimension_numbers<[1], [0], [0], [1], [0, 0, 1, 1], [], []>} : vector<16x8xbf16>, vector<8x24xbf16>, vector<16x24xf32> -> vector<16x24xf32>
    %15 = vector.broadcast %7 : vector<1x24xf32> to vector<16x24xf32>
    %16 = arith.addf %14, %15 : vector<16x24xf32>
    %17 = vector.extract_strided_slice %16 {offsets = [0, 0], sizes = [8, 4], strides = [1, 1]} : vector<16x24xf32> to vector<8x4xf32>
    %18 = vector.extract_strided_slice %16 {offsets = [0, 8], sizes = [8, 4], strides = [1, 1]} : vector<16x24xf32> to vector<8x4xf32>
    %19 = vector.extract_strided_slice %16 {offsets = [0, 16], sizes = [8, 4], strides = [1, 1]} : vector<16x24xf32> to vector<8x4xf32>
    %cst_14 = arith.constant dense<0.000000e+00> : vector<8x8xf32>
    %20 = tpu.matmul %17, %18, %cst_14 {dimension_numbers = #tpu.dot_dimension_numbers<[1], [1], [0], [0], [0, 0, 1, 0], [], []>} : vector<8x4xf32>, vector<8x4xf32>, vector<8x8xf32> -> vector<8x8xf32>
    %cst_15 = arith.constant dense<0xFF800000> : vector<8xf32>
    %21 = vector.multi_reduction <maximumf>, %20, %cst_15 [1] : vector<8x8xf32> to vector<8xf32>
    %22 = vector.shape_cast %21 : vector<8xf32> to vector<8x1xf32>
    %23 = vector.broadcast %22 : vector<8x1xf32> to vector<8x8xf32>
    %24 = arith.subf %20, %23 : vector<8x8xf32>
    %25 = math.exp %24 : vector<8x8xf32>
    %cst_16 = arith.constant dense<0.000000e+00> : vector<8xf32>
    %26 = vector.multi_reduction <add>, %25, %cst_16 [1] : vector<8x8xf32> to vector<8xf32>
    %27 = vector.shape_cast %26 : vector<8xf32> to vector<8x1xf32>
    %28 = vector.broadcast %27 : vector<8x1xf32> to vector<8x8xf32>
    %29 = arith.divf %25, %28 : vector<8x8xf32>
    %cst_17 = arith.constant dense<0.000000e+00> : vector<8x4xf32>
    %30 = tpu.matmul %29, %19, %cst_17 {dimension_numbers = #tpu.dot_dimension_numbers<[1], [0], [0], [1], [0, 0, 1, 1], [], []>} : vector<8x8xf32>, vector<8x4xf32>, vector<8x4xf32> -> vector<8x4xf32>
    %31 = vector.extract_strided_slice %10 {offsets = [0, 0], sizes = [4, 8], strides = [1, 1]} : vector<8x8xf32> to vector<4x8xf32>
    %cst_18 = arith.constant dense<0.000000e+00> : vector<8x8xf32>
    %32 = tpu.matmul %30, %31, %cst_18 {dimension_numbers = #tpu.dot_dimension_numbers<[1], [0], [0], [1], [0, 0, 1, 1], [], []>} : vector<8x4xf32>, vector<4x8xf32>, vector<8x8xf32> -> vector<8x8xf32>
    %33 = vector.extract_strided_slice %16 {offsets = [0, 4], sizes = [8, 4], strides = [1, 1]} : vector<16x24xf32> to vector<8x4xf32>
    %34 = vector.extract_strided_slice %16 {offsets = [0, 12], sizes = [8, 4], strides = [1, 1]} : vector<16x24xf32> to vector<8x4xf32>
    %35 = vector.extract_strided_slice %16 {offsets = [0, 20], sizes = [8, 4], strides = [1, 1]} : vector<16x24xf32> to vector<8x4xf32>
    %cst_19 = arith.constant dense<0.000000e+00> : vector<8x8xf32>
    %36 = tpu.matmul %33, %34, %cst_19 {dimension_numbers = #tpu.dot_dimension_numbers<[1], [1], [0], [0], [0, 0, 1, 0], [], []>} : vector<8x4xf32>, vector<8x4xf32>, vector<8x8xf32> -> vector<8x8xf32>
    %cst_20 = arith.constant dense<0xFF800000> : vector<8xf32>
    %37 = vector.multi_reduction <maximumf>, %36, %cst_20 [1] : vector<8x8xf32> to vector<8xf32>
    %38 = vector.shape_cast %37 : vector<8xf32> to vector<8x1xf32>
    %39 = vector.broadcast %38 : vector<8x1xf32> to vector<8x8xf32>
    %40 = arith.subf %36, %39 : vector<8x8xf32>
    %41 = math.exp %40 : vector<8x8xf32>
    %cst_21 = arith.constant dense<0.000000e+00> : vector<8xf32>
    %42 = vector.multi_reduction <add>, %41, %cst_21 [1] : vector<8x8xf32> to vector<8xf32>
    %43 = vector.shape_cast %42 : vector<8xf32> to vector<8x1xf32>
    %44 = vector.broadcast %43 : vector<8x1xf32> to vector<8x8xf32>
    %45 = arith.divf %41, %44 : vector<8x8xf32>
    %cst_22 = arith.constant dense<0.000000e+00> : vector<8x4xf32>
    %46 = tpu.matmul %45, %35, %cst_22 {dimension_numbers = #tpu.dot_dimension_numbers<[1], [0], [0], [1], [0, 0, 1, 1], [], []>} : vector<8x8xf32>, vector<8x4xf32>, vector<8x4xf32> -> vector<8x4xf32>
    %47 = vector.extract_strided_slice %10 {offsets = [4, 0], sizes = [4, 8], strides = [1, 1]} : vector<8x8xf32> to vector<4x8xf32>
    %cst_23 = arith.constant dense<0.000000e+00> : vector<8x8xf32>
    %48 = tpu.matmul %46, %47, %cst_23 {dimension_numbers = #tpu.dot_dimension_numbers<[1], [0], [0], [1], [0, 0, 1, 1], [], []>} : vector<8x4xf32>, vector<4x8xf32>, vector<8x8xf32> -> vector<8x8xf32>
    %49 = arith.addf %32, %48 : vector<8x8xf32>
    %50 = vector.extract_strided_slice %16 {offsets = [8, 0], sizes = [8, 4], strides = [1, 1]} : vector<16x24xf32> to vector<8x4xf32>
    %51 = vector.extract_strided_slice %16 {offsets = [8, 8], sizes = [8, 4], strides = [1, 1]} : vector<16x24xf32> to vector<8x4xf32>
    %52 = vector.extract_strided_slice %16 {offsets = [8, 16], sizes = [8, 4], strides = [1, 1]} : vector<16x24xf32> to vector<8x4xf32>
    %cst_24 = arith.constant dense<0.000000e+00> : vector<8x8xf32>
    %53 = tpu.matmul %50, %51, %cst_24 {dimension_numbers = #tpu.dot_dimension_numbers<[1], [1], [0], [0], [0, 0, 1, 0], [], []>} : vector<8x4xf32>, vector<8x4xf32>, vector<8x8xf32> -> vector<8x8xf32>
    %cst_25 = arith.constant dense<0xFF800000> : vector<8xf32>
    %54 = vector.multi_reduction <maximumf>, %53, %cst_25 [1] : vector<8x8xf32> to vector<8xf32>
    %55 = vector.shape_cast %54 : vector<8xf32> to vector<8x1xf32>
    %56 = vector.broadcast %55 : vector<8x1xf32> to vector<8x8xf32>
    %57 = arith.subf %53, %56 : vector<8x8xf32>
    %58 = math.exp %57 : vector<8x8xf32>
    %cst_26 = arith.constant dense<0.000000e+00> : vector<8xf32>
    %59 = vector.multi_reduction <add>, %58, %cst_26 [1] : vector<8x8xf32> to vector<8xf32>
    %60 = vector.shape_cast %59 : vector<8xf32> to vector<8x1xf32>
    %61 = vector.broadcast %60 : vector<8x1xf32> to vector<8x8xf32>
    %62 = arith.divf %58, %61 : vector<8x8xf32>
    %cst_27 = arith.constant dense<0.000000e+00> : vector<8x4xf32>
    %63 = tpu.matmul %62, %52, %cst_27 {dimension_numbers = #tpu.dot_dimension_numbers<[1], [0], [0], [1], [0, 0, 1, 1], [], []>} : vector<8x8xf32>, vector<8x4xf32>, vector<8x4xf32> -> vector<8x4xf32>
    %64 = vector.extract_strided_slice %10 {offsets = [0, 0], sizes = [4, 8], strides = [1, 1]} : vector<8x8xf32> to vector<4x8xf32>
    %cst_28 = arith.constant dense<0.000000e+00> : vector<8x8xf32>
    %65 = tpu.matmul %63, %64, %cst_28 {dimension_numbers = #tpu.dot_dimension_numbers<[1], [0], [0], [1], [0, 0, 1, 1], [], []>} : vector<8x4xf32>, vector<4x8xf32>, vector<8x8xf32> -> vector<8x8xf32>
    %66 = vector.extract_strided_slice %16 {offsets = [8, 4], sizes = [8, 4], strides = [1, 1]} : vector<16x24xf32> to vector<8x4xf32>
    %67 = vector.extract_strided_slice %16 {offsets = [8, 12], sizes = [8, 4], strides = [1, 1]} : vector<16x24xf32> to vector<8x4xf32>
    %68 = vector.extract_strided_slice %16 {offsets = [8, 20], sizes = [8, 4], strides = [1, 1]} : vector<16x24xf32> to vector<8x4xf32>
    %cst_29 = arith.constant dense<0.000000e+00> : vector<8x8xf32>
    %69 = tpu.matmul %66, %67, %cst_29 {dimension_numbers = #tpu.dot_dimension_numbers<[1], [1], [0], [0], [0, 0, 1, 0], [], []>} : vector<8x4xf32>, vector<8x4xf32>, vector<8x8xf32> -> vector<8x8xf32>
    %cst_30 = arith.constant dense<0xFF800000> : vector<8xf32>
    %70 = vector.multi_reduction <maximumf>, %69, %cst_30 [1] : vector<8x8xf32> to vector<8xf32>
    %71 = vector.shape_cast %70 : vector<8xf32> to vector<8x1xf32>
    %72 = vector.broadcast %71 : vector<8x1xf32> to vector<8x8xf32>
    %73 = arith.subf %69, %72 : vector<8x8xf32>
    %74 = math.exp %73 : vector<8x8xf32>
    %cst_31 = arith.constant dense<0.000000e+00> : vector<8xf32>
    %75 = vector.multi_reduction <add>, %74, %cst_31 [1] : vector<8x8xf32> to vector<8xf32>
    %76 = vector.shape_cast %75 : vector<8xf32> to vector<8x1xf32>
    %77 = vector.broadcast %76 : vector<8x1xf32> to vector<8x8xf32>
    %78 = arith.divf %74, %77 : vector<8x8xf32>
    %cst_32 = arith.constant dense<0.000000e+00> : vector<8x4xf32>
    %79 = tpu.matmul %78, %68, %cst_32 {dimension_numbers = #tpu.dot_dimension_numbers<[1], [0], [0], [1], [0, 0, 1, 1], [], []>} : vector<8x8xf32>, vector<8x4xf32>, vector<8x4xf32> -> vector<8x4xf32>
    %80 = vector.extract_strided_slice %10 {offsets = [4, 0], sizes = [4, 8], strides = [1, 1]} : vector<8x8xf32> to vector<4x8xf32>
    %cst_33 = arith.constant dense<0.000000e+00> : vector<8x8xf32>
    %81 = tpu.matmul %79, %80, %cst_33 {dimension_numbers = #tpu.dot_dimension_numbers<[1], [0], [0], [1], [0, 0, 1, 1], [], []>} : vector<8x4xf32>, vector<4x8xf32>, vector<8x8xf32> -> vector<8x8xf32>
    %82 = arith.addf %65, %81 : vector<8x8xf32>
    %83 = tpu.concatenate %49, %82 in 0 : vector<8x8xf32>, vector<8x8xf32> -> vector<16x8xf32>
    %84 = vector.broadcast %12 : vector<1x8xf32> to vector<16x8xf32>
    %85 = arith.addf %83, %84 : vector<16x8xf32>
    %86 = arith.addf %3, %85 : vector<16x8xf32>
    %c0_34 = arith.constant 0 : index
    %c0_35 = arith.constant 0 : index
    %c0_36 = arith.constant 0 : index
    %87 = vector.load %arg6[%c0_34, %c0_35, %c0_36] : memref<1x1x8xf32, #tpu.memory_space<vmem>>, vector<1x1x8xf32>
    %88 = vector.shape_cast %87 : vector<1x1x8xf32> to vector<1x8xf32>
    %c0_37 = arith.constant 0 : index
    %c0_38 = arith.constant 0 : index
    %c0_39 = arith.constant 0 : index
    %89 = vector.load %arg7[%c0_37, %c0_38, %c0_39] : memref<1x1x8xf32, #tpu.memory_space<vmem>>, vector<1x1x8xf32>
    %90 = vector.shape_cast %89 : vector<1x1x8xf32> to vector<1x8xf32>
    %cst_40 = arith.constant dense<0.000000e+00> : vector<16xf32>
    %91 = vector.multi_reduction <add>, %86, %cst_40 [1] : vector<16x8xf32> to vector<16xf32>
    %92 = vector.shape_cast %91 : vector<16xf32> to vector<16x1xf32>
    %cst_41 = arith.constant 8.000000e+00 : f32
    %93 = vector.broadcast %cst_41 : f32 to vector<16x1xf32>
    %94 = arith.divf %92, %93 : vector<16x1xf32>
    %95 = vector.broadcast %94 : vector<16x1xf32> to vector<16x8xf32>
    %96 = arith.subf %86, %95 : vector<16x8xf32>
    %97 = arith.mulf %96, %96 : vector<16x8xf32>
    %cst_42 = arith.constant dense<0.000000e+00> : vector<16xf32>
    %98 = vector.multi_reduction <add>, %97, %cst_42 [1] : vector<16x8xf32> to vector<16xf32>
    %99 = vector.shape_cast %98 : vector<16xf32> to vector<16x1xf32>
    %cst_43 = arith.constant 8.000000e+00 : f32
    %100 = vector.broadcast %cst_43 : f32 to vector<16x1xf32>
    %101 = arith.divf %99, %100 : vector<16x1xf32>
    %cst_44 = arith.constant 9.99999974E-6 : f32
    %102 = vector.broadcast %cst_44 : f32 to vector<16x1xf32>
    %103 = arith.addf %101, %102 : vector<16x1xf32>
    %104 = math.rsqrt %103 : vector<16x1xf32>
    %105 = vector.broadcast %104 : vector<16x1xf32> to vector<16x8xf32>
    %106 = arith.mulf %96, %105 : vector<16x8xf32>
    %107 = vector.broadcast %88 : vector<1x8xf32> to vector<16x8xf32>
    %108 = arith.mulf %106, %107 : vector<16x8xf32>
    %109 = vector.broadcast %90 : vector<1x8xf32> to vector<16x8xf32>
    %110 = arith.addf %108, %109 : vector<16x8xf32>
    %111 = arith.truncf %110 : vector<16x8xf32> to vector<16x8xbf16>
    %c0_45 = arith.constant 0 : index
    %c0_46 = arith.constant 0 : index
    %c0_47 = arith.constant 0 : index
    %112 = vector.load %arg10[%c0_45, %c0_46, %c0_47] : memref<1x8x2048xbf16, #tpu.memory_space<vmem>>, vector<1x8x2048xbf16>
    %113 = vector.shape_cast %112 : vector<1x8x2048xbf16> to vector<8x2048xbf16>
    %cst_48 = arith.constant dense<0.000000e+00> : vector<16x2048xf32>
    %114 = tpu.matmul %111, %113, %cst_48 {dimension_numbers = #tpu.dot_dimension_numbers<[1], [0], [0], [1], [0, 0, 1, 1], [], []>} : vector<16x8xbf16>, vector<8x2048xbf16>, vector<16x2048xf32> -> vector<16x2048xf32>
    %c0_49 = arith.constant 0 : index
    %c0_50 = arith.constant 0 : index
    %c0_51 = arith.constant 0 : index
    %115 = vector.load %arg11[%c0_49, %c0_50, %c0_51] : memref<1x1x2048xf32, #tpu.memory_space<vmem>>, vector<1x1x2048xf32>
    %116 = vector.shape_cast %115 : vector<1x1x2048xf32> to vector<1x2048xf32>
    %117 = vector.broadcast %116 : vector<1x2048xf32> to vector<16x2048xf32>
    %118 = arith.addf %114, %117 : vector<16x2048xf32>
    %cst_52 = arith.constant 0.000000e+00 : f32
    %119 = vector.broadcast %cst_52 : f32 to vector<16x2048xf32>
    %120 = arith.maximumf %118, %119 : vector<16x2048xf32>
    %121 = arith.truncf %120 : vector<16x2048xf32> to vector<16x2048xbf16>
    %c0_53 = arith.constant 0 : index
    %c0_54 = arith.constant 0 : index
    %c0_55 = arith.constant 0 : index
    %122 = vector.load %arg12[%c0_53, %c0_54, %c0_55] : memref<1x8x2048xbf16, #tpu.memory_space<vmem>>, vector<1x8x2048xbf16>
    %123 = vector.shape_cast %122 : vector<1x8x2048xbf16> to vector<8x2048xbf16>
    %cst_56 = arith.constant dense<0.000000e+00> : vector<16x8xf32>
    %124 = tpu.matmul %121, %123, %cst_56 {dimension_numbers = #tpu.dot_dimension_numbers<[1], [1], [0], [0], [0, 0, 1, 0], [], []>} : vector<16x2048xbf16>, vector<8x2048xbf16>, vector<16x8xf32> -> vector<16x8xf32>
    %c0_57 = arith.constant 0 : index
    %c0_58 = arith.constant 0 : index
    %c0_59 = arith.constant 0 : index
    %125 = vector.load %arg13[%c0_57, %c0_58, %c0_59] : memref<1x1x8xf32, #tpu.memory_space<vmem>>, vector<1x1x8xf32>
    %126 = vector.shape_cast %125 : vector<1x1x8xf32> to vector<1x8xf32>
    %127 = vector.broadcast %126 : vector<1x8xf32> to vector<16x8xf32>
    %128 = arith.addf %124, %127 : vector<16x8xf32>
    %129 = arith.addf %110, %128 : vector<16x8xf32>
    %c0_60 = arith.constant 0 : index
    %c0_61 = arith.constant 0 : index
    %c0_62 = arith.constant 0 : index
    %130 = vector.load %arg8[%c0_60, %c0_61, %c0_62] : memref<1x1x8xf32, #tpu.memory_space<vmem>>, vector<1x1x8xf32>
    %131 = vector.shape_cast %130 : vector<1x1x8xf32> to vector<1x8xf32>
    %c0_63 = arith.constant 0 : index
    %c0_64 = arith.constant 0 : index
    %c0_65 = arith.constant 0 : index
    %132 = vector.load %arg9[%c0_63, %c0_64, %c0_65] : memref<1x1x8xf32, #tpu.memory_space<vmem>>, vector<1x1x8xf32>
    %133 = vector.shape_cast %132 : vector<1x1x8xf32> to vector<1x8xf32>
    %cst_66 = arith.constant dense<0.000000e+00> : vector<16xf32>
    %134 = vector.multi_reduction <add>, %129, %cst_66 [1] : vector<16x8xf32> to vector<16xf32>
    %135 = vector.shape_cast %134 : vector<16xf32> to vector<16x1xf32>
    %cst_67 = arith.constant 8.000000e+00 : f32
    %136 = vector.broadcast %cst_67 : f32 to vector<16x1xf32>
    %137 = arith.divf %135, %136 : vector<16x1xf32>
    %138 = vector.broadcast %137 : vector<16x1xf32> to vector<16x8xf32>
    %139 = arith.subf %129, %138 : vector<16x8xf32>
    %140 = arith.mulf %139, %139 : vector<16x8xf32>
    %cst_68 = arith.constant dense<0.000000e+00> : vector<16xf32>
    %141 = vector.multi_reduction <add>, %140, %cst_68 [1] : vector<16x8xf32> to vector<16xf32>
    %142 = vector.shape_cast %141 : vector<16xf32> to vector<16x1xf32>
    %cst_69 = arith.constant 8.000000e+00 : f32
    %143 = vector.broadcast %cst_69 : f32 to vector<16x1xf32>
    %144 = arith.divf %142, %143 : vector<16x1xf32>
    %cst_70 = arith.constant 9.99999974E-6 : f32
    %145 = vector.broadcast %cst_70 : f32 to vector<16x1xf32>
    %146 = arith.addf %144, %145 : vector<16x1xf32>
    %147 = math.rsqrt %146 : vector<16x1xf32>
    %148 = vector.broadcast %147 : vector<16x1xf32> to vector<16x8xf32>
    %149 = arith.mulf %139, %148 : vector<16x8xf32>
    %150 = vector.broadcast %131 : vector<1x8xf32> to vector<16x8xf32>
    %151 = arith.mulf %149, %150 : vector<16x8xf32>
    %152 = vector.broadcast %133 : vector<1x8xf32> to vector<16x8xf32>
    %153 = arith.addf %151, %152 : vector<16x8xf32>
    %c0_71 = arith.constant 0 : index
    %c0_72 = arith.constant 0 : index
    %154 = vector.load %arg19[%c0_71, %c0_72] : memref<16x8xf32, #tpu.memory_space<vmem>>, vector<16x8xf32>
    tpu.vector_store %arg19[%c0_71, %c0_72], %153 {strides = array<i32>} : memref<16x8xf32, #tpu.memory_space<vmem>>, vector<16x8xf32>,
    %c2_i32 = arith.constant 2 : i32
    %155 = arith.cmpi eq, %arg0, %c2_i32 : i32
    %156 = arith.extui %155 : i1 to i32
    %c0_i32_73 = arith.constant 0 : i32
    %157 = arith.cmpi ne, %156, %c0_i32_73 : i32
    scf.if %157 {
      %158 = vector.extract_strided_slice %153 {offsets = [8, 0], sizes = [8, 8], strides = [1, 1]} : vector<16x8xf32> to vector<8x8xf32>
      %159 = arith.truncf %158 : vector<8x8xf32> to vector<8x8xbf16>
      %c0_74 = arith.constant 0 : index
      %c0_75 = arith.constant 0 : index
      %160 = vector.load %arg14[%c0_74, %c0_75] : memref<8x256xbf16, #tpu.memory_space<vmem>>, vector<8x256xbf16>
      %cst_76 = arith.constant dense<0.000000e+00> : vector<8x256xf32>
      %161 = tpu.matmul %159, %160, %cst_76 {dimension_numbers = #tpu.dot_dimension_numbers<[1], [0], [0], [1], [0, 0, 1, 1], [], []>} : vector<8x8xbf16>, vector<8x256xbf16>, vector<8x256xf32> -> vector<8x256xf32>
      %c0_77 = arith.constant 0 : index
      %c0_78 = arith.constant 0 : index
      %162 = vector.load %arg15[%c0_77, %c0_78] : memref<1x256xf32, #tpu.memory_space<vmem>>, vector<1x256xf32>
      %163 = vector.broadcast %162 : vector<1x256xf32> to vector<8x256xf32>
      %164 = arith.addf %161, %163 : vector<8x256xf32>
      %cst_79 = arith.constant 0.000000e+00 : f32
      %165 = vector.broadcast %cst_79 : f32 to vector<8x256xf32>
      %166 = arith.maximumf %164, %165 : vector<8x256xf32>
      %167 = arith.truncf %166 : vector<8x256xf32> to vector<8x256xbf16>
      %c0_80 = arith.constant 0 : index
      %c0_81 = arith.constant 0 : index
      %168 = vector.load %arg16[%c0_80, %c0_81] : memref<6x256xbf16, #tpu.memory_space<vmem>>, vector<6x256xbf16>
      %cst_82 = arith.constant dense<0.000000e+00> : vector<8x6xf32>
      %169 = tpu.matmul %167, %168, %cst_82 {dimension_numbers = #tpu.dot_dimension_numbers<[1], [1], [0], [0], [0, 0, 1, 0], [], []>} : vector<8x256xbf16>, vector<6x256xbf16>, vector<8x6xf32> -> vector<8x6xf32>
      %c0_83 = arith.constant 0 : index
      %c0_84 = arith.constant 0 : index
      %170 = vector.load %arg17[%c0_83, %c0_84] : memref<1x6xf32, #tpu.memory_space<vmem>>, vector<1x6xf32>
      %171 = vector.broadcast %170 : vector<1x6xf32> to vector<8x6xf32>
      %172 = arith.addf %169, %171 : vector<8x6xf32>
      %173 = vector.extract_strided_slice %172 {offsets = [0, 0], sizes = [8, 3], strides = [1, 1]} : vector<8x6xf32> to vector<8x3xf32>
      %cst_85 = arith.constant dense<0xFF800000> : vector<8xf32>
      %174 = vector.multi_reduction <maximumf>, %173, %cst_85 [1] : vector<8x3xf32> to vector<8xf32>
      %175 = vector.shape_cast %174 : vector<8xf32> to vector<8x1xf32>
      %176 = vector.broadcast %175 : vector<8x1xf32> to vector<8x3xf32>
      %177 = arith.subf %173, %176 : vector<8x3xf32>
      %178 = math.exp %177 : vector<8x3xf32>
      %cst_86 = arith.constant dense<0.000000e+00> : vector<8xf32>
      %179 = vector.multi_reduction <add>, %178, %cst_86 [1] : vector<8x3xf32> to vector<8xf32>
      %180 = vector.shape_cast %179 : vector<8xf32> to vector<8x1xf32>
      %181 = vector.broadcast %180 : vector<8x1xf32> to vector<8x3xf32>
      %182 = arith.divf %178, %181 : vector<8x3xf32>
      %183 = vector.extract_strided_slice %172 {offsets = [0, 3], sizes = [8, 3], strides = [1, 1]} : vector<8x6xf32> to vector<8x3xf32>
      %cst_87 = arith.constant dense<0xFF800000> : vector<8xf32>
      %184 = vector.multi_reduction <maximumf>, %183, %cst_87 [1] : vector<8x3xf32> to vector<8xf32>
      %185 = vector.shape_cast %184 : vector<8xf32> to vector<8x1xf32>
      %186 = vector.broadcast %185 : vector<8x1xf32> to vector<8x3xf32>
      %187 = arith.subf %183, %186 : vector<8x3xf32>
      %188 = math.exp %187 : vector<8x3xf32>
      %cst_88 = arith.constant dense<0.000000e+00> : vector<8xf32>
      %189 = vector.multi_reduction <add>, %188, %cst_88 [1] : vector<8x3xf32> to vector<8xf32>
      %190 = vector.shape_cast %189 : vector<8xf32> to vector<8x1xf32>
      %191 = vector.broadcast %190 : vector<8x1xf32> to vector<8x3xf32>
      %192 = arith.divf %188, %191 : vector<8x3xf32>
      %193 = tpu.concatenate %182, %192 in 1 : vector<8x3xf32>, vector<8x3xf32> -> vector<8x6xf32>
      %c0_89 = arith.constant 0 : index
      %c0_90 = arith.constant 0 : index
      %194 = vector.load %arg18[%c0_89, %c0_90] : memref<8x6xf32, #tpu.memory_space<vmem>>, vector<8x6xf32>
      tpu.vector_store %arg18[%c0_89, %c0_90], %193 {strides = array<i32>} : memref<8x6xf32, #tpu.memory_space<vmem>>, vector<8x6xf32>,
    } else {
    }
    return
  }
  func.func @transform_0(%arg0: i32) -> (i32, i32) {
    %c0_i32 = arith.constant 0 : i32
    %c0_i32_0 = arith.constant 0 : i32
    %c0_i32_1 = arith.constant 0 : i32
    return %c0_i32, %c0_i32_0 : i32, i32
  }
  func.func @transform_1(%arg0: i32) -> (i32, i32, i32) {
    %c0_i32 = arith.constant 0 : i32
    %c0_i32_0 = arith.constant 0 : i32
    %c0_i32_1 = arith.constant 0 : i32
    return %arg0, %c0_i32, %c0_i32_0 : i32, i32, i32
  }
  func.func @transform_2(%arg0: i32) -> (i32, i32, i32) {
    %c0_i32 = arith.constant 0 : i32
    %c0_i32_0 = arith.constant 0 : i32
    %c0_i32_1 = arith.constant 0 : i32
    return %arg0, %c0_i32, %c0_i32_0 : i32, i32, i32
  }
  func.func @transform_3(%arg0: i32) -> (i32, i32, i32) {
    %c0_i32 = arith.constant 0 : i32
    %c0_i32_0 = arith.constant 0 : i32
    %c0_i32_1 = arith.constant 0 : i32
    return %arg0, %c0_i32, %c0_i32_0 : i32, i32, i32
  }
  func.func @transform_4(%arg0: i32) -> (i32, i32, i32) {
    %c0_i32 = arith.constant 0 : i32
    %c0_i32_0 = arith.constant 0 : i32
    %c0_i32_1 = arith.constant 0 : i32
    return %arg0, %c0_i32, %c0_i32_0 : i32, i32, i32
  }
  func.func @transform_5(%arg0: i32) -> (i32, i32, i32) {
    %c0_i32 = arith.constant 0 : i32
    %c0_i32_0 = arith.constant 0 : i32
    %c0_i32_1 = arith.constant 0 : i32
    return %arg0, %c0_i32, %c0_i32_0 : i32, i32, i32
  }
  func.func @transform_6(%arg0: i32) -> (i32, i32, i32) {
    %c0_i32 = arith.constant 0 : i32
    %c0_i32_0 = arith.constant 0 : i32
    %c0_i32_1 = arith.constant 0 : i32
    return %arg0, %c0_i32, %c0_i32_0 : i32, i32, i32
  }
  func.func @transform_7(%arg0: i32) -> (i32, i32, i32) {
    %c0_i32 = arith.constant 0 : i32
    %c0_i32_0 = arith.constant 0 : i32
    %c0_i32_1 = arith.constant 0 : i32
    return %arg0, %c0_i32, %c0_i32_0 : i32, i32, i32
  }
  func.func @transform_8(%arg0: i32) -> (i32, i32, i32) {
    %c0_i32 = arith.constant 0 : i32
    %c0_i32_0 = arith.constant 0 : i32
    %c0_i32_1 = arith.constant 0 : i32
    return %arg0, %c0_i32, %c0_i32_0 : i32, i32, i32
  }
  func.func @transform_9(%arg0: i32) -> (i32, i32, i32) {
    %c0_i32 = arith.constant 0 : i32
    %c0_i32_0 = arith.constant 0 : i32
    %c0_i32_1 = arith.constant 0 : i32
    return %arg0, %c0_i32, %c0_i32_0 : i32, i32, i32
  }
  func.func @transform_10(%arg0: i32) -> (i32, i32, i32) {
    %c0_i32 = arith.constant 0 : i32
    %c0_i32_0 = arith.constant 0 : i32
    %c0_i32_1 = arith.constant 0 : i32
    return %arg0, %c0_i32, %c0_i32_0 : i32, i32, i32
  }
  func.func @transform_11(%arg0: i32) -> (i32, i32, i32) {
    %c0_i32 = arith.constant 0 : i32
    %c0_i32_0 = arith.constant 0 : i32
    %c0_i32_1 = arith.constant 0 : i32
    return %arg0, %c0_i32, %c0_i32_0 : i32, i32, i32
  }
  func.func @transform_12(%arg0: i32) -> (i32, i32, i32) {
    %c0_i32 = arith.constant 0 : i32
    %c0_i32_0 = arith.constant 0 : i32
    %c0_i32_1 = arith.constant 0 : i32
    return %arg0, %c0_i32, %c0_i32_0 : i32, i32, i32
  }
  func.func @transform_13(%arg0: i32) -> (i32, i32) {
    %c0_i32 = arith.constant 0 : i32
    %c0_i32_0 = arith.constant 0 : i32
    %c0_i32_1 = arith.constant 0 : i32
    return %c0_i32, %c0_i32_0 : i32, i32
  }
  func.func @transform_14(%arg0: i32) -> (i32, i32) {
    %c0_i32 = arith.constant 0 : i32
    %c0_i32_0 = arith.constant 0 : i32
    %c0_i32_1 = arith.constant 0 : i32
    return %c0_i32, %c0_i32_0 : i32, i32
  }
  func.func @transform_15(%arg0: i32) -> (i32, i32) {
    %c0_i32 = arith.constant 0 : i32
    %c0_i32_0 = arith.constant 0 : i32
    %c0_i32_1 = arith.constant 0 : i32
    return %c0_i32, %c0_i32_0 : i32, i32
  }
  func.func @transform_16(%arg0: i32) -> (i32, i32) {
    %c0_i32 = arith.constant 0 : i32
    %c0_i32_0 = arith.constant 0 : i32
    %c0_i32_1 = arith.constant 0 : i32
    return %c0_i32, %c0_i32_0 : i32, i32
  }
  func.func @transform_17(%arg0: i32) -> (i32, i32) {
    %c0_i32 = arith.constant 0 : i32
    %c0_i32_0 = arith.constant 0 : i32
    %c0_i32_1 = arith.constant 0 : i32
    return %c0_i32, %c0_i32_0 : i32, i32
  }
}

</mosaic_0001>

<llo_original>
// kernel: transformer_forward.1
$region0: #{transformer_forward.1}
  #allocation0 [shape = 'u32[]', space=smem, size = 0x4, offset = 0x4, fixed_abs, tag = 'smem constant byte address 0x4 - core index']
  #allocation1 [shape = 'u32[144,128]{1,0:T(1,128)}', space=vmem, size = 0x12000, scoped, tag = 'internal scratch']
  #allocation2 [shape = 'f32[16,8]{1,0:T(8,128)}', space=vmem, size = 0x2000, scoped, tag = 'scratch operand']
  %s0 = inlined_call_operand.vmem [shape: f32[16,8], index: 0, kind: input, shape index: {}]
  %s1 = inlined_call_operand.vmem [shape: bf16[3,8,24], index: 1, kind: input, shape index: {}]
  %s2 = inlined_call_operand.hbm [shape: f32[3,1,24], index: 2, kind: input, shape index: {}]
  %s3 = inlined_call_operand.vmem [shape: bf16[3,8,8], index: 3, kind: input, shape index: {}]
  %s4 = inlined_call_operand.hbm [shape: f32[3,1,8], index: 4, kind: input, shape index: {}]
  %s5 = inlined_call_operand.hbm [shape: f32[3,1,8], index: 5, kind: input, shape index: {}]
  %s6 = inlined_call_operand.hbm [shape: f32[3,1,8], index: 6, kind: input, shape index: {}]
  %s7 = inlined_call_operand.hbm [shape: f32[3,1,8], index: 7, kind: input, shape index: {}]
  %s8 = inlined_call_operand.hbm [shape: f32[3,1,8], index: 8, kind: input, shape index: {}]
  %s9 = inlined_call_operand.hbm [shape: bf16[3,8,2048], index: 9, kind: input, shape index: {}]
  %s10 = inlined_call_operand.vmem [shape: f32[3,1,2048], index: 10, kind: input, shape index: {}]
  %s11 = inlined_call_operand.hbm [shape: bf16[3,8,2048], index: 11, kind: input, shape index: {}]
  %s12 = inlined_call_operand.hbm [shape: f32[3,1,8], index: 12, kind: input, shape index: {}]
  %s13 = inlined_call_operand.vmem [shape: bf16[8,256], index: 13, kind: input, shape index: {}]
  %s14 = inlined_call_operand.hbm [shape: f32[1,256], index: 14, kind: input, shape index: {}]
  %s15 = inlined_call_operand.vmem [shape: bf16[6,256], index: 15, kind: input, shape index: {}]
  %s16 = inlined_call_operand.vmem [shape: f32[1,6], index: 16, kind: input, shape index: {}]
  %s17 = inlined_call_operand.vmem [shape: f32[8,6], index: 17, kind: output, shape index: {}]
  %s18 = sld [smem:[#allocation0]]
  $region149: #{transformer_forward.1} parent=0
    _
  %s20 = ssub.s32 1, %s18
  %s21 = scalar_select 0, %s20, %s18
  $region1: #{transformer_forward.1} parent=0
    #allocation3 [shape = 'u8[1024]{0}', space=vmem, size = 0x400, scoped, tag = 'input window, operand 2']
    #allocation4 [shape = 's32[2]{0}', space=sflag, size = 0x8, scoped, tag = 'scoped memory for transformer_forward.1']
    #allocation5 [shape = 'u8[1024]{0}', space=vmem, size = 0x400, scoped, tag = 'input window, operand 4']
    #allocation6 [shape = 's32[2]{0}', space=sflag, size = 0x8, scoped, tag = 'scoped memory for transformer_forward.1']
    #allocation7 [shape = 'u8[1024]{0}', space=vmem, size = 0x400, scoped, tag = 'input window, operand 5']
    #allocation8 [shape = 'u8[1024]{0}', space=vmem, size = 0x400, scoped, tag = 'input window, operand 6']
    #allocation9 [shape = 's32[2]{0}', space=sflag, size = 0x8, scoped, tag = 'scoped memory for transformer_forward.1']
    #allocation10 [shape = 'u8[1024]{0}', space=vmem, size = 0x400, scoped, tag = 'input window, operand 7']
    #allocation11 [shape = 'u8[1024]{0}', space=vmem, size = 0x400, scoped, tag = 'input window, operand 8']
    #allocation12 [shape = 's32[2]{0}', space=sflag, size = 0x8, scoped, tag = 'scoped memory for transformer_forward.1']
    #allocation13 [shape = 'u8[65536]{0}', space=vmem, size = 0x10000, scoped, tag = 'input window, operand 9']
    #allocation14 [shape = 'u8[65536]{0}', space=vmem, size = 0x10000, scoped, tag = 'input window, operand 11']
    #allocation15 [shape = 's32[2]{0}', space=sflag, size = 0x8, scoped, tag = 'scoped memory for transformer_forward.1']
    #allocation16 [shape = 'u8[1024]{0}', space=vmem, size = 0x400, scoped, tag = 'input window, operand 12']
    #allocation17 [shape = 'u8[1024]{0}', space=vmem, size = 0x400, scoped, tag = 'input window, operand 14, single buffered']
    #allocation18 [shape = 's32[1]{0}', space=sflag, size = 0x4, scoped, tag = 'scoped memory for transformer_forward.1']
    %22 = vsyncpa [#allocation4], 0
    %s23 = scalar_lea.sflag [#allocation4], 1
    %24 = vsyncpa %s23, 0
    %25 = vsyncpa [#allocation6], 0
    %s26 = scalar_lea.sflag [#allocation6], 1
    %27 = vsyncpa %s26, 0
    %28 = vsyncpa [#allocation9], 0
    %s29 = scalar_lea.sflag [#allocation9], 1
    %30 = vsyncpa %s29, 0
    %31 = vsyncpa [#allocation12], 0
    %s32 = scalar_lea.sflag [#allocation12], 1
    %33 = vsyncpa %s32, 0
    %34 = vsyncpa [#allocation15], 0
    %s35 = scalar_lea.sflag [#allocation15], 1
    %36 = vsyncpa %s35, 0
    %37 = vsyncpa [#allocation18], 0
    loop: start=0, step=1, limit=5
    $region2: #{transformer_forward.1} parent=1 // loop_pre_header
      _
    $region3: #{transformer_forward.1} parent=1 // loop_header
      %s39 = sphi 0, %s43
      %p40 = scmp.ge.s32.totalorder %s39, 5
      %s47 = sphi 0, %s47
      %s49 = sphi 0, %s47
      %s50 = sphi 0, %s49
      %s64 = sphi 0, %s50
      %s70 = sphi 0, %s72
      %s73 = sphi 0, %s70
      %s74 = sphi 0, %s73
      %s90 = sphi 0, %s74
      %s96 = sphi 0, %s98
      %s99 = sphi 0, %s96
      %s100 = sphi 0, %s99
      %s116 = sphi 0, %s100
      %s122 = sphi 0, %s124
      %s125 = sphi 0, %s122
      %s126 = sphi 0, %s125
      %s142 = sphi 0, %s126
      %s148 = sphi 0, %s150
      %s151 = sphi 0, %s148
      %s152 = sphi 0, %s151
      %s168 = sphi 0, %s152
      %s174 = sphi 0, %s176
      %s177 = sphi 0, %s174
      %s178 = sphi 0, %s177
      %s194 = sphi 0, %s178
      %s200 = sphi 0, %s202
      %s203 = sphi 0, %s200
      %s204 = sphi 0, %s203
      %s220 = sphi 0, %s204
      %s226 = sphi 0, %s228
      %s229 = sphi 0, %s226
      %s230 = sphi 0, %s229
      %s246 = sphi 0, %s230
      %s252 = sphi 0, %s254
      %s255 = sphi 0, %s252
      %s256 = sphi 0, %s255
      %s272 = sphi 0, %s256
      %s278 = sphi 0, %s280
      %s281 = sphi 0, %s278
      %s282 = sphi 0, %s281
      %s298 = sphi 0, %s282
      %s304 = sphi 0, %s306
      %s307 = sphi 0, %s304
      %s308 = sphi 0, %s307
      %s324 = sphi 0, %s308
      %s330 = sphi 0, %s332
      %s333 = sphi 0, %s330
      %s334 = sphi 0, %s333
      %s350 = sphi 0, %s334
      %s356 = sphi 0, %s358
      %s359 = sphi 0, %s356
      %s360 = sphi 0, %s359
      %s376 = sphi 0, %s360
      %s380 = sphi 0, %s380
      %s382 = sphi 0, %s380
      %s383 = sphi 0, %s382
      %s397 = sphi 0, %s383
      %s401 = sphi 0, %s401
      %s403 = sphi 0, %s401
      %s404 = sphi 0, %s403
      %s418 = sphi 0, %s404
      %s422 = sphi 0, %s422
      %s424 = sphi 0, %s422
      %s425 = sphi 0, %s424
      %s439 = sphi 0, %s425
      %s443 = sphi 0, %s443
      %s445 = sphi 0, %s443
      %s446 = sphi 0, %s445
      %s460 = sphi 0, %s446
      %s464 = sphi 0, %s464
      %s466 = sphi 0, %s464
      %s467 = sphi 0, %s466
      %s481 = sphi 0, %s467
    $region4: #{transformer_forward.1} parent=1 // loop_header_branch
      %42 = sbr.rel (%p40) target = $region8
    $region5: #{transformer_forward.1} parent=1 // loop_body
      %s44 = ssub.s32 %s39, 1
      %s45 = ssub.s32 %s39, 2
      %s46 = sadd.s32 %s39, 1
      %s48 = sadd.s32 %s47, 1
      %p51 = scmp.eq.s32.totalorder %s39, 2
      %p52 = scmp.ne.s32.totalorder %s47, %s49
      %p53 = scmp.eq.s32.totalorder %s39, 0
      %p54 = por %p52, %p53
      %p55 = scmp.ne.s32.totalorder %s47, %s49
      %p56 = scmp.eq.s32.totalorder %s44, 2
      %p57 = por %p55, %p56
      %p58 = scmp.ne.s32.totalorder %s49, %s50
      %p59 = scmp.eq.s32.totalorder %s44, 0
      %p60 = por %p58, %p59
      %p61 = scmp.ne.s32.totalorder %s49, %s50
      %p62 = scmp.eq.s32.totalorder %s45, 2
      %p63 = por %p61, %p62
      %p65 = scmp.ne.s32.totalorder %s50, %s64
      %p66 = scmp.eq.s32.totalorder %s45, 0
      %p67 = por %p65, %p66
      %s68 = ssub.s32 %s39, %s46
      %p69 = scmp.eq.s32.totalorder %s68, 0
      %s71 = sadd.s32 %s70, 1
      %s72 = scalar_select %p69, %s70, %s71
      %p75 = pneg %p69
      %p76 = scmp.eq.s32.totalorder %s39, 2
      %p77 = por %p75, %p76
      %p78 = scmp.ne.s32.totalorder %s70, %s73
      %p79 = scmp.eq.s32.totalorder %s39, 0
      %p80 = por %p78, %p79
      %p81 = scmp.ne.s32.totalorder %s70, %s73
      %p82 = scmp.eq.s32.totalorder %s44, 2
      %p83 = por %p81, %p82
      %p84 = scmp.ne.s32.totalorder %s73, %s74
      %p85 = scmp.eq.s32.totalorder %s44, 0
      %p86 = por %p84, %p85
      %p87 = scmp.ne.s32.totalorder %s73, %s74
      %p88 = scmp.eq.s32.totalorder %s45, 2
      %p89 = por %p87, %p88
      %p91 = scmp.ne.s32.totalorder %s74, %s90
      %p92 = scmp.eq.s32.totalorder %s45, 0
      %p93 = por %p91, %p92
      %s94 = ssub.s32 %s39, %s46
      %p95 = scmp.eq.s32.totalorder %s94, 0
      %s97 = sadd.s32 %s96, 1
      %s98 = scalar_select %p95, %s96, %s97
      %p101 = pneg %p95
      %p102 = scmp.eq.s32.totalorder %s39, 2
      %p103 = por %p101, %p102
      %p104 = scmp.ne.s32.totalorder %s96, %s99
      %p105 = scmp.eq.s32.totalorder %s39, 0
      %p106 = por %p104, %p105
      %p107 = scmp.ne.s32.totalorder %s96, %s99
      %p108 = scmp.eq.s32.totalorder %s44, 2
      %p109 = por %p107, %p108
      %p110 = scmp.ne.s32.totalorder %s99, %s100
      %p111 = scmp.eq.s32.totalorder %s44, 0
      %p112 = por %p110, %p111
      %p113 = scmp.ne.s32.totalorder %s99, %s100
      %p114 = scmp.eq.s32.totalorder %s45, 2
      %p115 = por %p113, %p114
      %p117 = scmp.ne.s32.totalorder %s100, %s116
      %p118 = scmp.eq.s32.totalorder %s45, 0
      %p119 = por %p117, %p118
      %s120 = ssub.s32 %s39, %s46
      %p121 = scmp.eq.s32.totalorder %s120, 0
      %s123 = sadd.s32 %s122, 1
      %s124 = scalar_select %p121, %s122, %s123
      %p127 = pneg %p121
      %p128 = scmp.eq.s32.totalorder %s39, 2
      %p129 = por %p127, %p128
      %p130 = scmp.ne.s32.totalorder %s122, %s125
      %p131 = scmp.eq.s32.totalorder %s39, 0
      %p132 = por %p130, %p131
      %p133 = scmp.ne.s32.totalorder %s122, %s125
      %p134 = scmp.eq.s32.totalorder %s44, 2
      %p135 = por %p133, %p134
      %p136 = scmp.ne.s32.totalorder %s125, %s126
      %p137 = scmp.eq.s32.totalorder %s44, 0
      %p138 = por %p136, %p137
      %p139 = scmp.ne.s32.totalorder %s125, %s126
      %p140 = scmp.eq.s32.totalorder %s45, 2
      %p141 = por %p139, %p140
      %p143 = scmp.ne.s32.totalorder %s126, %s142
      %p144 = scmp.eq.s32.totalorder %s45, 0
      %p145 = por %p143, %p144
      %s146 = ssub.s32 %s39, %s46
      %p147 = scmp.eq.s32.totalorder %s146, 0
      %s149 = sadd.s32 %s148, 1
      %s150 = scalar_select %p147, %s148, %s149
      %p153 = pneg %p147
      %p154 = scmp.eq.s32.totalorder %s39, 2
      %p155 = por %p153, %p154
      %p156 = scmp.ne.s32.totalorder %s148, %s151
      %p157 = scmp.eq.s32.totalorder %s39, 0
      %p158 = por %p156, %p157
      %p159 = scmp.ne.s32.totalorder %s148, %s151
      %p160 = scmp.eq.s32.totalorder %s44, 2
      %p161 = por %p159, %p160
      %p162 = scmp.ne.s32.totalorder %s151, %s152
      %p163 = scmp.eq.s32.totalorder %s44, 0
      %p164 = por %p162, %p163
      %p165 = scmp.ne.s32.totalorder %s151, %s152
      %p166 = scmp.eq.s32.totalorder %s45, 2
      %p167 = por %p165, %p166
      %p169 = scmp.ne.s32.totalorder %s152, %s168
      %p170 = scmp.eq.s32.totalorder %s45, 0
      %p171 = por %p169, %p170
      %s172 = ssub.s32 %s39, %s46
      %p173 = scmp.eq.s32.totalorder %s172, 0
      %s175 = sadd.s32 %s174, 1
      %s176 = scalar_select %p173, %s174, %s175
      %p179 = pneg %p173
      %p180 = scmp.eq.s32.totalorder %s39, 2
      %p181 = por %p179, %p180
      %p182 = scmp.ne.s32.totalorder %s174, %s177
      %p183 = scmp.eq.s32.totalorder %s39, 0
      %p184 = por %p182, %p183
      %p185 = scmp.ne.s32.totalorder %s174, %s177
      %p186 = scmp.eq.s32.totalorder %s44, 2
      %p187 = por %p185, %p186
      %p188 = scmp.ne.s32.totalorder %s177, %s178
      %p189 = scmp.eq.s32.totalorder %s44, 0
      %p190 = por %p188, %p189
      %p191 = scmp.ne.s32.totalorder %s177, %s178
      %p192 = scmp.eq.s32.totalorder %s45, 2
      %p193 = por %p191, %p192
      %p195 = scmp.ne.s32.totalorder %s178, %s194
      %p196 = scmp.eq.s32.totalorder %s45, 0
      %p197 = por %p195, %p196
      %s198 = ssub.s32 %s39, %s46
      %p199 = scmp.eq.s32.totalorder %s198, 0
      %s201 = sadd.s32 %s200, 1
      %s202 = scalar_select %p199, %s200, %s201
      %p205 = pneg %p199
      %p206 = scmp.eq.s32.totalorder %s39, 2
      %p207 = por %p205, %p206
      %p208 = scmp.ne.s32.totalorder %s200, %s203
      %p209 = scmp.eq.s32.totalorder %s39, 0
      %p210 = por %p208, %p209
      %p211 = scmp.ne.s32.totalorder %s200, %s203
      %p212 = scmp.eq.s32.totalorder %s44, 2
      %p213 = por %p211, %p212
      %p214 = scmp.ne.s32.totalorder %s203, %s204
      %p215 = scmp.eq.s32.totalorder %s44, 0
      %p216 = por %p214, %p215
      %p217 = scmp.ne.s32.totalorder %s203, %s204
      %p218 = scmp.eq.s32.totalorder %s45, 2
      %p219 = por %p217, %p218
      %p221 = scmp.ne.s32.totalorder %s204, %s220
      %p222 = scmp.eq.s32.totalorder %s45, 0
      %p223 = por %p221, %p222
      %s224 = ssub.s32 %s39, %s46
      %p225 = scmp.eq.s32.totalorder %s224, 0
      %s227 = sadd.s32 %s226, 1
      %s228 = scalar_select %p225, %s226, %s227
      %p231 = pneg %p225
      %p232 = scmp.eq.s32.totalorder %s39, 2
      %p233 = por %p231, %p232
      %p234 = scmp.ne.s32.totalorder %s226, %s229
      %p235 = scmp.eq.s32.totalorder %s39, 0
      %p236 = por %p234, %p235
      %p237 = scmp.ne.s32.totalorder %s226, %s229
      %p238 = scmp.eq.s32.totalorder %s44, 2
      %p239 = por %p237, %p238
      %p240 = scmp.ne.s32.totalorder %s229, %s230
      %p241 = scmp.eq.s32.totalorder %s44, 0
      %p242 = por %p240, %p241
      %p243 = scmp.ne.s32.totalorder %s229, %s230
      %p244 = scmp.eq.s32.totalorder %s45, 2
      %p245 = por %p243, %p244
      %p247 = scmp.ne.s32.totalorder %s230, %s246
      %p248 = scmp.eq.s32.totalorder %s45, 0
      %p249 = por %p247, %p248
      %s250 = ssub.s32 %s39, %s46
      %p251 = scmp.eq.s32.totalorder %s250, 0
      %s253 = sadd.s32 %s252, 1
      %s254 = scalar_select %p251, %s252, %s253
      %p257 = pneg %p251
      %p258 = scmp.eq.s32.totalorder %s39, 2
      %p259 = por %p257, %p258
      %p260 = scmp.ne.s32.totalorder %s252, %s255
      %p261 = scmp.eq.s32.totalorder %s39, 0
      %p262 = por %p260, %p261
      %p263 = scmp.ne.s32.totalorder %s252, %s255
      %p264 = scmp.eq.s32.totalorder %s44, 2
      %p265 = por %p263, %p264
      %p266 = scmp.ne.s32.totalorder %s255, %s256
      %p267 = scmp.eq.s32.totalorder %s44, 0
      %p268 = por %p266, %p267
      %p269 = scmp.ne.s32.totalorder %s255, %s256
      %p270 = scmp.eq.s32.totalorder %s45, 2
      %p271 = por %p269, %p270
      %p273 = scmp.ne.s32.totalorder %s256, %s272
      %p274 = scmp.eq.s32.totalorder %s45, 0
      %p275 = por %p273, %p274
      %s276 = ssub.s32 %s39, %s46
      %p277 = scmp.eq.s32.totalorder %s276, 0
      %s279 = sadd.s32 %s278, 1
      %s280 = scalar_select %p277, %s278, %s279
      %p283 = pneg %p277
      %p284 = scmp.eq.s32.totalorder %s39, 2
      %p285 = por %p283, %p284
      %p286 = scmp.ne.s32.totalorder %s278, %s281
      %p287 = scmp.eq.s32.totalorder %s39, 0
      %p288 = por %p286, %p287
      %p289 = scmp.ne.s32.totalorder %s278, %s281
      %p290 = scmp.eq.s32.totalorder %s44, 2
      %p291 = por %p289, %p290
      %p292 = scmp.ne.s32.totalorder %s281, %s282
      %p293 = scmp.eq.s32.totalorder %s44, 0
      %p294 = por %p292, %p293
      %p295 = scmp.ne.s32.totalorder %s281, %s282
      %p296 = scmp.eq.s32.totalorder %s45, 2
      %p297 = por %p295, %p296
      %p299 = scmp.ne.s32.totalorder %s282, %s298
      %p300 = scmp.eq.s32.totalorder %s45, 0
      %p301 = por %p299, %p300
      %s302 = ssub.s32 %s39, %s46
      %p303 = scmp.eq.s32.totalorder %s302, 0
      %s305 = sadd.s32 %s304, 1
      %s306 = scalar_select %p303, %s304, %s305
      %p309 = pneg %p303
      %p310 = scmp.eq.s32.totalorder %s39, 2
      %p311 = por %p309, %p310
      %p312 = scmp.ne.s32.totalorder %s304, %s307
      %p313 = scmp.eq.s32.totalorder %s39, 0
      %p314 = por %p312, %p313
      %p315 = scmp.ne.s32.totalorder %s304, %s307
      %p316 = scmp.eq.s32.totalorder %s44, 2
      %p317 = por %p315, %p316
      %p318 = scmp.ne.s32.totalorder %s307, %s308
      %p319 = scmp.eq.s32.totalorder %s44, 0
      %p320 = por %p318, %p319
      %p321 = scmp.ne.s32.totalorder %s307, %s308
      %p322 = scmp.eq.s32.totalorder %s45, 2
      %p323 = por %p321, %p322
      %p325 = scmp.ne.s32.totalorder %s308, %s324
      %p326 = scmp.eq.s32.totalorder %s45, 0
      %p327 = por %p325, %p326
      %s328 = ssub.s32 %s39, %s46
      %p329 = scmp.eq.s32.totalorder %s328, 0
      %s331 = sadd.s32 %s330, 1
      %s332 = scalar_select %p329, %s330, %s331
      %p335 = pneg %p329
      %p336 = scmp.eq.s32.totalorder %s39, 2
      %p337 = por %p335, %p336
      %p338 = scmp.ne.s32.totalorder %s330, %s333
      %p339 = scmp.eq.s32.totalorder %s39, 0
      %p340 = por %p338, %p339
      %p341 = scmp.ne.s32.totalorder %s330, %s333
      %p342 = scmp.eq.s32.totalorder %s44, 2
      %p343 = por %p341, %p342
      %p344 = scmp.ne.s32.totalorder %s333, %s334
      %p345 = scmp.eq.s32.totalorder %s44, 0
      %p346 = por %p344, %p345
      %p347 = scmp.ne.s32.totalorder %s333, %s334
      %p348 = scmp.eq.s32.totalorder %s45, 2
      %p349 = por %p347, %p348
      %p351 = scmp.ne.s32.totalorder %s334, %s350
      %p352 = scmp.eq.s32.totalorder %s45, 0
      %p353 = por %p351, %p352
      %s354 = ssub.s32 %s39, %s46
      %p355 = scmp.eq.s32.totalorder %s354, 0
      %s357 = sadd.s32 %s356, 1
      %s358 = scalar_select %p355, %s356, %s357
      %p361 = pneg %p355
      %p362 = scmp.eq.s32.totalorder %s39, 2
      %p363 = por %p361, %p362
      %p364 = scmp.ne.s32.totalorder %s356, %s359
      %p365 = scmp.eq.s32.totalorder %s39, 0
      %p366 = por %p364, %p365
      %p367 = scmp.ne.s32.totalorder %s356, %s359
      %p368 = scmp.eq.s32.totalorder %s44, 2
      %p369 = por %p367, %p368
      %p370 = scmp.ne.s32.totalorder %s359, %s360
      %p371 = scmp.eq.s32.totalorder %s44, 0
      %p372 = por %p370, %p371
      %p373 = scmp.ne.s32.totalorder %s359, %s360
      %p374 = scmp.eq.s32.totalorder %s45, 2
      %p375 = por %p373, %p374
      %p377 = scmp.ne.s32.totalorder %s360, %s376
      %p378 = scmp.eq.s32.totalorder %s45, 0
      %p379 = por %p377, %p378
      %s381 = sadd.s32 %s380, 1
      %p384 = scmp.eq.s32.totalorder %s39, 2
      %p385 = scmp.ne.s32.totalorder %s380, %s382
      %p386 = scmp.eq.s32.totalorder %s39, 0
      %p387 = por %p385, %p386
      %p388 = scmp.ne.s32.totalorder %s380, %s382
      %p389 = scmp.eq.s32.totalorder %s44, 2
      %p390 = por %p388, %p389
      %p391 = scmp.ne.s32.totalorder %s382, %s383
      %p392 = scmp.eq.s32.totalorder %s44, 0
      %p393 = por %p391, %p392
      %p394 = scmp.ne.s32.totalorder %s382, %s383
      %p395 = scmp.eq.s32.totalorder %s45, 2
      %p396 = por %p394, %p395
      %p398 = scmp.ne.s32.totalorder %s383, %s397
      %p399 = scmp.eq.s32.totalorder %s45, 0
      %p400 = por %p398, %p399
      %s402 = sadd.s32 %s401, 1
      %p405 = scmp.eq.s32.totalorder %s39, 2
      %p406 = scmp.ne.s32.totalorder %s401, %s403
      %p407 = scmp.eq.s32.totalorder %s39, 0
      %p408 = por %p406, %p407
      %p409 = scmp.ne.s32.totalorder %s401, %s403
      %p410 = scmp.eq.s32.totalorder %s44, 2
      %p411 = por %p409, %p410
      %p412 = scmp.ne.s32.totalorder %s403, %s404
      %p413 = scmp.eq.s32.totalorder %s44, 0
      %p414 = por %p412, %p413
      %p415 = scmp.ne.s32.totalorder %s403, %s404
      %p416 = scmp.eq.s32.totalorder %s45, 2
      %p417 = por %p415, %p416
      %p419 = scmp.ne.s32.totalorder %s404, %s418
      %p420 = scmp.eq.s32.totalorder %s45, 0
      %p421 = por %p419, %p420
      %s423 = sadd.s32 %s422, 1
      %p426 = scmp.eq.s32.totalorder %s39, 2
      %p427 = scmp.ne.s32.totalorder %s422, %s424
      %p428 = scmp.eq.s32.totalorder %s39, 0
      %p429 = por %p427, %p428
      %p430 = scmp.ne.s32.totalorder %s422, %s424
      %p431 = scmp.eq.s32.totalorder %s44, 2
      %p432 = por %p430, %p431
      %p433 = scmp.ne.s32.totalorder %s424, %s425
      %p434 = scmp.eq.s32.totalorder %s44, 0
      %p435 = por %p433, %p434
      %p436 = scmp.ne.s32.totalorder %s424, %s425
      %p437 = scmp.eq.s32.totalorder %s45, 2
      %p438 = por %p436, %p437
      %p440 = scmp.ne.s32.totalorder %s425, %s439
      %p441 = scmp.eq.s32.totalorder %s45, 0
      %p442 = por %p440, %p441
      %s444 = sadd.s32 %s443, 1
      %p447 = scmp.eq.s32.totalorder %s39, 2
      %p448 = scmp.ne.s32.totalorder %s443, %s445
      %p449 = scmp.eq.s32.totalorder %s39, 0
      %p450 = por %p448, %p449
      %p451 = scmp.ne.s32.totalorder %s443, %s445
      %p452 = scmp.eq.s32.totalorder %s44, 2
      %p453 = por %p451, %p452
      %p454 = scmp.ne.s32.totalorder %s445, %s446
      %p455 = scmp.eq.s32.totalorder %s44, 0
      %p456 = por %p454, %p455
      %p457 = scmp.ne.s32.totalorder %s445, %s446
      %p458 = scmp.eq.s32.totalorder %s45, 2
      %p459 = por %p457, %p458
      %p461 = scmp.ne.s32.totalorder %s446, %s460
      %p462 = scmp.eq.s32.totalorder %s45, 0
      %p463 = por %p461, %p462
      %s465 = sadd.s32 %s464, 1
      %p468 = scmp.eq.s32.totalorder %s39, 2
      %p469 = scmp.ne.s32.totalorder %s464, %s466
      %p470 = scmp.eq.s32.totalorder %s39, 0
      %p471 = por %p469, %p470
      %p472 = scmp.ne.s32.totalorder %s464, %s466
      %p473 = scmp.eq.s32.totalorder %s44, 2
      %p474 = por %p472, %p473
      %p475 = scmp.ne.s32.totalorder %s466, %s467
      %p476 = scmp.eq.s32.totalorder %s44, 0
      %p477 = por %p475, %p476
      %p478 = scmp.ne.s32.totalorder %s466, %s467
      %p479 = scmp.eq.s32.totalorder %s45, 2
      %p480 = por %p478, %p479
      %p482 = scmp.ne.s32.totalorder %s467, %s481
      %p483 = scmp.eq.s32.totalorder %s45, 0
      %p484 = por %p482, %p483
      %p485 = scmp.le.s32.totalorder 1, %s39
      %p486 = scmp.lt.s32.totalorder %s39, 4
      %p487 = pnand %p485, %p486
      %p488 = pneg %p487
      // Predicated region
      $region9: #{transformer_forward.1} parent=5 // pred_check
        _
      $region10: #{transformer_forward.1} parent=5 // pred_check_branch
        %490 = sbr.rel (%p487) target = $region12
      $region11: #{transformer_forward.1} parent=5 // pred_region
        %s491 = ssub.s32 %s39, 1
        // Predicated region
        $region13: #{transformer_forward.1} parent=11 // pred_check
          %p492 = pneg %p60
        $region14: #{transformer_forward.1} parent=11 // pred_check_branch
          %494 = sbr.rel (%p492) target = $region16
        $region15: #{transformer_forward.1} parent=11 // pred_region
          _
        $region16: #{transformer_forward.1} parent=11 // pred_fallthru
          _
        // Predicated region
        $region17: #{transformer_forward.1} parent=11 // pred_check
          %p495 = pneg %p393
        $region18: #{transformer_forward.1} parent=11 // pred_check_branch
          %497 = sbr.rel (%p495) target = $region20
        $region19: #{transformer_forward.1} parent=11 // pred_region
          _
        $region20: #{transformer_forward.1} parent=11 // pred_fallthru
          _
        // Predicated region
        $region21: #{transformer_forward.1} parent=11 // pred_check
          %p498 = pneg %p414
        $region22: #{transformer_forward.1} parent=11 // pred_check_branch
          %500 = sbr.rel (%p498) target = $region24
        $region23: #{transformer_forward.1} parent=11 // pred_region
          %s502 = ssub.s32 32, 32
          %503 = vsyncadd [#allocation18], %s502
          %s505 = sshll.u32 [#allocation17], 4
          %s506 = int_to_ptr.vmem [resolvable:$true] %s505
          %508 = dma.hbm_to_vmem [thread:$0]  %s14, 32, %s506, [#allocation18]
        $region24: #{transformer_forward.1} parent=11 // pred_fallthru
          _
        // Predicated region
        $region25: #{transformer_forward.1} parent=11 // pred_check
          %p509 = pneg %p435
        $region26: #{transformer_forward.1} parent=11 // pred_check_branch
          %511 = sbr.rel (%p509) target = $region28
        $region27: #{transformer_forward.1} parent=11 // pred_region
          _
        $region28: #{transformer_forward.1} parent=11 // pred_fallthru
          _
        // Predicated region
        $region29: #{transformer_forward.1} parent=11 // pred_check
          %p512 = pneg %p456
        $region30: #{transformer_forward.1} parent=11 // pred_check_branch
          %514 = sbr.rel (%p512) target = $region32
        $region31: #{transformer_forward.1} parent=11 // pred_region
          _
        $region32: #{transformer_forward.1} parent=11 // pred_fallthru
          _
      $region12: #{transformer_forward.1} parent=5 // pred_fallthru
        _
      %p515 = scmp.lt.s32.totalorder %s39, 3
      // Predicated region
      $region33: #{transformer_forward.1} parent=5 // pred_check
        %p516 = pneg %p515
      $region34: #{transformer_forward.1} parent=5 // pred_check_branch
        %518 = sbr.rel (%p516) target = $region36
      $region35: #{transformer_forward.1} parent=5 // pred_region
        // Predicated region
        $region37: #{transformer_forward.1} parent=35 // pred_check
          %p519 = pneg %p80
        $region38: #{transformer_forward.1} parent=35 // pred_check_branch
          %521 = sbr.rel (%p519) target = $region40
        $region39: #{transformer_forward.1} parent=35 // pred_region
          %p522 = scmp.lt.s32.totalorder %s39, 2
          %s523 = scalar_select %p522, %s39, 2
          %s524 = smul.addr %s523, 4
          %s525 = scalar_lea.vmem %s1, %s524
        $region40: #{transformer_forward.1} parent=35 // pred_fallthru
          _
        // Predicated region
        $region41: #{transformer_forward.1} parent=35 // pred_check
          %p526 = pneg %p106
        $region42: #{transformer_forward.1} parent=35 // pred_check_branch
          %528 = sbr.rel (%p526) target = $region44
        $region43: #{transformer_forward.1} parent=35 // pred_region
          %s529 = sand.u32 %s96, 1
          %s530 = scalar_lea.sflag [#allocation4], %s529
          %s531 = sand.u32 %s96, 1
          %s532 = scalar_lea.vmem [#allocation3], %s531
          %s534 = ssub.s32 16, 16
          %535 = vsyncadd %s530, %s534
          %s536 = smul.addr %s39, 16
          %s537 = scalar_lea.hbm %s2, %s536
          %s539 = sshll.u32 %s532, 4
          %s540 = int_to_ptr.vmem [resolvable:$true] %s539
          %542 = dma.hbm_to_vmem [thread:$0]  %s537, 16, %s540, %s530
        $region44: #{transformer_forward.1} parent=35 // pred_fallthru
          _
        // Predicated region
        $region45: #{transformer_forward.1} parent=35 // pred_check
          %p543 = pneg %p132
        $region46: #{transformer_forward.1} parent=35 // pred_check_branch
          %545 = sbr.rel (%p543) target = $region48
        $region47: #{transformer_forward.1} parent=35 // pred_region
          %p546 = scmp.lt.s32.totalorder %s39, 2
          %s547 = scalar_select %p546, %s39, 2
          %s548 = smul.addr %s547, 4
          %s549 = scalar_lea.vmem %s3, %s548
        $region48: #{transformer_forward.1} parent=35 // pred_fallthru
          _
        // Predicated region
        $region49: #{transformer_forward.1} parent=35 // pred_check
          %p550 = pneg %p158
        $region50: #{transformer_forward.1} parent=35 // pred_check_branch
          %552 = sbr.rel (%p550) target = $region52
        $region51: #{transformer_forward.1} parent=35 // pred_region
          %s553 = sand.u32 %s39, 1
          %s554 = scalar_lea.sflag [#allocation6], %s553
          %s555 = sand.u32 %s148, 1
          %s556 = scalar_lea.vmem [#allocation5], %s555
          %s558 = ssub.s32 16, 16
          %559 = vsyncadd %s554, %s558
          %s560 = smul.addr %s39, 16
          %s561 = scalar_lea.hbm %s4, %s560
          %s563 = sshll.u32 %s556, 4
          %s564 = int_to_ptr.vmem [resolvable:$true] %s563
          %566 = dma.hbm_to_vmem [thread:$0]  %s561, 16, %s564, %s554
        $region52: #{transformer_forward.1} parent=35 // pred_fallthru
          _
        // Predicated region
        $region53: #{transformer_forward.1} parent=35 // pred_check
          %p567 = pneg %p184
        $region54: #{transformer_forward.1} parent=35 // pred_check_branch
          %569 = sbr.rel (%p567) target = $region56
        $region55: #{transformer_forward.1} parent=35 // pred_region
          %s570 = sand.u32 %s39, 1
          %s571 = scalar_lea.sflag [#allocation6], %s570
          %s572 = sand.u32 %s174, 1
          %s573 = scalar_lea.vmem [#allocation7], %s572
          %s575 = ssub.s32 16, 16
          %576 = vsyncadd %s571, %s575
          %s577 = smul.addr %s39, 16
          %s578 = scalar_lea.hbm %s5, %s577
          %s580 = sshll.u32 %s573, 4
          %s581 = int_to_ptr.vmem [resolvable:$true] %s580
          %583 = dma.hbm_to_vmem [thread:$0]  %s578, 16, %s581, %s571
        $region56: #{transformer_forward.1} parent=35 // pred_fallthru
          _
        // Predicated region
        $region57: #{transformer_forward.1} parent=35 // pred_check
          %p584 = pneg %p210
        $region58: #{transformer_forward.1} parent=35 // pred_check_branch
          %586 = sbr.rel (%p584) target = $region60
        $region59: #{transformer_forward.1} parent=35 // pred_region
          %s587 = sand.u32 %s39, 1
          %s588 = scalar_lea.sflag [#allocation9], %s587
          %s589 = sand.u32 %s200, 1
          %s590 = scalar_lea.vmem [#allocation8], %s589
          %s592 = ssub.s32 16, 16
          %593 = vsyncadd %s588, %s592
          %s594 = smul.addr %s39, 16
          %s595 = scalar_lea.hbm %s6, %s594
          %s597 = sshll.u32 %s590, 4
          %s598 = int_to_ptr.vmem [resolvable:$true] %s597
          %600 = dma.hbm_to_vmem [thread:$0]  %s595, 16, %s598, %s588
        $region60: #{transformer_forward.1} parent=35 // pred_fallthru
          _
        // Predicated region
        $region61: #{transformer_forward.1} parent=35 // pred_check
          %p601 = pneg %p236
        $region62: #{transformer_forward.1} parent=35 // pred_check_branch
          %603 = sbr.rel (%p601) target = $region64
        $region63: #{transformer_forward.1} parent=35 // pred_region
          %s604 = sand.u32 %s39, 1
          %s605 = scalar_lea.sflag [#allocation9], %s604
          %s606 = sand.u32 %s226, 1
          %s607 = scalar_lea.vmem [#allocation10], %s606
          %s609 = ssub.s32 16, 16
          %610 = vsyncadd %s605, %s609
          %s611 = smul.addr %s39, 16
          %s612 = scalar_lea.hbm %s7, %s611
          %s614 = sshll.u32 %s607, 4
          %s615 = int_to_ptr.vmem [resolvable:$true] %s614
          %617 = dma.hbm_to_vmem [thread:$0]  %s612, 16, %s615, %s605
        $region64: #{transformer_forward.1} parent=35 // pred_fallthru
          _
        // Predicated region
        $region65: #{transformer_forward.1} parent=35 // pred_check
          %p618 = pneg %p262
        $region66: #{transformer_forward.1} parent=35 // pred_check_branch
          %620 = sbr.rel (%p618) target = $region68
        $region67: #{transformer_forward.1} parent=35 // pred_region
          %s621 = sand.u32 %s39, 1
          %s622 = scalar_lea.sflag [#allocation12], %s621
          %s623 = sand.u32 %s252, 1
          %s624 = scalar_lea.vmem [#allocation11], %s623
          %s626 = ssub.s32 16, 16
          %627 = vsyncadd %s622, %s626
          %s628 = smul.addr %s39, 16
          %s629 = scalar_lea.hbm %s8, %s628
          %s631 = sshll.u32 %s624, 4
          %s632 = int_to_ptr.vmem [resolvable:$true] %s631
          %634 = dma.hbm_to_vmem [thread:$0]  %s629, 16, %s632, %s622
        $region68: #{transformer_forward.1} parent=35 // pred_fallthru
          _
        // Predicated region
        $region69: #{transformer_forward.1} parent=35 // pred_check
          %p635 = pneg %p288
        $region70: #{transformer_forward.1} parent=35 // pred_check_branch
          %637 = sbr.rel (%p635) target = $region72
        $region71: #{transformer_forward.1} parent=35 // pred_region
          %s638 = sand.u32 %s39, 1
          %s639 = scalar_lea.sflag [#allocation12], %s638
          %s640 = sand.u32 %s278, 1
          %s641 = smul.addr %s640, 64
          %s642 = scalar_lea.vmem [#allocation13], %s641
          %s644 = ssub.s32 1024, 1024
          %645 = vsyncadd %s639, %s644
          %s646 = smul.addr %s39, 16
          %s647 = smul.addr %s646, 64
          %s648 = scalar_lea.hbm %s9, %s647
          %s650 = sshll.u32 %s642, 4
          %s651 = int_to_ptr.vmem [resolvable:$true] %s650
          %653 = dma.hbm_to_vmem [thread:$0]  %s648, 1024, %s651, %s639
        $region72: #{transformer_forward.1} parent=35 // pred_fallthru
          _
        // Predicated region
        $region73: #{transformer_forward.1} parent=35 // pred_check
          %p654 = pneg %p314
        $region74: #{transformer_forward.1} parent=35 // pred_check_branch
          %656 = sbr.rel (%p654) target = $region76
        $region75: #{transformer_forward.1} parent=35 // pred_region
          %p657 = scmp.lt.s32.totalorder %s39, 2
          %s658 = scalar_select %p657, %s39, 2
          %s659 = smul.addr %s658, 16
          %s660 = scalar_lea.vmem %s10, %s659
        $region76: #{transformer_forward.1} parent=35 // pred_fallthru
          _
        // Predicated region
        $region77: #{transformer_forward.1} parent=35 // pred_check
          %p661 = pneg %p340
        $region78: #{transformer_forward.1} parent=35 // pred_check_branch
          %663 = sbr.rel (%p661) target = $region80
        $region79: #{transformer_forward.1} parent=35 // pred_region
          %s664 = sand.u32 %s39, 1
          %s665 = scalar_lea.sflag [#allocation15], %s664
          %s666 = sand.u32 %s330, 1
          %s667 = smul.addr %s666, 64
          %s668 = scalar_lea.vmem [#allocation14], %s667
          %s670 = ssub.s32 1024, 1024
          %671 = vsyncadd %s665, %s670
          %s672 = smul.addr %s39, 16
          %s673 = smul.addr %s672, 64
          %s674 = scalar_lea.hbm %s11, %s673
          %s676 = sshll.u32 %s668, 4
          %s677 = int_to_ptr.vmem [resolvable:$true] %s676
          %679 = dma.hbm_to_vmem [thread:$0]  %s674, 1024, %s677, %s665
        $region80: #{transformer_forward.1} parent=35 // pred_fallthru
          _
        // Predicated region
        $region81: #{transformer_forward.1} parent=35 // pred_check
          %p680 = pneg %p366
        $region82: #{transformer_forward.1} parent=35 // pred_check_branch
          %682 = sbr.rel (%p680) target = $region84
        $region83: #{transformer_forward.1} parent=35 // pred_region
          %s683 = sand.u32 %s39, 1
          %s684 = scalar_lea.sflag [#allocation15], %s683
          %s685 = sand.u32 %s356, 1
          %s686 = scalar_lea.vmem [#allocation16], %s685
          %s688 = ssub.s32 16, 16
          %689 = vsyncadd %s684, %s688
          %s690 = smul.addr %s39, 16
          %s691 = scalar_lea.hbm %s12, %s690
          %s693 = sshll.u32 %s686, 4
          %s694 = int_to_ptr.vmem [resolvable:$true] %s693
          %696 = dma.hbm_to_vmem [thread:$0]  %s691, 16, %s694, %s684
        $region84: #{transformer_forward.1} parent=35 // pred_fallthru
          _
      $region36: #{transformer_forward.1} parent=5 // pred_fallthru
        _
      %p697 = scmp.le.s32.totalorder 1, %s39
      %p698 = scmp.lt.s32.totalorder %s39, 4
      %p699 = pnand %p697, %p698
      %p700 = pneg %p699
      // Predicated region
      $region85: #{transformer_forward.1} parent=5 // pred_check
        _
      $region86: #{transformer_forward.1} parent=5 // pred_check_branch
        %702 = sbr.rel (%p699) target = $region88
      $region87: #{transformer_forward.1} parent=5 // pred_region
        %s703 = ssub.s32 %s39, 1
        %s704 = sand.u32 %s99, 1
        %s705 = scalar_lea.sflag [#allocation4], %s704
        %s706 = sand.u32 %s99, 1
        %s707 = scalar_lea.vmem [#allocation3], %s706
        // Predicated region
        $region89: #{transformer_forward.1} parent=87 // pred_check
          %p708 = pneg %p112
        $region90: #{transformer_forward.1} parent=87 // pred_check_branch
          %710 = sbr.rel (%p708) target = $region92
        $region91: #{transformer_forward.1} parent=87 // pred_region
          %711 = dma.done %s705, 16
        $region92: #{transformer_forward.1} parent=87 // pred_fallthru
          _
        %s712 = sand.u32 %s44, 1
        %s713 = scalar_lea.sflag [#allocation6], %s712
        %s714 = sand.u32 %s151, 1
        %s715 = scalar_lea.vmem [#allocation5], %s714
        // Predicated region
        $region93: #{transformer_forward.1} parent=87 // pred_check
          %p716 = pneg %p164
        $region94: #{transformer_forward.1} parent=87 // pred_check_branch
          %718 = sbr.rel (%p716) target = $region96
        $region95: #{transformer_forward.1} parent=87 // pred_region
          %719 = dma.done %s713, 16
        $region96: #{transformer_forward.1} parent=87 // pred_fallthru
          _
        %s720 = sand.u32 %s44, 1
        %s721 = scalar_lea.sflag [#allocation6], %s720
        %s722 = sand.u32 %s177, 1
        %s723 = scalar_lea.vmem [#allocation7], %s722
        // Predicated region
        $region97: #{transformer_forward.1} parent=87 // pred_check
          %p724 = pneg %p190
        $region98: #{transformer_forward.1} parent=87 // pred_check_branch
          %726 = sbr.rel (%p724) target = $region100
        $region99: #{transformer_forward.1} parent=87 // pred_region
          %727 = dma.done %s721, 16
        $region100: #{transformer_forward.1} parent=87 // pred_fallthru
          _
        %s728 = sand.u32 %s44, 1
        %s729 = scalar_lea.sflag [#allocation9], %s728
        %s730 = sand.u32 %s203, 1
        %s731 = scalar_lea.vmem [#allocation8], %s730
        // Predicated region
        $region101: #{transformer_forward.1} parent=87 // pred_check
          %p732 = pneg %p216
        $region102: #{transformer_forward.1} parent=87 // pred_check_branch
          %734 = sbr.rel (%p732) target = $region104
        $region103: #{transformer_forward.1} parent=87 // pred_region
          %735 = dma.done %s729, 16
        $region104: #{transformer_forward.1} parent=87 // pred_fallthru
          _
        %s736 = sand.u32 %s44, 1
        %s737 = scalar_lea.sflag [#allocation9], %s736
        %s738 = sand.u32 %s229, 1
        %s739 = scalar_lea.vmem [#allocation10], %s738
        // Predicated region
        $region105: #{transformer_forward.1} parent=87 // pred_check
          %p740 = pneg %p242
        $region106: #{transformer_forward.1} parent=87 // pred_check_branch
          %742 = sbr.rel (%p740) target = $region108
        $region107: #{transformer_forward.1} parent=87 // pred_region
          %743 = dma.done %s737, 16
        $region108: #{transformer_forward.1} parent=87 // pred_fallthru
          _
        %s744 = sand.u32 %s44, 1
        %s745 = scalar_lea.sflag [#allocation12], %s744
        %s746 = sand.u32 %s255, 1
        %s747 = scalar_lea.vmem [#allocation11], %s746
        // Predicated region
        $region109: #{transformer_forward.1} parent=87 // pred_check
          %p748 = pneg %p268
        $region110: #{transformer_forward.1} parent=87 // pred_check_branch
          %750 = sbr.rel (%p748) target = $region112
        $region111: #{transformer_forward.1} parent=87 // pred_region
          %751 = dma.done %s745, 16
        $region112: #{transformer_forward.1} parent=87 // pred_fallthru
          _
        %s752 = sand.u32 %s44, 1
        %s753 = scalar_lea.sflag [#allocation12], %s752
        %s754 = sand.u32 %s281, 1
        %s755 = smul.addr %s754, 64
        %s756 = scalar_lea.vmem [#allocation13], %s755
        // Predicated region
        $region113: #{transformer_forward.1} parent=87 // pred_check
          %p757 = pneg %p294
        $region114: #{transformer_forward.1} parent=87 // pred_check_branch
          %759 = sbr.rel (%p757) target = $region116
        $region115: #{transformer_forward.1} parent=87 // pred_region
          %760 = dma.done %s753, 1024
        $region116: #{transformer_forward.1} parent=87 // pred_fallthru
          _
        %s761 = sand.u32 %s44, 1
        %s762 = scalar_lea.sflag [#allocation15], %s761
        %s763 = sand.u32 %s333, 1
        %s764 = smul.addr %s763, 64
        %s765 = scalar_lea.vmem [#allocation14], %s764
        // Predicated region
        $region117: #{transformer_forward.1} parent=87 // pred_check
          %p766 = pneg %p346
        $region118: #{transformer_forward.1} parent=87 // pred_check_branch
          %768 = sbr.rel (%p766) target = $region120
        $region119: #{transformer_forward.1} parent=87 // pred_region
          %769 = dma.done %s762, 1024
        $region120: #{transformer_forward.1} parent=87 // pred_fallthru
          _
        %s770 = sand.u32 %s44, 1
        %s771 = scalar_lea.sflag [#allocation15], %s770
        %s772 = sand.u32 %s359, 1
        %s773 = scalar_lea.vmem [#allocation16], %s772
        // Predicated region
        $region121: #{transformer_forward.1} parent=87 // pred_check
          %p774 = pneg %p372
        $region122: #{transformer_forward.1} parent=87 // pred_check_branch
          %776 = sbr.rel (%p774) target = $region124
        $region123: #{transformer_forward.1} parent=87 // pred_region
          %777 = dma.done %s771, 16
        $region124: #{transformer_forward.1} parent=87 // pred_fallthru
          _
        // Predicated region
        $region125: #{transformer_forward.1} parent=87 // pred_check
          %p778 = pneg %p414
        $region126: #{transformer_forward.1} parent=87 // pred_check_branch
          %780 = sbr.rel (%p778) target = $region128
        $region127: #{transformer_forward.1} parent=87 // pred_region
          %781 = dma.done [#allocation18], 32
        $region128: #{transformer_forward.1} parent=87 // pred_fallthru
          _
        %p782 = pneg %p60
        %p783 = pneg %p57
        %p784 = scmp.lt.s32.totalorder %s44, 2
        %s785 = scalar_select %p784, %s44, 2
        %s786 = smul.addr %s785, 4
        %s787 = scalar_lea.vmem %s1, %s786
        %p788 = pneg %p86
        %p789 = pneg %p83
        %s790 = sand.u32 %s99, 1
        %s791 = scalar_lea.sflag [#allocation4], %s790
        %s792 = sand.u32 %s99, 1
        %s793 = scalar_lea.vmem [#allocation3], %s792
        %p794 = pneg %p112
        %p795 = pneg %p109
        %p796 = scmp.lt.s32.totalorder %s44, 2
        %s797 = scalar_select %p796, %s44, 2
        %s798 = smul.addr %s797, 4
        %s799 = scalar_lea.vmem %s3, %s798
        %p800 = pneg %p138
        %p801 = pneg %p135
        %s802 = sand.u32 %s44, 1
        %s803 = scalar_lea.sflag [#allocation6], %s802
        %s804 = sand.u32 %s151, 1
        %s805 = scalar_lea.vmem [#allocation5], %s804
        %p806 = pneg %p164
        %p807 = pneg %p161
        %s808 = sand.u32 %s44, 1
        %s809 = scalar_lea.sflag [#allocation6], %s808
        %s810 = sand.u32 %s177, 1
        %s811 = scalar_lea.vmem [#allocation7], %s810
        %p812 = pneg %p190
        %p813 = pneg %p187
        %s814 = sand.u32 %s44, 1
        %s815 = scalar_lea.sflag [#allocation9], %s814
        %s816 = sand.u32 %s203, 1
        %s817 = scalar_lea.vmem [#allocation8], %s816
        %p818 = pneg %p216
        %p819 = pneg %p213
        %s820 = sand.u32 %s44, 1
        %s821 = scalar_lea.sflag [#allocation9], %s820
        %s822 = sand.u32 %s229, 1
        %s823 = scalar_lea.vmem [#allocation10], %s822
        %p824 = pneg %p242
        %p825 = pneg %p239
        %s826 = sand.u32 %s44, 1
        %s827 = scalar_lea.sflag [#allocation12], %s826
        %s828 = sand.u32 %s255, 1
        %s829 = scalar_lea.vmem [#allocation11], %s828
        %p830 = pneg %p268
        %p831 = pneg %p265
        %s832 = sand.u32 %s44, 1
        %s833 = scalar_lea.sflag [#allocation12], %s832
        %s834 = sand.u32 %s281, 1
        %s835 = smul.addr %s834, 64
        %s836 = scalar_lea.vmem [#allocation13], %s835
        %p837 = pneg %p294
        %p838 = pneg %p291
        %p839 = scmp.lt.s32.totalorder %s44, 2
        %s840 = scalar_select %p839, %s44, 2
        %s841 = smul.addr %s840, 16
        %s842 = scalar_lea.vmem %s10, %s841
        %p843 = pneg %p320
        %p844 = pneg %p317
        %s845 = sand.u32 %s44, 1
        %s846 = scalar_lea.sflag [#allocation15], %s845
        %s847 = sand.u32 %s333, 1
        %s848 = smul.addr %s847, 64
        %s849 = scalar_lea.vmem [#allocation14], %s848
        %p850 = pneg %p346
        %p851 = pneg %p343
        %s852 = sand.u32 %s44, 1
        %s853 = scalar_lea.sflag [#allocation15], %s852
        %s854 = sand.u32 %s359, 1
        %s855 = scalar_lea.vmem [#allocation16], %s854
        %p856 = pneg %p372
        %p857 = pneg %p369
        %p858 = pneg %p393
        %p859 = pneg %p390
        %p860 = pneg %p414
        %p861 = pneg %p411
        %p862 = pneg %p435
        %p863 = pneg %p432
        %p864 = pneg %p456
        %p865 = pneg %p453
        %p866 = pneg %p477
        %p867 = pneg %p474
        %p868 = scmp.lt.s32.totalorder %s44, 2
        %s869 = scalar_select %p868, %s44, 2
        %s870 = smul.addr %s869, 4
        %s871 = scalar_lea.vmem %s1, %s870
        %p872 = scmp.lt.s32.totalorder %s44, 2
        %s873 = scalar_select %p872, %s44, 2
        %s874 = smul.addr %s873, 4
        %s875 = scalar_lea.vmem %s3, %s874
        %p876 = scmp.lt.s32.totalorder %s44, 2
        %s877 = scalar_select %p876, %s44, 2
        %s878 = smul.addr %s877, 16
        %s879 = scalar_lea.vmem %s10, %s878
        %p881 = scmp.eq.s32.totalorder %s44, 0
        // Predicated region
        $region129: #{transformer_forward.1} parent=87 // pred_check
          %p882 = pneg %p881
        $region130: #{transformer_forward.1} parent=87 // pred_check_branch
          %884 = sbr.rel (%p882) target = $region132
        $region131: #{transformer_forward.1} parent=87 // pred_region
          %v885 = vld [vmem:[%s0] sm:$0xff]
          %v886 = vld [vmem:[%s0 + $0x8] sm:$0xff]
          %vm887 = vcmask 64512
          %888 = vst.msk [vmem:[#allocation2] sm:$0xff] %vm887, %v885
          %889 = vst.msk [vmem:[#allocation2 + $0x8] sm:$0xff] %vm887, %v886
        $region132: #{transformer_forward.1} parent=87 // pred_fallthru
          _
        %v890 = vld [vmem:[#allocation2] sm:$0xff]
        %v891 = vld [vmem:[#allocation2 + $0x8] sm:$0xff]
        %v892 = vld [vmem:[%s871] sm:$0xf]
        %v893 = vld [vmem:[%s707] sm:$0x1]
        %v894 = vld [vmem:[%s875] sm:$0xf]
        %v895 = vunpack.c.l.bf16 %v894
        %v896 = vld [vmem:[%s715] sm:$0x1]
        %v897 = vpack.c.bf16 %v891, %v890
        %v899 = vlaneseq
        %v900 = vshrl.u32 %v899, 7
        %v901 = vsub.s32 0, %v900
        %v902 = vrot.slane %v893, %v901
        %vm904 = vcmask 64512
        %v906 = vsel %vm904, %v897, 0
        %vm908 = vcmask 1043456
        %v910 = vsel %vm908, %v892, 0
        %912 = vmatprep.subr.bf16.mxu0 0
        %913 = vmatpush1.bf16.msra.mxu0 %v910
        %914 = vmatprep.subr.bf16.mxu0 0
        %915 = vmatpush1.bf16.msra.mxu0 0
        %916 = vmatprep.subr.bf16.mxu0 0
        %917 = vmatpush1.bf16.msra.mxu0 0
        %918 = vmatprep.subr.bf16.mxu0 0
        %919 = vmatpush1.bf16.msra.mxu0 0
        %920 = vmatprep.subr.bf16.mxu0 0
        %921 = vmatpush1.bf16.msra.mxu0 0
        %922 = vmatprep.subr.bf16.mxu0 0
        %923 = vmatpush1.bf16.msra.mxu0 0
        %924 = vmatprep.subr.bf16.mxu0 0
        %925 = vmatpush1.bf16.msra.mxu0 0
        %926 = vmatprep.subr.bf16.mxu0 0
        %927 = vmatpush1.bf16.msra.mxu0 0
        %928 = vmatprep.subr.bf16.mxu0 0
        %929 = vmatpush1.bf16.msra.mxu0 0
        %930 = vmatprep.subr.bf16.mxu0 0
        %931 = vmatpush1.bf16.msra.mxu0 0
        %932 = vmatprep.subr.bf16.mxu0 0
        %933 = vmatpush1.bf16.msra.mxu0 0
        %934 = vmatprep.subr.bf16.mxu0 0
        %935 = vmatpush1.bf16.msra.mxu0 0
        %936 = vmatprep.subr.bf16.mxu0 0
        %937 = vmatpush1.bf16.msra.mxu0 0
        %938 = vmatprep.subr.bf16.mxu0 0
        %939 = vmatpush1.bf16.msra.mxu0 0
        %940 = vmatprep.subr.bf16.mxu0 0
        %941 = vmatpush1.bf16.msra.mxu0 0
        %942 = vmatprep.subr.bf16.mxu0 0
        %943 = vmatpush1.bf16.msra.mxu0 0
        %944 = vmatprep.mubr.bf16.mxu0 0
        %945 = vmatmul.mubr.bf16.gmra.mrb[0].mxu0 %v906
        %v946 = vpop.f32.mrb[0].mxu0
        %v947 = vadd.f32 %v902, %v946
        %v948 = vpop.f32.mrb[0].mxu0
        %v949 = vpop.f32.mrb[0].mxu0
        %v950 = vadd.f32 %v902, %v949
        %v951 = vpop.f32.mrb[0].mxu0
        %952 = vdwg.mxu0
        %954 = vrot.lane.b32.xlu0 %v947, 120
        %v955 = vpop.permute.xlu0 %954
        %vm956 = vcmask 31744
        %v957 = vsel %vm956, %v947, 0
        %v959 = vsel %vm956, %v955, 0
        %961 = vmatprep.subr.mxu0 0.0
        %962 = vmatpush1.xpose.msra.mxu0 %v959
        %963 = vmatprep.subr.mxu0 0.0
        %964 = vmatpush1.xpose.msra.mxu0 0.0
        %965 = vmatprep.subr.mxu0 0.0
        %966 = vmatpush1.xpose.msra.mxu0 0.0
        %967 = vmatprep.subr.mxu0 0.0
        %968 = vmatpush1.xpose.msra.mxu0 0.0
        %969 = vmatprep.subr.mxu0 0.0
        %970 = vmatpush1.xpose.msra.mxu0 0.0
        %971 = vmatprep.subr.mxu0 0.0
        %972 = vmatpush1.xpose.msra.mxu0 0.0
        %973 = vmatprep.subr.mxu0 0.0
        %974 = vmatpush1.xpose.msra.mxu0 0.0
        %975 = vmatprep.subr.mxu0 0.0
        %976 = vmatpush1.xpose.msra.mxu0 0.0
        %977 = vmatprep.subr.mxu0 0.0
        %978 = vmatpush1.xpose.msra.mxu0 0.0
        %979 = vmatprep.subr.mxu0 0.0
        %980 = vmatpush1.xpose.msra.mxu0 0.0
        %981 = vmatprep.subr.mxu0 0.0
        %982 = vmatpush1.xpose.msra.mxu0 0.0
        %983 = vmatprep.subr.mxu0 0.0
        %984 = vmatpush1.xpose.msra.mxu0 0.0
        %985 = vmatprep.subr.mxu0 0.0
        %986 = vmatpush1.xpose.msra.mxu0 0.0
        %987 = vmatprep.subr.mxu0 0.0
        %988 = vmatpush1.xpose.msra.mxu0 0.0
        %989 = vmatprep.subr.mxu0 0.0
        %990 = vmatpush1.xpose.msra.mxu0 0.0
        %991 = vmatprep.subr.mxu0 0.0
        %992 = vmatpush1.xpose.msra.mxu0 0.0
        %993 = vmatprep.subr.mxu0 0.0
        %994 = vmatpush1.xpose.msra.mxu0 0.0
        %995 = vmatprep.subr.mxu0 0.0
        %996 = vmatpush1.xpose.msra.mxu0 0.0
        %997 = vmatprep.subr.mxu0 0.0
        %998 = vmatpush1.xpose.msra.mxu0 0.0
        %999 = vmatprep.subr.mxu0 0.0
        %1000 = vmatpush1.xpose.msra.mxu0 0.0
        %1001 = vmatprep.subr.mxu0 0.0
        %1002 = vmatpush1.xpose.msra.mxu0 0.0
        %1003 = vmatprep.subr.mxu0 0.0
        %1004 = vmatpush1.xpose.msra.mxu0 0.0
        %1005 = vmatprep.subr.mxu0 0.0
        %1006 = vmatpush1.xpose.msra.mxu0 0.0
        %1007 = vmatprep.subr.mxu0 0.0
        %1008 = vmatpush1.xpose.msra.mxu0 0.0
        %1009 = vmatprep.subr.mxu0 0.0
        %1010 = vmatpush1.xpose.msra.mxu0 0.0
        %1011 = vmatprep.subr.mxu0 0.0
        %1012 = vmatpush1.xpose.msra.mxu0 0.0
        %1013 = vmatprep.subr.mxu0 0.0
        %1014 = vmatpush1.xpose.msra.mxu0 0.0
        %1015 = vmatprep.subr.mxu0 0.0
        %1016 = vmatpush1.xpose.msra.mxu0 0.0
        %1017 = vmatprep.subr.mxu0 0.0
        %1018 = vmatpush1.xpose.msra.mxu0 0.0
        %1019 = vmatprep.subr.mxu0 0.0
        %1020 = vmatpush1.xpose.msra.mxu0 0.0
        %1021 = vmatprep.subr.mxu0 0.0
        %1022 = vmatpush1.xpose.msra.mxu0 0.0
        %1023 = vmatprep.subr.mxu0 0.0
        %1024 = vmatpush1.xpose.msra.mxu0 0.0
        %1025 = vmatprep.mubr.f32.mxu0 0.0
        %1026 = vmatmul.mubr.f32.gmra.mrb[0].mxu0 %v957
        %v1027 = vpop.f32.mrb[0].mxu0
        %v1028 = vadd.f32 0.0, %v1027
        %v1029 = vpop.f32.mrb[0].mxu0
        %1030 = vdwg.mxu0
        %v1031 = vsel %vm904, %v1028, -inf
        %1032 = vmax.xlane.f32.xlu0 %v1031
        %v1033 = vpop.xlane.xlu0 %1032
        %v1034 = vsub.f32 %v1028, %v1033
        %v1035 = vmul.f32 %v1034, 1.442695
        %v1036 = vpow.pop %v1035
        %v1037 = vsel %vm904, %v1036, 0.0
        %1038 = vadd.xlane.f32.xlu0 %v1037
        %v1039 = vpop.xlane.xlu0 %1038
        %v1040 = vrcp.pop %v1039
        %v1041 = vmul.f32 %v1036, %v1040
        %1042 = vrot.lane.b32.xlu0 %v947, 112
        %v1043 = vpop.permute.xlu0 %1042
        %v1046 = vsel %vm904, %v1041, 0
        %1048 = vmatprep.subr.mxu0 0.0
        %1049 = vmatpush1.msra.mxu0 %v1043
        %1050 = vmatprep.subr.mxu0 0.0
        %1051 = vmatpush1.msra.mxu0 0.0
        %1052 = vmatprep.subr.mxu0 0.0
        %1053 = vmatpush1.msra.mxu0 0.0
        %1054 = vmatprep.subr.mxu0 0.0
        %1055 = vmatpush1.msra.mxu0 0.0
        %1056 = vmatprep.subr.mxu0 0.0
        %1057 = vmatpush1.msra.mxu0 0.0
        %1058 = vmatprep.subr.mxu0 0.0
        %1059 = vmatpush1.msra.mxu0 0.0
        %1060 = vmatprep.subr.mxu0 0.0
        %1061 = vmatpush1.msra.mxu0 0.0
        %1062 = vmatprep.subr.mxu0 0.0
        %1063 = vmatpush1.msra.mxu0 0.0
        %1064 = vmatprep.subr.mxu0 0.0
        %1065 = vmatpush1.msra.mxu0 0.0
        %1066 = vmatprep.subr.mxu0 0.0
        %1067 = vmatpush1.msra.mxu0 0.0
        %1068 = vmatprep.subr.mxu0 0.0
        %1069 = vmatpush1.msra.mxu0 0.0
        %1070 = vmatprep.subr.mxu0 0.0
        %1071 = vmatpush1.msra.mxu0 0.0
        %1072 = vmatprep.subr.mxu0 0.0
        %1073 = vmatpush1.msra.mxu0 0.0
        %1074 = vmatprep.subr.mxu0 0.0
        %1075 = vmatpush1.msra.mxu0 0.0
        %1076 = vmatprep.subr.mxu0 0.0
        %1077 = vmatpush1.msra.mxu0 0.0
        %1078 = vmatprep.subr.mxu0 0.0
        %1079 = vmatpush1.msra.mxu0 0.0
        %1080 = vmatprep.subr.mxu0 0.0
        %1081 = vmatpush1.msra.mxu0 0.0
        %1082 = vmatprep.subr.mxu0 0.0
        %1083 = vmatpush1.msra.mxu0 0.0
        %1084 = vmatprep.subr.mxu0 0.0
        %1085 = vmatpush1.msra.mxu0 0.0
        %1086 = vmatprep.subr.mxu0 0.0
        %1087 = vmatpush1.msra.mxu0 0.0
        %1088 = vmatprep.subr.mxu0 0.0
        %1089 = vmatpush1.msra.mxu0 0.0
        %1090 = vmatprep.subr.mxu0 0.0
        %1091 = vmatpush1.msra.mxu0 0.0
        %1092 = vmatprep.subr.mxu0 0.0
        %1093 = vmatpush1.msra.mxu0 0.0
        %1094 = vmatprep.subr.mxu0 0.0
        %1095 = vmatpush1.msra.mxu0 0.0
        %1096 = vmatprep.subr.mxu0 0.0
        %1097 = vmatpush1.msra.mxu0 0.0
        %1098 = vmatprep.subr.mxu0 0.0
        %1099 = vmatpush1.msra.mxu0 0.0
        %1100 = vmatprep.subr.mxu0 0.0
        %1101 = vmatpush1.msra.mxu0 0.0
        %1102 = vmatprep.subr.mxu0 0.0
        %1103 = vmatpush1.msra.mxu0 0.0
        %1104 = vmatprep.subr.mxu0 0.0
        %1105 = vmatpush1.msra.mxu0 0.0
        %1106 = vmatprep.subr.mxu0 0.0
        %1107 = vmatpush1.msra.mxu0 0.0
        %1108 = vmatprep.subr.mxu0 0.0
        %1109 = vmatpush1.msra.mxu0 0.0
        %1110 = vmatprep.subr.mxu0 0.0
        %1111 = vmatpush1.msra.mxu0 0.0
        %1112 = vmatprep.mubr.f32.mxu0 0.0
        %1113 = vmatmul.mubr.f32.gmra.mrb[0].mxu0 %v1046
        %v1114 = vpop.f32.mrb[0].mxu0
        %v1115 = vadd.f32 0.0, %v1114
        %v1116 = vpop.f32.mrb[0].mxu0
        %1117 = vdwg.mxu0
        %1118 = vrot.lane.b32.xlu0 %v947, 124
        %v1119 = vpop.permute.xlu0 %1118
        %1120 = vrot.lane.b32.xlu0 %v947, 116
        %v1121 = vpop.permute.xlu0 %1120
        %v1122 = vsel %vm956, %v1119, 0
        %v1124 = vsel %vm956, %v1121, 0
        %1126 = vmatprep.subr.mxu0 0.0
        %1127 = vmatpush1.xpose.msra.mxu0 %v1124
        %1128 = vmatprep.subr.mxu0 0.0
        %1129 = vmatpush1.xpose.msra.mxu0 0.0
        %1130 = vmatprep.subr.mxu0 0.0
        %1131 = vmatpush1.xpose.msra.mxu0 0.0
        %1132 = vmatprep.subr.mxu0 0.0
        %1133 = vmatpush1.xpose.msra.mxu0 0.0
        %1134 = vmatprep.subr.mxu0 0.0
        %1135 = vmatpush1.xpose.msra.mxu0 0.0
        %1136 = vmatprep.subr.mxu0 0.0
        %1137 = vmatpush1.xpose.msra.mxu0 0.0
        %1138 = vmatprep.subr.mxu0 0.0
        %1139 = vmatpush1.xpose.msra.mxu0 0.0
        %1140 = vmatprep.subr.mxu0 0.0
        %1141 = vmatpush1.xpose.msra.mxu0 0.0
        %1142 = vmatprep.subr.mxu0 0.0
        %1143 = vmatpush1.xpose.msra.mxu0 0.0
        %1144 = vmatprep.subr.mxu0 0.0
        %1145 = vmatpush1.xpose.msra.mxu0 0.0
        %1146 = vmatprep.subr.mxu0 0.0
        %1147 = vmatpush1.xpose.msra.mxu0 0.0
        %1148 = vmatprep.subr.mxu0 0.0
        %1149 = vmatpush1.xpose.msra.mxu0 0.0
        %1150 = vmatprep.subr.mxu0 0.0
        %1151 = vmatpush1.xpose.msra.mxu0 0.0
        %1152 = vmatprep.subr.mxu0 0.0
        %1153 = vmatpush1.xpose.msra.mxu0 0.0
        %1154 = vmatprep.subr.mxu0 0.0
        %1155 = vmatpush1.xpose.msra.mxu0 0.0
        %1156 = vmatprep.subr.mxu0 0.0
        %1157 = vmatpush1.xpose.msra.mxu0 0.0
        %1158 = vmatprep.subr.mxu0 0.0
        %1159 = vmatpush1.xpose.msra.mxu0 0.0
        %1160 = vmatprep.subr.mxu0 0.0
        %1161 = vmatpush1.xpose.msra.mxu0 0.0
        %1162 = vmatprep.subr.mxu0 0.0
        %1163 = vmatpush1.xpose.msra.mxu0 0.0
        %1164 = vmatprep.subr.mxu0 0.0
        %1165 = vmatpush1.xpose.msra.mxu0 0.0
        %1166 = vmatprep.subr.mxu0 0.0
        %1167 = vmatpush1.xpose.msra.mxu0 0.0
        %1168 = vmatprep.subr.mxu0 0.0
        %1169 = vmatpush1.xpose.msra.mxu0 0.0
        %1170 = vmatprep.subr.mxu0 0.0
        %1171 = vmatpush1.xpose.msra.mxu0 0.0
        %1172 = vmatprep.subr.mxu0 0.0
        %1173 = vmatpush1.xpose.msra.mxu0 0.0
        %1174 = vmatprep.subr.mxu0 0.0
        %1175 = vmatpush1.xpose.msra.mxu0 0.0
        %1176 = vmatprep.subr.mxu0 0.0
        %1177 = vmatpush1.xpose.msra.mxu0 0.0
        %1178 = vmatprep.subr.mxu0 0.0
        %1179 = vmatpush1.xpose.msra.mxu0 0.0
        %1180 = vmatprep.subr.mxu0 0.0
        %1181 = vmatpush1.xpose.msra.mxu0 0.0
        %1182 = vmatprep.subr.mxu0 0.0
        %1183 = vmatpush1.xpose.msra.mxu0 0.0
        %1184 = vmatprep.subr.mxu0 0.0
        %1185 = vmatpush1.xpose.msra.mxu0 0.0
        %1186 = vmatprep.subr.mxu0 0.0
        %1187 = vmatpush1.xpose.msra.mxu0 0.0
        %1188 = vmatprep.subr.mxu0 0.0
        %1189 = vmatpush1.xpose.msra.mxu0 0.0
        %1190 = vmatprep.mubr.f32.mxu0 0.0
        %1191 = vmatmul.mubr.f32.gmra.mrb[0].mxu0 %v1122
        %v1192 = vpop.f32.mrb[0].mxu0
        %v1193 = vadd.f32 0.0, %v1192
        %v1194 = vpop.f32.mrb[0].mxu0
        %1195 = vdwg.mxu0
        %v1196 = vsel %vm904, %v1193, -inf
        %1197 = vmax.xlane.f32.xlu0 %v1196
        %v1198 = vpop.xlane.xlu0 %1197
        %v1199 = vsub.f32 %v1193, %v1198
        %v1200 = vmul.f32 %v1199, 1.442695
        %v1201 = vpow.pop %v1200
        %v1202 = vsel %vm904, %v1201, 0.0
        %1203 = vadd.xlane.f32.xlu0 %v1202
        %v1204 = vpop.xlane.xlu0 %1203
        %v1205 = vrcp.pop %v1204
        %v1206 = vmul.f32 %v1201, %v1205
        %1207 = vrot.lane.b32.xlu0 %v947, 108
        %v1208 = vpop.permute.xlu0 %1207
        %v1211 = vsel %vm904, %v1206, 0
        %1213 = vmatprep.subr.mxu0 0.0
        %1214 = vmatpush1.msra.mxu0 %v1208
        %1215 = vmatprep.subr.mxu0 0.0
        %1216 = vmatpush1.msra.mxu0 0.0
        %1217 = vmatprep.subr.mxu0 0.0
        %1218 = vmatpush1.msra.mxu0 0.0
        %1219 = vmatprep.subr.mxu0 0.0
        %1220 = vmatpush1.msra.mxu0 0.0
        %1221 = vmatprep.subr.mxu0 0.0
        %1222 = vmatpush1.msra.mxu0 0.0
        %1223 = vmatprep.subr.mxu0 0.0
        %1224 = vmatpush1.msra.mxu0 0.0
        %1225 = vmatprep.subr.mxu0 0.0
        %1226 = vmatpush1.msra.mxu0 0.0
        %1227 = vmatprep.subr.mxu0 0.0
        %1228 = vmatpush1.msra.mxu0 0.0
        %1229 = vmatprep.subr.mxu0 0.0
        %1230 = vmatpush1.msra.mxu0 0.0
        %1231 = vmatprep.subr.mxu0 0.0
        %1232 = vmatpush1.msra.mxu0 0.0
        %1233 = vmatprep.subr.mxu0 0.0
        %1234 = vmatpush1.msra.mxu0 0.0
        %1235 = vmatprep.subr.mxu0 0.0
        %1236 = vmatpush1.msra.mxu0 0.0
        %1237 = vmatprep.subr.mxu0 0.0
        %1238 = vmatpush1.msra.mxu0 0.0
        %1239 = vmatprep.subr.mxu0 0.0
        %1240 = vmatpush1.msra.mxu0 0.0
        %1241 = vmatprep.subr.mxu0 0.0
        %1242 = vmatpush1.msra.mxu0 0.0
        %1243 = vmatprep.subr.mxu0 0.0
        %1244 = vmatpush1.msra.mxu0 0.0
        %1245 = vmatprep.subr.mxu0 0.0
        %1246 = vmatpush1.msra.mxu0 0.0
        %1247 = vmatprep.subr.mxu0 0.0
        %1248 = vmatpush1.msra.mxu0 0.0
        %1249 = vmatprep.subr.mxu0 0.0
        %1250 = vmatpush1.msra.mxu0 0.0
        %1251 = vmatprep.subr.mxu0 0.0
        %1252 = vmatpush1.msra.mxu0 0.0
        %1253 = vmatprep.subr.mxu0 0.0
        %1254 = vmatpush1.msra.mxu0 0.0
        %1255 = vmatprep.subr.mxu0 0.0
        %1256 = vmatpush1.msra.mxu0 0.0
        %1257 = vmatprep.subr.mxu0 0.0
        %1258 = vmatpush1.msra.mxu0 0.0
        %1259 = vmatprep.subr.mxu0 0.0
        %1260 = vmatpush1.msra.mxu0 0.0
        %1261 = vmatprep.subr.mxu0 0.0
        %1262 = vmatpush1.msra.mxu0 0.0
        %1263 = vmatprep.subr.mxu0 0.0
        %1264 = vmatpush1.msra.mxu0 0.0
        %1265 = vmatprep.subr.mxu0 0.0
        %1266 = vmatpush1.msra.mxu0 0.0
        %1267 = vmatprep.subr.mxu0 0.0
        %1268 = vmatpush1.msra.mxu0 0.0
        %1269 = vmatprep.subr.mxu0 0.0
        %1270 = vmatpush1.msra.mxu0 0.0
        %1271 = vmatprep.subr.mxu0 0.0
        %1272 = vmatpush1.msra.mxu0 0.0
        %1273 = vmatprep.subr.mxu0 0.0
        %1274 = vmatpush1.msra.mxu0 0.0
        %1275 = vmatprep.subr.mxu0 0.0
        %1276 = vmatpush1.msra.mxu0 0.0
        %1277 = vmatprep.mubr.f32.mxu0 0.0
        %1278 = vmatmul.mubr.f32.gmra.mrb[0].mxu0 %v1211
        %v1279 = vpop.f32.mrb[0].mxu0
        %v1280 = vadd.f32 0.0, %v1279
        %v1281 = vpop.f32.mrb[0].mxu0
        %1282 = vdwg.mxu0
        %v1284 = vrot.slane %v895, 4
        %v1286 = vsel %vm956, %v1280, 0
        %v1288 = vsel %vm908, %v1284, 0
        %1290 = vmatprep.subr.mxu0 0.0
        %1291 = vmatpush1.msra.mxu0 %v1288
        %1292 = vmatprep.subr.mxu0 0.0
        %1293 = vmatpush1.msra.mxu0 0.0
        %1294 = vmatprep.subr.mxu0 0.0
        %1295 = vmatpush1.msra.mxu0 0.0
        %1296 = vmatprep.subr.mxu0 0.0
        %1297 = vmatpush1.msra.mxu0 0.0
        %1298 = vmatprep.subr.mxu0 0.0
        %1299 = vmatpush1.msra.mxu0 0.0
        %1300 = vmatprep.subr.mxu0 0.0
        %1301 = vmatpush1.msra.mxu0 0.0
        %1302 = vmatprep.subr.mxu0 0.0
        %1303 = vmatpush1.msra.mxu0 0.0
        %1304 = vmatprep.subr.mxu0 0.0
        %1305 = vmatpush1.msra.mxu0 0.0
        %1306 = vmatprep.subr.mxu0 0.0
        %1307 = vmatpush1.msra.mxu0 0.0
        %1308 = vmatprep.subr.mxu0 0.0
        %1309 = vmatpush1.msra.mxu0 0.0
        %1310 = vmatprep.subr.mxu0 0.0
        %1311 = vmatpush1.msra.mxu0 0.0
        %1312 = vmatprep.subr.mxu0 0.0
        %1313 = vmatpush1.msra.mxu0 0.0
        %1314 = vmatprep.subr.mxu0 0.0
        %1315 = vmatpush1.msra.mxu0 0.0
        %1316 = vmatprep.subr.mxu0 0.0
        %1317 = vmatpush1.msra.mxu0 0.0
        %1318 = vmatprep.subr.mxu0 0.0
        %1319 = vmatpush1.msra.mxu0 0.0
        %1320 = vmatprep.subr.mxu0 0.0
        %1321 = vmatpush1.msra.mxu0 0.0
        %1322 = vmatprep.subr.mxu0 0.0
        %1323 = vmatpush1.msra.mxu0 0.0
        %1324 = vmatprep.subr.mxu0 0.0
        %1325 = vmatpush1.msra.mxu0 0.0
        %1326 = vmatprep.subr.mxu0 0.0
        %1327 = vmatpush1.msra.mxu0 0.0
        %1328 = vmatprep.subr.mxu0 0.0
        %1329 = vmatpush1.msra.mxu0 0.0
        %1330 = vmatprep.subr.mxu0 0.0
        %1331 = vmatpush1.msra.mxu0 0.0
        %1332 = vmatprep.subr.mxu0 0.0
        %1333 = vmatpush1.msra.mxu0 0.0
        %1334 = vmatprep.subr.mxu0 0.0
        %1335 = vmatpush1.msra.mxu0 0.0
        %1336 = vmatprep.subr.mxu0 0.0
        %1337 = vmatpush1.msra.mxu0 0.0
        %1338 = vmatprep.subr.mxu0 0.0
        %1339 = vmatpush1.msra.mxu0 0.0
        %1340 = vmatprep.subr.mxu0 0.0
        %1341 = vmatpush1.msra.mxu0 0.0
        %1342 = vmatprep.subr.mxu0 0.0
        %1343 = vmatpush1.msra.mxu0 0.0
        %1344 = vmatprep.subr.mxu0 0.0
        %1345 = vmatpush1.msra.mxu0 0.0
        %1346 = vmatprep.subr.mxu0 0.0
        %1347 = vmatpush1.msra.mxu0 0.0
        %1348 = vmatprep.subr.mxu0 0.0
        %1349 = vmatpush1.msra.mxu0 0.0
        %1350 = vmatprep.subr.mxu0 0.0
        %1351 = vmatpush1.msra.mxu0 0.0
        %1352 = vmatprep.subr.mxu0 0.0
        %1353 = vmatpush1.msra.mxu0 0.0
        %1354 = vmatprep.mubr.f32.mxu0 0.0
        %1355 = vmatmul.mubr.f32.gmra.mrb[0].mxu0 %v1286
        %v1356 = vpop.f32.mrb[0].mxu0
        %v1357 = vadd.f32 0.0, %v1356
        %v1358 = vpop.f32.mrb[0].mxu0
        %1359 = vdwg.mxu0
        %v1361 = vsel %vm956, %v1115, 0
        %v1363 = vsel %vm908, %v895, 0
        %1365 = vmatprep.subr.mxu0 0.0
        %1366 = vmatpush1.msra.mxu0 %v1363
        %1367 = vmatprep.subr.mxu0 0.0
        %1368 = vmatpush1.msra.mxu0 0.0
        %1369 = vmatprep.subr.mxu0 0.0
        %1370 = vmatpush1.msra.mxu0 0.0
        %1371 = vmatprep.subr.mxu0 0.0
        %1372 = vmatpush1.msra.mxu0 0.0
        %1373 = vmatprep.subr.mxu0 0.0
        %1374 = vmatpush1.msra.mxu0 0.0
        %1375 = vmatprep.subr.mxu0 0.0
        %1376 = vmatpush1.msra.mxu0 0.0
        %1377 = vmatprep.subr.mxu0 0.0
        %1378 = vmatpush1.msra.mxu0 0.0
        %1379 = vmatprep.subr.mxu0 0.0
        %1380 = vmatpush1.msra.mxu0 0.0
        %1381 = vmatprep.subr.mxu0 0.0
        %1382 = vmatpush1.msra.mxu0 0.0
        %1383 = vmatprep.subr.mxu0 0.0
        %1384 = vmatpush1.msra.mxu0 0.0
        %1385 = vmatprep.subr.mxu0 0.0
        %1386 = vmatpush1.msra.mxu0 0.0
        %1387 = vmatprep.subr.mxu0 0.0
        %1388 = vmatpush1.msra.mxu0 0.0
        %1389 = vmatprep.subr.mxu0 0.0
        %1390 = vmatpush1.msra.mxu0 0.0
        %1391 = vmatprep.subr.mxu0 0.0
        %1392 = vmatpush1.msra.mxu0 0.0
        %1393 = vmatprep.subr.mxu0 0.0
        %1394 = vmatpush1.msra.mxu0 0.0
        %1395 = vmatprep.subr.mxu0 0.0
        %1396 = vmatpush1.msra.mxu0 0.0
        %1397 = vmatprep.subr.mxu0 0.0
        %1398 = vmatpush1.msra.mxu0 0.0
        %1399 = vmatprep.subr.mxu0 0.0
        %1400 = vmatpush1.msra.mxu0 0.0
        %1401 = vmatprep.subr.mxu0 0.0
        %1402 = vmatpush1.msra.mxu0 0.0
        %1403 = vmatprep.subr.mxu0 0.0
        %1404 = vmatpush1.msra.mxu0 0.0
        %1405 = vmatprep.subr.mxu0 0.0
        %1406 = vmatpush1.msra.mxu0 0.0
        %1407 = vmatprep.subr.mxu0 0.0
        %1408 = vmatpush1.msra.mxu0 0.0
        %1409 = vmatprep.subr.mxu0 0.0
        %1410 = vmatpush1.msra.mxu0 0.0
        %1411 = vmatprep.subr.mxu0 0.0
        %1412 = vmatpush1.msra.mxu0 0.0
        %1413 = vmatprep.subr.mxu0 0.0
        %1414 = vmatpush1.msra.mxu0 0.0
        %1415 = vmatprep.subr.mxu0 0.0
        %1416 = vmatpush1.msra.mxu0 0.0
        %1417 = vmatprep.subr.mxu0 0.0
        %1418 = vmatpush1.msra.mxu0 0.0
        %1419 = vmatprep.subr.mxu0 0.0
        %1420 = vmatpush1.msra.mxu0 0.0
        %1421 = vmatprep.subr.mxu0 0.0
        %1422 = vmatpush1.msra.mxu0 0.0
        %1423 = vmatprep.subr.mxu0 0.0
        %1424 = vmatpush1.msra.mxu0 0.0
        %1425 = vmatprep.subr.mxu0 0.0
        %1426 = vmatpush1.msra.mxu0 0.0
        %1427 = vmatprep.subr.mxu0 0.0
        %1428 = vmatpush1.msra.mxu0 0.0
        %1429 = vmatprep.mubr.f32.mxu0 0.0
        %1430 = vmatmul.mubr.f32.gmra.mrb[0].mxu0 %v1361
        %v1431 = vpop.f32.mrb[0].mxu0
        %v1432 = vadd.f32 %v1357, %v1431
        %v1433 = vpop.f32.mrb[0].mxu0
        %1434 = vdwg.mxu0
        %1436 = vrot.lane.b32.xlu0 %v950, 120
        %v1437 = vpop.permute.xlu0 %1436
        %v1438 = vsel %vm956, %v950, 0
        %v1440 = vsel %vm956, %v1437, 0
        %1442 = vmatprep.subr.mxu0 0.0
        %1443 = vmatpush1.xpose.msra.mxu0 %v1440
        %1444 = vmatprep.subr.mxu0 0.0
        %1445 = vmatpush1.xpose.msra.mxu0 0.0
        %1446 = vmatprep.subr.mxu0 0.0
        %1447 = vmatpush1.xpose.msra.mxu0 0.0
        %1448 = vmatprep.subr.mxu0 0.0
        %1449 = vmatpush1.xpose.msra.mxu0 0.0
        %1450 = vmatprep.subr.mxu0 0.0
        %1451 = vmatpush1.xpose.msra.mxu0 0.0
        %1452 = vmatprep.subr.mxu0 0.0
        %1453 = vmatpush1.xpose.msra.mxu0 0.0
        %1454 = vmatprep.subr.mxu0 0.0
        %1455 = vmatpush1.xpose.msra.mxu0 0.0
        %1456 = vmatprep.subr.mxu0 0.0
        %1457 = vmatpush1.xpose.msra.mxu0 0.0
        %1458 = vmatprep.subr.mxu0 0.0
        %1459 = vmatpush1.xpose.msra.mxu0 0.0
        %1460 = vmatprep.subr.mxu0 0.0
        %1461 = vmatpush1.xpose.msra.mxu0 0.0
        %1462 = vmatprep.subr.mxu0 0.0
        %1463 = vmatpush1.xpose.msra.mxu0 0.0
        %1464 = vmatprep.subr.mxu0 0.0
        %1465 = vmatpush1.xpose.msra.mxu0 0.0
        %1466 = vmatprep.subr.mxu0 0.0
        %1467 = vmatpush1.xpose.msra.mxu0 0.0
        %1468 = vmatprep.subr.mxu0 0.0
        %1469 = vmatpush1.xpose.msra.mxu0 0.0
        %1470 = vmatprep.subr.mxu0 0.0
        %1471 = vmatpush1.xpose.msra.mxu0 0.0
        %1472 = vmatprep.subr.mxu0 0.0
        %1473 = vmatpush1.xpose.msra.mxu0 0.0
        %1474 = vmatprep.subr.mxu0 0.0
        %1475 = vmatpush1.xpose.msra.mxu0 0.0
        %1476 = vmatprep.subr.mxu0 0.0
        %1477 = vmatpush1.xpose.msra.mxu0 0.0
        %1478 = vmatprep.subr.mxu0 0.0
        %1479 = vmatpush1.xpose.msra.mxu0 0.0
        %1480 = vmatprep.subr.mxu0 0.0
        %1481 = vmatpush1.xpose.msra.mxu0 0.0
        %1482 = vmatprep.subr.mxu0 0.0
        %1483 = vmatpush1.xpose.msra.mxu0 0.0
        %1484 = vmatprep.subr.mxu0 0.0
        %1485 = vmatpush1.xpose.msra.mxu0 0.0
        %1486 = vmatprep.subr.mxu0 0.0
        %1487 = vmatpush1.xpose.msra.mxu0 0.0
        %1488 = vmatprep.subr.mxu0 0.0
        %1489 = vmatpush1.xpose.msra.mxu0 0.0
        %1490 = vmatprep.subr.mxu0 0.0
        %1491 = vmatpush1.xpose.msra.mxu0 0.0
        %1492 = vmatprep.subr.mxu0 0.0
        %1493 = vmatpush1.xpose.msra.mxu0 0.0
        %1494 = vmatprep.subr.mxu0 0.0
        %1495 = vmatpush1.xpose.msra.mxu0 0.0
        %1496 = vmatprep.subr.mxu0 0.0
        %1497 = vmatpush1.xpose.msra.mxu0 0.0
        %1498 = vmatprep.subr.mxu0 0.0
        %1499 = vmatpush1.xpose.msra.mxu0 0.0
        %1500 = vmatprep.subr.mxu0 0.0
        %1501 = vmatpush1.xpose.msra.mxu0 0.0
        %1502 = vmatprep.subr.mxu0 0.0
        %1503 = vmatpush1.xpose.msra.mxu0 0.0
        %1504 = vmatprep.subr.mxu0 0.0
        %1505 = vmatpush1.xpose.msra.mxu0 0.0
        %1506 = vmatprep.mubr.f32.mxu0 0.0
        %1507 = vmatmul.mubr.f32.gmra.mrb[0].mxu0 %v1438
        %v1508 = vpop.f32.mrb[0].mxu0
        %v1509 = vadd.f32 0.0, %v1508
        %v1510 = vpop.f32.mrb[0].mxu0
        %1511 = vdwg.mxu0
        %v1512 = vsel %vm904, %v1509, -inf
        %1513 = vmax.xlane.f32.xlu0 %v1512
        %v1514 = vpop.xlane.xlu0 %1513
        %v1515 = vsub.f32 %v1509, %v1514
        %v1516 = vmul.f32 %v1515, 1.442695
        %v1517 = vpow.pop %v1516
        %v1518 = vsel %vm904, %v1517, 0.0
        %1519 = vadd.xlane.f32.xlu0 %v1518
        %v1520 = vpop.xlane.xlu0 %1519
        %v1521 = vrcp.pop %v1520
        %v1522 = vmul.f32 %v1517, %v1521
        %1523 = vrot.lane.b32.xlu0 %v950, 112
        %v1524 = vpop.permute.xlu0 %1523
        %v1527 = vsel %vm904, %v1522, 0
        %1529 = vmatprep.subr.mxu0 0.0
        %1530 = vmatpush1.msra.mxu0 %v1524
        %1531 = vmatprep.subr.mxu0 0.0
        %1532 = vmatpush1.msra.mxu0 0.0
        %1533 = vmatprep.subr.mxu0 0.0
        %1534 = vmatpush1.msra.mxu0 0.0
        %1535 = vmatprep.subr.mxu0 0.0
        %1536 = vmatpush1.msra.mxu0 0.0
        %1537 = vmatprep.subr.mxu0 0.0
        %1538 = vmatpush1.msra.mxu0 0.0
        %1539 = vmatprep.subr.mxu0 0.0
        %1540 = vmatpush1.msra.mxu0 0.0
        %1541 = vmatprep.subr.mxu0 0.0
        %1542 = vmatpush1.msra.mxu0 0.0
        %1543 = vmatprep.subr.mxu0 0.0
        %1544 = vmatpush1.msra.mxu0 0.0
        %1545 = vmatprep.subr.mxu0 0.0
        %1546 = vmatpush1.msra.mxu0 0.0
        %1547 = vmatprep.subr.mxu0 0.0
        %1548 = vmatpush1.msra.mxu0 0.0
        %1549 = vmatprep.subr.mxu0 0.0
        %1550 = vmatpush1.msra.mxu0 0.0
        %1551 = vmatprep.subr.mxu0 0.0
        %1552 = vmatpush1.msra.mxu0 0.0
        %1553 = vmatprep.subr.mxu0 0.0
        %1554 = vmatpush1.msra.mxu0 0.0
        %1555 = vmatprep.subr.mxu0 0.0
        %1556 = vmatpush1.msra.mxu0 0.0
        %1557 = vmatprep.subr.mxu0 0.0
        %1558 = vmatpush1.msra.mxu0 0.0
        %1559 = vmatprep.subr.mxu0 0.0
        %1560 = vmatpush1.msra.mxu0 0.0
        %1561 = vmatprep.subr.mxu0 0.0
        %1562 = vmatpush1.msra.mxu0 0.0
        %1563 = vmatprep.subr.mxu0 0.0
        %1564 = vmatpush1.msra.mxu0 0.0
        %1565 = vmatprep.subr.mxu0 0.0
        %1566 = vmatpush1.msra.mxu0 0.0
        %1567 = vmatprep.subr.mxu0 0.0
        %1568 = vmatpush1.msra.mxu0 0.0
        %1569 = vmatprep.subr.mxu0 0.0
        %1570 = vmatpush1.msra.mxu0 0.0
        %1571 = vmatprep.subr.mxu0 0.0
        %1572 = vmatpush1.msra.mxu0 0.0
        %1573 = vmatprep.subr.mxu0 0.0
        %1574 = vmatpush1.msra.mxu0 0.0
        %1575 = vmatprep.subr.mxu0 0.0
        %1576 = vmatpush1.msra.mxu0 0.0
        %1577 = vmatprep.subr.mxu0 0.0
        %1578 = vmatpush1.msra.mxu0 0.0
        %1579 = vmatprep.subr.mxu0 0.0
        %1580 = vmatpush1.msra.mxu0 0.0
        %1581 = vmatprep.subr.mxu0 0.0
        %1582 = vmatpush1.msra.mxu0 0.0
        %1583 = vmatprep.subr.mxu0 0.0
        %1584 = vmatpush1.msra.mxu0 0.0
        %1585 = vmatprep.subr.mxu0 0.0
        %1586 = vmatpush1.msra.mxu0 0.0
        %1587 = vmatprep.subr.mxu0 0.0
        %1588 = vmatpush1.msra.mxu0 0.0
        %1589 = vmatprep.subr.mxu0 0.0
        %1590 = vmatpush1.msra.mxu0 0.0
        %1591 = vmatprep.subr.mxu0 0.0
        %1592 = vmatpush1.msra.mxu0 0.0
        %1593 = vmatprep.mubr.f32.mxu0 0.0
        %1594 = vmatmul.mubr.f32.gmra.mrb[0].mxu0 %v1527
        %v1595 = vpop.f32.mrb[0].mxu0
        %v1596 = vadd.f32 0.0, %v1595
        %v1597 = vpop.f32.mrb[0].mxu0
        %1598 = vdwg.mxu0
        %1599 = vrot.lane.b32.xlu0 %v950, 124
        %v1600 = vpop.permute.xlu0 %1599
        %1601 = vrot.lane.b32.xlu0 %v950, 116
        %v1602 = vpop.permute.xlu0 %1601
        %v1603 = vsel %vm956, %v1600, 0
        %v1605 = vsel %vm956, %v1602, 0
        %1607 = vmatprep.subr.mxu0 0.0
        %1608 = vmatpush1.xpose.msra.mxu0 %v1605
        %1609 = vmatprep.subr.mxu0 0.0
        %1610 = vmatpush1.xpose.msra.mxu0 0.0
        %1611 = vmatprep.subr.mxu0 0.0
        %1612 = vmatpush1.xpose.msra.mxu0 0.0
        %1613 = vmatprep.subr.mxu0 0.0
        %1614 = vmatpush1.xpose.msra.mxu0 0.0
        %1615 = vmatprep.subr.mxu0 0.0
        %1616 = vmatpush1.xpose.msra.mxu0 0.0
        %1617 = vmatprep.subr.mxu0 0.0
        %1618 = vmatpush1.xpose.msra.mxu0 0.0
        %1619 = vmatprep.subr.mxu0 0.0
        %1620 = vmatpush1.xpose.msra.mxu0 0.0
        %1621 = vmatprep.subr.mxu0 0.0
        %1622 = vmatpush1.xpose.msra.mxu0 0.0
        %1623 = vmatprep.subr.mxu0 0.0
        %1624 = vmatpush1.xpose.msra.mxu0 0.0
        %1625 = vmatprep.subr.mxu0 0.0
        %1626 = vmatpush1.xpose.msra.mxu0 0.0
        %1627 = vmatprep.subr.mxu0 0.0
        %1628 = vmatpush1.xpose.msra.mxu0 0.0
        %1629 = vmatprep.subr.mxu0 0.0
        %1630 = vmatpush1.xpose.msra.mxu0 0.0
        %1631 = vmatprep.subr.mxu0 0.0
        %1632 = vmatpush1.xpose.msra.mxu0 0.0
        %1633 = vmatprep.subr.mxu0 0.0
        %1634 = vmatpush1.xpose.msra.mxu0 0.0
        %1635 = vmatprep.subr.mxu0 0.0
        %1636 = vmatpush1.xpose.msra.mxu0 0.0
        %1637 = vmatprep.subr.mxu0 0.0
        %1638 = vmatpush1.xpose.msra.mxu0 0.0
        %1639 = vmatprep.subr.mxu0 0.0
        %1640 = vmatpush1.xpose.msra.mxu0 0.0
        %1641 = vmatprep.subr.mxu0 0.0
        %1642 = vmatpush1.xpose.msra.mxu0 0.0
        %1643 = vmatprep.subr.mxu0 0.0
        %1644 = vmatpush1.xpose.msra.mxu0 0.0
        %1645 = vmatprep.subr.mxu0 0.0
        %1646 = vmatpush1.xpose.msra.mxu0 0.0
        %1647 = vmatprep.subr.mxu0 0.0
        %1648 = vmatpush1.xpose.msra.mxu0 0.0
        %1649 = vmatprep.subr.mxu0 0.0
        %1650 = vmatpush1.xpose.msra.mxu0 0.0
        %1651 = vmatprep.subr.mxu0 0.0
        %1652 = vmatpush1.xpose.msra.mxu0 0.0
        %1653 = vmatprep.subr.mxu0 0.0
        %1654 = vmatpush1.xpose.msra.mxu0 0.0
        %1655 = vmatprep.subr.mxu0 0.0
        %1656 = vmatpush1.xpose.msra.mxu0 0.0
        %1657 = vmatprep.subr.mxu0 0.0
        %1658 = vmatpush1.xpose.msra.mxu0 0.0
        %1659 = vmatprep.subr.mxu0 0.0
        %1660 = vmatpush1.xpose.msra.mxu0 0.0
        %1661 = vmatprep.subr.mxu0 0.0
        %1662 = vmatpush1.xpose.msra.mxu0 0.0
        %1663 = vmatprep.subr.mxu0 0.0
        %1664 = vmatpush1.xpose.msra.mxu0 0.0
        %1665 = vmatprep.subr.mxu0 0.0
        %1666 = vmatpush1.xpose.msra.mxu0 0.0
        %1667 = vmatprep.subr.mxu0 0.0
        %1668 = vmatpush1.xpose.msra.mxu0 0.0
        %1669 = vmatprep.subr.mxu0 0.0
        %1670 = vmatpush1.xpose.msra.mxu0 0.0
        %1671 = vmatprep.mubr.f32.mxu0 0.0
        %1672 = vmatmul.mubr.f32.gmra.mrb[0].mxu0 %v1603
        %v1673 = vpop.f32.mrb[0].mxu0
        %v1674 = vadd.f32 0.0, %v1673
        %v1675 = vpop.f32.mrb[0].mxu0
        %1676 = vdwg.mxu0
        %v1677 = vsel %vm904, %v1674, -inf
        %1678 = vmax.xlane.f32.xlu0 %v1677
        %v1679 = vpop.xlane.xlu0 %1678
        %v1680 = vsub.f32 %v1674, %v1679
        %v1681 = vmul.f32 %v1680, 1.442695
        %v1682 = vpow.pop %v1681
        %v1683 = vsel %vm904, %v1682, 0.0
        %1684 = vadd.xlane.f32.xlu0 %v1683
        %v1685 = vpop.xlane.xlu0 %1684
        %v1686 = vrcp.pop %v1685
        %v1687 = vmul.f32 %v1682, %v1686
        %1688 = vrot.lane.b32.xlu0 %v950, 108
        %v1689 = vpop.permute.xlu0 %1688
        %v1692 = vsel %vm904, %v1687, 0
        %1694 = vmatprep.subr.mxu0 0.0
        %1695 = vmatpush1.msra.mxu0 %v1689
        %1696 = vmatprep.subr.mxu0 0.0
        %1697 = vmatpush1.msra.mxu0 0.0
        %1698 = vmatprep.subr.mxu0 0.0
        %1699 = vmatpush1.msra.mxu0 0.0
        %1700 = vmatprep.subr.mxu0 0.0
        %1701 = vmatpush1.msra.mxu0 0.0
        %1702 = vmatprep.subr.mxu0 0.0
        %1703 = vmatpush1.msra.mxu0 0.0
        %1704 = vmatprep.subr.mxu0 0.0
        %1705 = vmatpush1.msra.mxu0 0.0
        %1706 = vmatprep.subr.mxu0 0.0
        %1707 = vmatpush1.msra.mxu0 0.0
        %1708 = vmatprep.subr.mxu0 0.0
        %1709 = vmatpush1.msra.mxu0 0.0
        %1710 = vmatprep.subr.mxu0 0.0
        %1711 = vmatpush1.msra.mxu0 0.0
        %1712 = vmatprep.subr.mxu0 0.0
        %1713 = vmatpush1.msra.mxu0 0.0
        %1714 = vmatprep.subr.mxu0 0.0
        %1715 = vmatpush1.msra.mxu0 0.0
        %1716 = vmatprep.subr.mxu0 0.0
        %1717 = vmatpush1.msra.mxu0 0.0
        %1718 = vmatprep.subr.mxu0 0.0
        %1719 = vmatpush1.msra.mxu0 0.0
        %1720 = vmatprep.subr.mxu0 0.0
        %1721 = vmatpush1.msra.mxu0 0.0
        %1722 = vmatprep.subr.mxu0 0.0
        %1723 = vmatpush1.msra.mxu0 0.0
        %1724 = vmatprep.subr.mxu0 0.0
        %1725 = vmatpush1.msra.mxu0 0.0
        %1726 = vmatprep.subr.mxu0 0.0
        %1727 = vmatpush1.msra.mxu0 0.0
        %1728 = vmatprep.subr.mxu0 0.0
        %1729 = vmatpush1.msra.mxu0 0.0
        %1730 = vmatprep.subr.mxu0 0.0
        %1731 = vmatpush1.msra.mxu0 0.0
        %1732 = vmatprep.subr.mxu0 0.0
        %1733 = vmatpush1.msra.mxu0 0.0
        %1734 = vmatprep.subr.mxu0 0.0
        %1735 = vmatpush1.msra.mxu0 0.0
        %1736 = vmatprep.subr.mxu0 0.0
        %1737 = vmatpush1.msra.mxu0 0.0
        %1738 = vmatprep.subr.mxu0 0.0
        %1739 = vmatpush1.msra.mxu0 0.0
        %1740 = vmatprep.subr.mxu0 0.0
        %1741 = vmatpush1.msra.mxu0 0.0
        %1742 = vmatprep.subr.mxu0 0.0
        %1743 = vmatpush1.msra.mxu0 0.0
        %1744 = vmatprep.subr.mxu0 0.0
        %1745 = vmatpush1.msra.mxu0 0.0
        %1746 = vmatprep.subr.mxu0 0.0
        %1747 = vmatpush1.msra.mxu0 0.0
        %1748 = vmatprep.subr.mxu0 0.0
        %1749 = vmatpush1.msra.mxu0 0.0
        %1750 = vmatprep.subr.mxu0 0.0
        %1751 = vmatpush1.msra.mxu0 0.0
        %1752 = vmatprep.subr.mxu0 0.0
        %1753 = vmatpush1.msra.mxu0 0.0
        %1754 = vmatprep.subr.mxu0 0.0
        %1755 = vmatpush1.msra.mxu0 0.0
        %1756 = vmatprep.subr.mxu0 0.0
        %1757 = vmatpush1.msra.mxu0 0.0
        %1758 = vmatprep.mubr.f32.mxu0 0.0
        %1759 = vmatmul.mubr.f32.gmra.mrb[0].mxu0 %v1692
        %v1760 = vpop.f32.mrb[0].mxu0
        %v1761 = vadd.f32 0.0, %v1760
        %v1762 = vpop.f32.mrb[0].mxu0
        %1763 = vdwg.mxu0
        %v1765 = vsel %vm956, %v1761, 0
        %1767 = vmatprep.subr.mxu0 0.0
        %1768 = vmatpush1.msra.mxu0 %v1288
        %1769 = vmatprep.subr.mxu0 0.0
        %1770 = vmatpush1.msra.mxu0 0.0
        %1771 = vmatprep.subr.mxu0 0.0
        %1772 = vmatpush1.msra.mxu0 0.0
        %1773 = vmatprep.subr.mxu0 0.0
        %1774 = vmatpush1.msra.mxu0 0.0
        %1775 = vmatprep.subr.mxu0 0.0
        %1776 = vmatpush1.msra.mxu0 0.0
        %1777 = vmatprep.subr.mxu0 0.0
        %1778 = vmatpush1.msra.mxu0 0.0
        %1779 = vmatprep.subr.mxu0 0.0
        %1780 = vmatpush1.msra.mxu0 0.0
        %1781 = vmatprep.subr.mxu0 0.0
        %1782 = vmatpush1.msra.mxu0 0.0
        %1783 = vmatprep.subr.mxu0 0.0
        %1784 = vmatpush1.msra.mxu0 0.0
        %1785 = vmatprep.subr.mxu0 0.0
        %1786 = vmatpush1.msra.mxu0 0.0
        %1787 = vmatprep.subr.mxu0 0.0
        %1788 = vmatpush1.msra.mxu0 0.0
        %1789 = vmatprep.subr.mxu0 0.0
        %1790 = vmatpush1.msra.mxu0 0.0
        %1791 = vmatprep.subr.mxu0 0.0
        %1792 = vmatpush1.msra.mxu0 0.0
        %1793 = vmatprep.subr.mxu0 0.0
        %1794 = vmatpush1.msra.mxu0 0.0
        %1795 = vmatprep.subr.mxu0 0.0
        %1796 = vmatpush1.msra.mxu0 0.0
        %1797 = vmatprep.subr.mxu0 0.0
        %1798 = vmatpush1.msra.mxu0 0.0
        %1799 = vmatprep.subr.mxu0 0.0
        %1800 = vmatpush1.msra.mxu0 0.0
        %1801 = vmatprep.subr.mxu0 0.0
        %1802 = vmatpush1.msra.mxu0 0.0
        %1803 = vmatprep.subr.mxu0 0.0
        %1804 = vmatpush1.msra.mxu0 0.0
        %1805 = vmatprep.subr.mxu0 0.0
        %1806 = vmatpush1.msra.mxu0 0.0
        %1807 = vmatprep.subr.mxu0 0.0
        %1808 = vmatpush1.msra.mxu0 0.0
        %1809 = vmatprep.subr.mxu0 0.0
        %1810 = vmatpush1.msra.mxu0 0.0
        %1811 = vmatprep.subr.mxu0 0.0
        %1812 = vmatpush1.msra.mxu0 0.0
        %1813 = vmatprep.subr.mxu0 0.0
        %1814 = vmatpush1.msra.mxu0 0.0
        %1815 = vmatprep.subr.mxu0 0.0
        %1816 = vmatpush1.msra.mxu0 0.0
        %1817 = vmatprep.subr.mxu0 0.0
        %1818 = vmatpush1.msra.mxu0 0.0
        %1819 = vmatprep.subr.mxu0 0.0
        %1820 = vmatpush1.msra.mxu0 0.0
        %1821 = vmatprep.subr.mxu0 0.0
        %1822 = vmatpush1.msra.mxu0 0.0
        %1823 = vmatprep.subr.mxu0 0.0
        %1824 = vmatpush1.msra.mxu0 0.0
        %1825 = vmatprep.subr.mxu0 0.0
        %1826 = vmatpush1.msra.mxu0 0.0
        %1827 = vmatprep.subr.mxu0 0.0
        %1828 = vmatpush1.msra.mxu0 0.0
        %1829 = vmatprep.subr.mxu0 0.0
        %1830 = vmatpush1.msra.mxu0 0.0
        %1831 = vmatprep.mubr.f32.mxu0 0.0
        %1832 = vmatmul.mubr.f32.gmra.mrb[0].mxu0 %v1765
        %v1833 = vpop.f32.mrb[0].mxu0
        %v1834 = vadd.f32 0.0, %v1833
        %v1835 = vpop.f32.mrb[0].mxu0
        %1836 = vdwg.mxu0
        %v1838 = vsel %vm956, %v1596, 0
        %1840 = vmatprep.subr.mxu0 0.0
        %1841 = vmatpush1.msra.mxu0 %v1363
        %1842 = vmatprep.subr.mxu0 0.0
        %1843 = vmatpush1.msra.mxu0 0.0
        %1844 = vmatprep.subr.mxu0 0.0
        %1845 = vmatpush1.msra.mxu0 0.0
        %1846 = vmatprep.subr.mxu0 0.0
        %1847 = vmatpush1.msra.mxu0 0.0
        %1848 = vmatprep.subr.mxu0 0.0
        %1849 = vmatpush1.msra.mxu0 0.0
        %1850 = vmatprep.subr.mxu0 0.0
        %1851 = vmatpush1.msra.mxu0 0.0
        %1852 = vmatprep.subr.mxu0 0.0
        %1853 = vmatpush1.msra.mxu0 0.0
        %1854 = vmatprep.subr.mxu0 0.0
        %1855 = vmatpush1.msra.mxu0 0.0
        %1856 = vmatprep.subr.mxu0 0.0
        %1857 = vmatpush1.msra.mxu0 0.0
        %1858 = vmatprep.subr.mxu0 0.0
        %1859 = vmatpush1.msra.mxu0 0.0
        %1860 = vmatprep.subr.mxu0 0.0
        %1861 = vmatpush1.msra.mxu0 0.0
        %1862 = vmatprep.subr.mxu0 0.0
        %1863 = vmatpush1.msra.mxu0 0.0
        %1864 = vmatprep.subr.mxu0 0.0
        %1865 = vmatpush1.msra.mxu0 0.0
        %1866 = vmatprep.subr.mxu0 0.0
        %1867 = vmatpush1.msra.mxu0 0.0
        %1868 = vmatprep.subr.mxu0 0.0
        %1869 = vmatpush1.msra.mxu0 0.0
        %1870 = vmatprep.subr.mxu0 0.0
        %1871 = vmatpush1.msra.mxu0 0.0
        %1872 = vmatprep.subr.mxu0 0.0
        %1873 = vmatpush1.msra.mxu0 0.0
        %1874 = vmatprep.subr.mxu0 0.0
        %1875 = vmatpush1.msra.mxu0 0.0
        %1876 = vmatprep.subr.mxu0 0.0
        %1877 = vmatpush1.msra.mxu0 0.0
        %1878 = vmatprep.subr.mxu0 0.0
        %1879 = vmatpush1.msra.mxu0 0.0
        %1880 = vmatprep.subr.mxu0 0.0
        %1881 = vmatpush1.msra.mxu0 0.0
        %1882 = vmatprep.subr.mxu0 0.0
        %1883 = vmatpush1.msra.mxu0 0.0
        %1884 = vmatprep.subr.mxu0 0.0
        %1885 = vmatpush1.msra.mxu0 0.0
        %1886 = vmatprep.subr.mxu0 0.0
        %1887 = vmatpush1.msra.mxu0 0.0
        %1888 = vmatprep.subr.mxu0 0.0
        %1889 = vmatpush1.msra.mxu0 0.0
        %1890 = vmatprep.subr.mxu0 0.0
        %1891 = vmatpush1.msra.mxu0 0.0
        %1892 = vmatprep.subr.mxu0 0.0
        %1893 = vmatpush1.msra.mxu0 0.0
        %1894 = vmatprep.subr.mxu0 0.0
        %1895 = vmatpush1.msra.mxu0 0.0
        %1896 = vmatprep.subr.mxu0 0.0
        %1897 = vmatpush1.msra.mxu0 0.0
        %1898 = vmatprep.subr.mxu0 0.0
        %1899 = vmatpush1.msra.mxu0 0.0
        %1900 = vmatprep.subr.mxu0 0.0
        %1901 = vmatpush1.msra.mxu0 0.0
        %1902 = vmatprep.subr.mxu0 0.0
        %1903 = vmatpush1.msra.mxu0 0.0
        %1904 = vmatprep.mubr.f32.mxu0 0.0
        %1905 = vmatmul.mubr.f32.gmra.mrb[0].mxu0 %v1838
        %v1906 = vpop.f32.mrb[0].mxu0
        %v1907 = vadd.f32 %v1834, %v1906
        %v1908 = vpop.f32.mrb[0].mxu0
        %1909 = vdwg.mxu0
        %v1911 = vlaneseq
        %v1912 = vshrl.u32 %v1911, 7
        %v1913 = vsub.s32 0, %v1912
        %v1914 = vrot.slane %v896, %v1913
        %v1916 = vadd.f32 %v1432, %v1914
        %v1917 = vadd.f32 %v1907, %v1914
        %v1918 = vadd.f32 %v890, %v1916
        %v1919 = vadd.f32 %v891, %v1917
        %v1920 = vld [vmem:[%s723] sm:$0x1]
        %v1921 = vld [vmem:[%s731] sm:$0x1]
        %v1922 = vsel %vm904, %v1918, 0.0
        %1923 = vadd.xlane.f32.xlu0 %v1922
        %v1924 = vpop.xlane.xlu0 %1923
        %v1925 = vsel %vm904, %v1919, 0.0
        %1926 = vadd.xlane.f32.xlu0 %v1925
        %v1927 = vpop.xlane.xlu0 %1926
        %v1928 = vrcp.pop 8.0
        %v1929 = vmul.f32 %v1924, %v1928
        %v1930 = vmul.f32 %v1927, %v1928
        %v1931 = vsub.f32 %v1918, %v1929
        %v1932 = vsub.f32 %v1919, %v1930
        %v1933 = vmul.f32 %v1931, %v1931
        %v1934 = vmul.f32 %v1932, %v1932
        %v1935 = vsel %vm904, %v1933, 0.0
        %1936 = vadd.xlane.f32.xlu0 %v1935
        %v1937 = vpop.xlane.xlu0 %1936
        %v1938 = vsel %vm904, %v1934, 0.0
        %1939 = vadd.xlane.f32.xlu0 %v1938
        %v1940 = vpop.xlane.xlu0 %1939
        %v1941 = vmul.f32 %v1937, %v1928
        %v1942 = vmul.f32 %v1940, %v1928
        %v1943 = vadd.f32 %v1941, 1e-05
        %v1944 = vadd.f32 %v1942, 1e-05
        %v1945 = vrsqrt.pop %v1943
        %v1946 = vrsqrt.pop %v1944
        %v1947 = vmul.f32 %v1931, %v1945
        %v1948 = vmul.f32 %v1932, %v1946
        %v1950 = vlaneseq
        %v1951 = vshrl.u32 %v1950, 7
        %v1952 = vsub.s32 0, %v1951
        %v1953 = vrot.slane %v1920, %v1952
        %v1955 = vmul.f32 %v1947, %v1953
        %v1956 = vmul.f32 %v1948, %v1953
        %v1958 = vlaneseq
        %v1959 = vshrl.u32 %v1958, 7
        %v1960 = vsub.s32 0, %v1959
        %v1961 = vrot.slane %v1921, %v1960
        %v1963 = vadd.f32 %v1955, %v1961
        %v1964 = vadd.f32 %v1956, %v1961
        %v1965 = vpack.c.bf16 %v1964, %v1963
        %v1966 = vld [vmem:[%s756] sm:$0xff]
        %v1967 = vld [vmem:[%s756 + $0x8] sm:$0xff]
        %v1968 = vld [vmem:[%s756 + $0x10] sm:$0xff]
        %v1969 = vld [vmem:[%s756 + $0x18] sm:$0xff]
        %v1970 = vld [vmem:[%s756 + $0x20] sm:$0xff]
        %v1971 = vld [vmem:[%s756 + $0x28] sm:$0xff]
        %v1972 = vld [vmem:[%s756 + $0x30] sm:$0xff]
        %v1973 = vld [vmem:[%s756 + $0x38] sm:$0xff]
        %v1974 = vld [vmem:[%s879] sm:$0xff]
        %v1975 = vld [vmem:[%s879 + $0x8] sm:$0xff]
        %v1978 = vlaneseq
        %v1979 = vshrl.u32 %v1978, 7
        %v1980 = vsub.s32 0, %v1979
        %v1981 = vrot.slane %v1974, %v1980
        %v1982 = vlaneseq
        %v1983 = vshrl.u32 %v1982, 7
        %v1984 = vsub.s32 1, %v1983
        %v1985 = vrot.slane %v1974, %v1984
        %v1986 = vlaneseq
        %v1987 = vshrl.u32 %v1986, 7
        %v1988 = vsub.s32 2, %v1987
        %v1989 = vrot.slane %v1974, %v1988
        %v1990 = vlaneseq
        %v1991 = vshrl.u32 %v1990, 7
        %v1992 = vsub.s32 3, %v1991
        %v1993 = vrot.slane %v1974, %v1992
        %v1994 = vlaneseq
        %v1995 = vshrl.u32 %v1994, 7
        %v1996 = vsub.s32 4, %v1995
        %v1997 = vrot.slane %v1974, %v1996
        %v1998 = vlaneseq
        %v1999 = vshrl.u32 %v1998, 7
        %v2000 = vsub.s32 5, %v1999
        %v2001 = vrot.slane %v1974, %v2000
        %v2002 = vlaneseq
        %v2003 = vshrl.u32 %v2002, 7
        %v2004 = vsub.s32 6, %v2003
        %v2005 = vrot.slane %v1974, %v2004
        %v2006 = vlaneseq
        %v2007 = vshrl.u32 %v2006, 7
        %v2008 = vsub.s32 7, %v2007
        %v2009 = vrot.slane %v1974, %v2008
        %v2010 = vlaneseq
        %v2011 = vshrl.u32 %v2010, 7
        %v2012 = vsub.s32 0, %v2011
        %v2013 = vrot.slane %v1975, %v2012
        %v2014 = vlaneseq
        %v2015 = vshrl.u32 %v2014, 7
        %v2016 = vsub.s32 1, %v2015
        %v2017 = vrot.slane %v1975, %v2016
        %v2018 = vlaneseq
        %v2019 = vshrl.u32 %v2018, 7
        %v2020 = vsub.s32 2, %v2019
        %v2021 = vrot.slane %v1975, %v2020
        %v2022 = vlaneseq
        %v2023 = vshrl.u32 %v2022, 7
        %v2024 = vsub.s32 3, %v2023
        %v2025 = vrot.slane %v1975, %v2024
        %v2026 = vlaneseq
        %v2027 = vshrl.u32 %v2026, 7
        %v2028 = vsub.s32 4, %v2027
        %v2029 = vrot.slane %v1975, %v2028
        %v2030 = vlaneseq
        %v2031 = vshrl.u32 %v2030, 7
        %v2032 = vsub.s32 5, %v2031
        %v2033 = vrot.slane %v1975, %v2032
        %v2034 = vlaneseq
        %v2035 = vshrl.u32 %v2034, 7
        %v2036 = vsub.s32 6, %v2035
        %v2037 = vrot.slane %v1975, %v2036
        %v2038 = vlaneseq
        %v2039 = vshrl.u32 %v2038, 7
        %v2040 = vsub.s32 7, %v2039
        %v2041 = vrot.slane %v1975, %v2040
        %v2066 = vunpack.c.l.b16 %v1966
        %v2067 = vunpack.c.h.b16 %v1966
        %v2068 = vunpack.c.l.b16 %v1967
        %v2069 = vunpack.c.h.b16 %v1967
        %v2070 = vunpack.c.l.b16 %v1968
        %v2071 = vunpack.c.h.b16 %v1968
        %v2072 = vunpack.c.l.b16 %v1969
        %v2073 = vunpack.c.h.b16 %v1969
        %v2074 = vunpack.c.l.b16 %v1970
        %v2075 = vunpack.c.h.b16 %v1970
        %v2076 = vunpack.c.l.b16 %v1971
        %v2077 = vunpack.c.h.b16 %v1971
        %v2078 = vunpack.c.l.b16 %v1972
        %v2079 = vunpack.c.h.b16 %v1972
        %v2080 = vunpack.c.l.b16 %v1973
        %v2081 = vunpack.c.h.b16 %v1973
        %v2082 = vpack.c.b16 %v2066, %v2066
        %v2083 = vpack.c.b16 %v2067, %v2067
        %v2084 = vpack.c.b16 %v2068, %v2068
        %v2085 = vpack.c.b16 %v2069, %v2069
        %v2086 = vpack.c.b16 %v2070, %v2070
        %v2087 = vpack.c.b16 %v2071, %v2071
        %v2088 = vpack.c.b16 %v2072, %v2072
        %v2089 = vpack.c.b16 %v2073, %v2073
        %v2090 = vpack.c.b16 %v2074, %v2074
        %v2091 = vpack.c.b16 %v2075, %v2075
        %v2092 = vpack.c.b16 %v2076, %v2076
        %v2093 = vpack.c.b16 %v2077, %v2077
        %v2094 = vpack.c.b16 %v2078, %v2078
        %v2095 = vpack.c.b16 %v2079, %v2079
        %v2096 = vpack.c.b16 %v2080, %v2080
        %v2097 = vpack.c.b16 %v2081, %v2081
        %v2099 = vsel %vm904, %v1965, 0
        %v2102 = vsel %vm908, %v2082, 0
        %v2105 = vsel %vm908, %v2083, 0
        %v2108 = vsel %vm908, %v2084, 0
        %v2111 = vsel %vm908, %v2085, 0
        %v2114 = vsel %vm908, %v2086, 0
        %v2117 = vsel %vm908, %v2087, 0
        %v2120 = vsel %vm908, %v2088, 0
        %v2123 = vsel %vm908, %v2089, 0
        %v2126 = vsel %vm908, %v2090, 0
        %v2129 = vsel %vm908, %v2091, 0
        %v2132 = vsel %vm908, %v2092, 0
        %v2135 = vsel %vm908, %v2093, 0
        %v2138 = vsel %vm908, %v2094, 0
        %v2141 = vsel %vm908, %v2095, 0
        %v2144 = vsel %vm908, %v2096, 0
        %v2147 = vsel %vm908, %v2097, 0
        %2149 = vmatprep.subr.bf16.mxu0 %v2105
        %2150 = vmatpush1.bf16.msra.mxu0 %v2102
        %2151 = vmatprep.subr.bf16.mxu0 0
        %2152 = vmatpush1.bf16.msra.mxu0 0
        %2153 = vmatprep.subr.bf16.mxu0 0
        %2154 = vmatpush1.bf16.msra.mxu0 0
        %2155 = vmatprep.subr.bf16.mxu0 0
        %2156 = vmatpush1.bf16.msra.mxu0 0
        %2157 = vmatprep.subr.bf16.mxu0 0
        %2158 = vmatpush1.bf16.msra.mxu0 0
        %2159 = vmatprep.subr.bf16.mxu0 0
        %2160 = vmatpush1.bf16.msra.mxu0 0
        %2161 = vmatprep.subr.bf16.mxu0 0
        %2162 = vmatpush1.bf16.msra.mxu0 0
        %2163 = vmatprep.subr.bf16.mxu0 0
        %2164 = vmatpush1.bf16.msra.mxu0 0
        %2165 = vmatprep.subr.bf16.mxu0 0
        %2166 = vmatpush1.bf16.msra.mxu0 0
        %2167 = vmatprep.subr.bf16.mxu0 0
        %2168 = vmatpush1.bf16.msra.mxu0 0
        %2169 = vmatprep.subr.bf16.mxu0 0
        %2170 = vmatpush1.bf16.msra.mxu0 0
        %2171 = vmatprep.subr.bf16.mxu0 0
        %2172 = vmatpush1.bf16.msra.mxu0 0
        %2173 = vmatprep.subr.bf16.mxu0 0
        %2174 = vmatpush1.bf16.msra.mxu0 0
        %2175 = vmatprep.subr.bf16.mxu0 0
        %2176 = vmatpush1.bf16.msra.mxu0 0
        %2177 = vmatprep.subr.bf16.mxu0 0
        %2178 = vmatpush1.bf16.msra.mxu0 0
        %2179 = vmatprep.subr.bf16.mxu0 0
        %2180 = vmatpush1.bf16.msra.mxu0 0
        %2181 = vmatprep.mubr.bf16.mxu0 0
        %2182 = vmatmul.mubr.bf16.gmra.mrb[0].mxu0 %v2099
        %v2183 = vpop.f32.mrb[0].mxu0
        %v2184 = vadd.f32 %v1981, %v2183
        %v2185 = vpop.f32.mrb[0].mxu0
        %v2186 = vadd.f32 %v1985, %v2185
        %v2187 = vpop.f32.mrb[0].mxu0
        %v2188 = vadd.f32 %v1981, %v2187
        %v2189 = vpop.f32.mrb[0].mxu0
        %v2190 = vadd.f32 %v1985, %v2189
        %2191 = vdwg.mxu0
        %2192 = vmatprep.subr.bf16.mxu0 %v2111
        %2193 = vmatpush1.bf16.msra.mxu0 %v2108
        %2194 = vmatprep.subr.bf16.mxu0 0
        %2195 = vmatpush1.bf16.msra.mxu0 0
        %2196 = vmatprep.subr.bf16.mxu0 0
        %2197 = vmatpush1.bf16.msra.mxu0 0
        %2198 = vmatprep.subr.bf16.mxu0 0
        %2199 = vmatpush1.bf16.msra.mxu0 0
        %2200 = vmatprep.subr.bf16.mxu0 0
        %2201 = vmatpush1.bf16.msra.mxu0 0
        %2202 = vmatprep.subr.bf16.mxu0 0
        %2203 = vmatpush1.bf16.msra.mxu0 0
        %2204 = vmatprep.subr.bf16.mxu0 0
        %2205 = vmatpush1.bf16.msra.mxu0 0
        %2206 = vmatprep.subr.bf16.mxu0 0
        %2207 = vmatpush1.bf16.msra.mxu0 0
        %2208 = vmatprep.subr.bf16.mxu0 0
        %2209 = vmatpush1.bf16.msra.mxu0 0
        %2210 = vmatprep.subr.bf16.mxu0 0
        %2211 = vmatpush1.bf16.msra.mxu0 0
        %2212 = vmatprep.subr.bf16.mxu0 0
        %2213 = vmatpush1.bf16.msra.mxu0 0
        %2214 = vmatprep.subr.bf16.mxu0 0
        %2215 = vmatpush1.bf16.msra.mxu0 0
        %2216 = vmatprep.subr.bf16.mxu0 0
        %2217 = vmatpush1.bf16.msra.mxu0 0
        %2218 = vmatprep.subr.bf16.mxu0 0
        %2219 = vmatpush1.bf16.msra.mxu0 0
        %2220 = vmatprep.subr.bf16.mxu0 0
        %2221 = vmatpush1.bf16.msra.mxu0 0
        %2222 = vmatprep.subr.bf16.mxu0 0
        %2223 = vmatpush1.bf16.msra.mxu0 0
        %2224 = vmatprep.mubr.bf16.mxu0 0
        %2225 = vmatmul.mubr.bf16.gmra.mrb[0].mxu0 %v2099
        %v2226 = vpop.f32.mrb[0].mxu0
        %v2227 = vadd.f32 %v1989, %v2226
        %v2228 = vpop.f32.mrb[0].mxu0
        %v2229 = vadd.f32 %v1993, %v2228
        %v2230 = vpop.f32.mrb[0].mxu0
        %v2231 = vadd.f32 %v1989, %v2230
        %v2232 = vpop.f32.mrb[0].mxu0
        %v2233 = vadd.f32 %v1993, %v2232
        %2234 = vdwg.mxu0
        %2235 = vmatprep.subr.bf16.mxu0 %v2117
        %2236 = vmatpush1.bf16.msra.mxu0 %v2114
        %2237 = vmatprep.subr.bf16.mxu0 0
        %2238 = vmatpush1.bf16.msra.mxu0 0
        %2239 = vmatprep.subr.bf16.mxu0 0
        %2240 = vmatpush1.bf16.msra.mxu0 0
        %2241 = vmatprep.subr.bf16.mxu0 0
        %2242 = vmatpush1.bf16.msra.mxu0 0
        %2243 = vmatprep.subr.bf16.mxu0 0
        %2244 = vmatpush1.bf16.msra.mxu0 0
        %2245 = vmatprep.subr.bf16.mxu0 0
        %2246 = vmatpush1.bf16.msra.mxu0 0
        %2247 = vmatprep.subr.bf16.mxu0 0
        %2248 = vmatpush1.bf16.msra.mxu0 0
        %2249 = vmatprep.subr.bf16.mxu0 0
        %2250 = vmatpush1.bf16.msra.mxu0 0
        %2251 = vmatprep.subr.bf16.mxu0 0
        %2252 = vmatpush1.bf16.msra.mxu0 0
        %2253 = vmatprep.subr.bf16.mxu0 0
        %2254 = vmatpush1.bf16.msra.mxu0 0
        %2255 = vmatprep.subr.bf16.mxu0 0
        %2256 = vmatpush1.bf16.msra.mxu0 0
        %2257 = vmatprep.subr.bf16.mxu0 0
        %2258 = vmatpush1.bf16.msra.mxu0 0
        %2259 = vmatprep.subr.bf16.mxu0 0
        %2260 = vmatpush1.bf16.msra.mxu0 0
        %2261 = vmatprep.subr.bf16.mxu0 0
        %2262 = vmatpush1.bf16.msra.mxu0 0
        %2263 = vmatprep.subr.bf16.mxu0 0
        %2264 = vmatpush1.bf16.msra.mxu0 0
        %2265 = vmatprep.subr.bf16.mxu0 0
        %2266 = vmatpush1.bf16.msra.mxu0 0
        %2267 = vmatprep.mubr.bf16.mxu0 0
        %2268 = vmatmul.mubr.bf16.gmra.mrb[0].mxu0 %v2099
        %v2269 = vpop.f32.mrb[0].mxu0
        %v2270 = vadd.f32 %v1997, %v2269
        %v2271 = vpop.f32.mrb[0].mxu0
        %v2272 = vadd.f32 %v2001, %v2271
        %v2273 = vpop.f32.mrb[0].mxu0
        %v2274 = vadd.f32 %v1997, %v2273
        %v2275 = vpop.f32.mrb[0].mxu0
        %v2276 = vadd.f32 %v2001, %v2275
        %2277 = vdwg.mxu0
        %2278 = vmatprep.subr.bf16.mxu0 %v2123
        %2279 = vmatpush1.bf16.msra.mxu0 %v2120
        %2280 = vmatprep.subr.bf16.mxu0 0
        %2281 = vmatpush1.bf16.msra.mxu0 0
        %2282 = vmatprep.subr.bf16.mxu0 0
        %2283 = vmatpush1.bf16.msra.mxu0 0
        %2284 = vmatprep.subr.bf16.mxu0 0
        %2285 = vmatpush1.bf16.msra.mxu0 0
        %2286 = vmatprep.subr.bf16.mxu0 0
        %2287 = vmatpush1.bf16.msra.mxu0 0
        %2288 = vmatprep.subr.bf16.mxu0 0
        %2289 = vmatpush1.bf16.msra.mxu0 0
        %2290 = vmatprep.subr.bf16.mxu0 0
        %2291 = vmatpush1.bf16.msra.mxu0 0
        %2292 = vmatprep.subr.bf16.mxu0 0
        %2293 = vmatpush1.bf16.msra.mxu0 0
        %2294 = vmatprep.subr.bf16.mxu0 0
        %2295 = vmatpush1.bf16.msra.mxu0 0
        %2296 = vmatprep.subr.bf16.mxu0 0
        %2297 = vmatpush1.bf16.msra.mxu0 0
        %2298 = vmatprep.subr.bf16.mxu0 0
        %2299 = vmatpush1.bf16.msra.mxu0 0
        %2300 = vmatprep.subr.bf16.mxu0 0
        %2301 = vmatpush1.bf16.msra.mxu0 0
        %2302 = vmatprep.subr.bf16.mxu0 0
        %2303 = vmatpush1.bf16.msra.mxu0 0
        %2304 = vmatprep.subr.bf16.mxu0 0
        %2305 = vmatpush1.bf16.msra.mxu0 0
        %2306 = vmatprep.subr.bf16.mxu0 0
        %2307 = vmatpush1.bf16.msra.mxu0 0
        %2308 = vmatprep.subr.bf16.mxu0 0
        %2309 = vmatpush1.bf16.msra.mxu0 0
        %2310 = vmatprep.mubr.bf16.mxu0 0
        %2311 = vmatmul.mubr.bf16.gmra.mrb[0].mxu0 %v2099
        %v2312 = vpop.f32.mrb[0].mxu0
        %v2313 = vadd.f32 %v2005, %v2312
        %v2314 = vpop.f32.mrb[0].mxu0
        %v2315 = vadd.f32 %v2009, %v2314
        %v2316 = vpop.f32.mrb[0].mxu0
        %v2317 = vadd.f32 %v2005, %v2316
        %v2318 = vpop.f32.mrb[0].mxu0
        %v2319 = vadd.f32 %v2009, %v2318
        %2320 = vdwg.mxu0
        %2321 = vmatprep.subr.bf16.mxu0 %v2129
        %2322 = vmatpush1.bf16.msra.mxu0 %v2126
        %2323 = vmatprep.subr.bf16.mxu0 0
        %2324 = vmatpush1.bf16.msra.mxu0 0
        %2325 = vmatprep.subr.bf16.mxu0 0
        %2326 = vmatpush1.bf16.msra.mxu0 0
        %2327 = vmatprep.subr.bf16.mxu0 0
        %2328 = vmatpush1.bf16.msra.mxu0 0
        %2329 = vmatprep.subr.bf16.mxu0 0
        %2330 = vmatpush1.bf16.msra.mxu0 0
        %2331 = vmatprep.subr.bf16.mxu0 0
        %2332 = vmatpush1.bf16.msra.mxu0 0
        %2333 = vmatprep.subr.bf16.mxu0 0
        %2334 = vmatpush1.bf16.msra.mxu0 0
        %2335 = vmatprep.subr.bf16.mxu0 0
        %2336 = vmatpush1.bf16.msra.mxu0 0
        %2337 = vmatprep.subr.bf16.mxu0 0
        %2338 = vmatpush1.bf16.msra.mxu0 0
        %2339 = vmatprep.subr.bf16.mxu0 0
        %2340 = vmatpush1.bf16.msra.mxu0 0
        %2341 = vmatprep.subr.bf16.mxu0 0
        %2342 = vmatpush1.bf16.msra.mxu0 0
        %2343 = vmatprep.subr.bf16.mxu0 0
        %2344 = vmatpush1.bf16.msra.mxu0 0
        %2345 = vmatprep.subr.bf16.mxu0 0
        %2346 = vmatpush1.bf16.msra.mxu0 0
        %2347 = vmatprep.subr.bf16.mxu0 0
        %2348 = vmatpush1.bf16.msra.mxu0 0
        %2349 = vmatprep.subr.bf16.mxu0 0
        %2350 = vmatpush1.bf16.msra.mxu0 0
        %2351 = vmatprep.subr.bf16.mxu0 0
        %2352 = vmatpush1.bf16.msra.mxu0 0
        %2353 = vmatprep.mubr.bf16.mxu0 0
        %2354 = vmatmul.mubr.bf16.gmra.mrb[0].mxu0 %v2099
        %v2355 = vpop.f32.mrb[0].mxu0
        %v2356 = vadd.f32 %v2013, %v2355
        %v2357 = vpop.f32.mrb[0].mxu0
        %v2358 = vadd.f32 %v2017, %v2357
        %v2359 = vpop.f32.mrb[0].mxu0
        %v2360 = vadd.f32 %v2013, %v2359
        %v2361 = vpop.f32.mrb[0].mxu0
        %v2362 = vadd.f32 %v2017, %v2361
        %2363 = vdwg.mxu0
        %2364 = vmatprep.subr.bf16.mxu0 %v2135
        %2365 = vmatpush1.bf16.msra.mxu0 %v2132
        %2366 = vmatprep.subr.bf16.mxu0 0
        %2367 = vmatpush1.bf16.msra.mxu0 0
        %2368 = vmatprep.subr.bf16.mxu0 0
        %2369 = vmatpush1.bf16.msra.mxu0 0
        %2370 = vmatprep.subr.bf16.mxu0 0
        %2371 = vmatpush1.bf16.msra.mxu0 0
        %2372 = vmatprep.subr.bf16.mxu0 0
        %2373 = vmatpush1.bf16.msra.mxu0 0
        %2374 = vmatprep.subr.bf16.mxu0 0
        %2375 = vmatpush1.bf16.msra.mxu0 0
        %2376 = vmatprep.subr.bf16.mxu0 0
        %2377 = vmatpush1.bf16.msra.mxu0 0
        %2378 = vmatprep.subr.bf16.mxu0 0
        %2379 = vmatpush1.bf16.msra.mxu0 0
        %2380 = vmatprep.subr.bf16.mxu0 0
        %2381 = vmatpush1.bf16.msra.mxu0 0
        %2382 = vmatprep.subr.bf16.mxu0 0
        %2383 = vmatpush1.bf16.msra.mxu0 0
        %2384 = vmatprep.subr.bf16.mxu0 0
        %2385 = vmatpush1.bf16.msra.mxu0 0
        %2386 = vmatprep.subr.bf16.mxu0 0
        %2387 = vmatpush1.bf16.msra.mxu0 0
        %2388 = vmatprep.subr.bf16.mxu0 0
        %2389 = vmatpush1.bf16.msra.mxu0 0
        %2390 = vmatprep.subr.bf16.mxu0 0
        %2391 = vmatpush1.bf16.msra.mxu0 0
        %2392 = vmatprep.subr.bf16.mxu0 0
        %2393 = vmatpush1.bf16.msra.mxu0 0
        %2394 = vmatprep.subr.bf16.mxu0 0
        %2395 = vmatpush1.bf16.msra.mxu0 0
        %2396 = vmatprep.mubr.bf16.mxu0 0
        %2397 = vmatmul.mubr.bf16.gmra.mrb[0].mxu0 %v2099
        %v2398 = vpop.f32.mrb[0].mxu0
        %v2399 = vadd.f32 %v2021, %v2398
        %v2400 = vpop.f32.mrb[0].mxu0
        %v2401 = vadd.f32 %v2025, %v2400
        %v2402 = vpop.f32.mrb[0].mxu0
        %v2403 = vadd.f32 %v2021, %v2402
        %v2404 = vpop.f32.mrb[0].mxu0
        %v2405 = vadd.f32 %v2025, %v2404
        %2406 = vdwg.mxu0
        %2407 = vmatprep.subr.bf16.mxu0 %v2141
        %2408 = vmatpush1.bf16.msra.mxu0 %v2138
        %2409 = vmatprep.subr.bf16.mxu0 0
        %2410 = vmatpush1.bf16.msra.mxu0 0
        %2411 = vmatprep.subr.bf16.mxu0 0
        %2412 = vmatpush1.bf16.msra.mxu0 0
        %2413 = vmatprep.subr.bf16.mxu0 0
        %2414 = vmatpush1.bf16.msra.mxu0 0
        %2415 = vmatprep.subr.bf16.mxu0 0
        %2416 = vmatpush1.bf16.msra.mxu0 0
        %2417 = vmatprep.subr.bf16.mxu0 0
        %2418 = vmatpush1.bf16.msra.mxu0 0
        %2419 = vmatprep.subr.bf16.mxu0 0
        %2420 = vmatpush1.bf16.msra.mxu0 0
        %2421 = vmatprep.subr.bf16.mxu0 0
        %2422 = vmatpush1.bf16.msra.mxu0 0
        %2423 = vmatprep.subr.bf16.mxu0 0
        %2424 = vmatpush1.bf16.msra.mxu0 0
        %2425 = vmatprep.subr.bf16.mxu0 0
        %2426 = vmatpush1.bf16.msra.mxu0 0
        %2427 = vmatprep.subr.bf16.mxu0 0
        %2428 = vmatpush1.bf16.msra.mxu0 0
        %2429 = vmatprep.subr.bf16.mxu0 0
        %2430 = vmatpush1.bf16.msra.mxu0 0
        %2431 = vmatprep.subr.bf16.mxu0 0
        %2432 = vmatpush1.bf16.msra.mxu0 0
        %2433 = vmatprep.subr.bf16.mxu0 0
        %2434 = vmatpush1.bf16.msra.mxu0 0
        %2435 = vmatprep.subr.bf16.mxu0 0
        %2436 = vmatpush1.bf16.msra.mxu0 0
        %2437 = vmatprep.subr.bf16.mxu0 0
        %2438 = vmatpush1.bf16.msra.mxu0 0
        %2439 = vmatprep.mubr.bf16.mxu0 0
        %2440 = vmatmul.mubr.bf16.gmra.mrb[0].mxu0 %v2099
        %v2441 = vpop.f32.mrb[0].mxu0
        %v2442 = vadd.f32 %v2029, %v2441
        %v2443 = vpop.f32.mrb[0].mxu0
        %v2444 = vadd.f32 %v2033, %v2443
        %v2445 = vpop.f32.mrb[0].mxu0
        %v2446 = vadd.f32 %v2029, %v2445
        %v2447 = vpop.f32.mrb[0].mxu0
        %v2448 = vadd.f32 %v2033, %v2447
        %2449 = vdwg.mxu0
        %2450 = vmatprep.subr.bf16.mxu0 %v2147
        %2451 = vmatpush1.bf16.msra.mxu0 %v2144
        %2452 = vmatprep.subr.bf16.mxu0 0
        %2453 = vmatpush1.bf16.msra.mxu0 0
        %2454 = vmatprep.subr.bf16.mxu0 0
        %2455 = vmatpush1.bf16.msra.mxu0 0
        %2456 = vmatprep.subr.bf16.mxu0 0
        %2457 = vmatpush1.bf16.msra.mxu0 0
        %2458 = vmatprep.subr.bf16.mxu0 0
        %2459 = vmatpush1.bf16.msra.mxu0 0
        %2460 = vmatprep.subr.bf16.mxu0 0
        %2461 = vmatpush1.bf16.msra.mxu0 0
        %2462 = vmatprep.subr.bf16.mxu0 0
        %2463 = vmatpush1.bf16.msra.mxu0 0
        %2464 = vmatprep.subr.bf16.mxu0 0
        %2465 = vmatpush1.bf16.msra.mxu0 0
        %2466 = vmatprep.subr.bf16.mxu0 0
        %2467 = vmatpush1.bf16.msra.mxu0 0
        %2468 = vmatprep.subr.bf16.mxu0 0
        %2469 = vmatpush1.bf16.msra.mxu0 0
        %2470 = vmatprep.subr.bf16.mxu0 0
        %2471 = vmatpush1.bf16.msra.mxu0 0
        %2472 = vmatprep.subr.bf16.mxu0 0
        %2473 = vmatpush1.bf16.msra.mxu0 0
        %2474 = vmatprep.subr.bf16.mxu0 0
        %2475 = vmatpush1.bf16.msra.mxu0 0
        %2476 = vmatprep.subr.bf16.mxu0 0
        %2477 = vmatpush1.bf16.msra.mxu0 0
        %2478 = vmatprep.subr.bf16.mxu0 0
        %2479 = vmatpush1.bf16.msra.mxu0 0
        %2480 = vmatprep.subr.bf16.mxu0 0
        %2481 = vmatpush1.bf16.msra.mxu0 0
        %2482 = vmatprep.mubr.bf16.mxu0 0
        %2483 = vmatmul.mubr.bf16.gmra.mrb[0].mxu0 %v2099
        %v2484 = vpop.f32.mrb[0].mxu0
        %v2485 = vadd.f32 %v2037, %v2484
        %v2486 = vpop.f32.mrb[0].mxu0
        %v2487 = vadd.f32 %v2041, %v2486
        %v2488 = vpop.f32.mrb[0].mxu0
        %v2489 = vadd.f32 %v2037, %v2488
        %v2490 = vpop.f32.mrb[0].mxu0
        %v2491 = vadd.f32 %v2041, %v2490
        %2492 = vdwg.mxu0
        %v2493 = vmax.f32 %v2184, 0.0
        %v2494 = vmax.f32 %v2186, 0.0
        %v2495 = vmax.f32 %v2227, 0.0
        %v2496 = vmax.f32 %v2229, 0.0
        %v2497 = vmax.f32 %v2270, 0.0
        %v2498 = vmax.f32 %v2272, 0.0
        %v2499 = vmax.f32 %v2313, 0.0
        %v2500 = vmax.f32 %v2315, 0.0
        %v2501 = vmax.f32 %v2356, 0.0
        %v2502 = vmax.f32 %v2358, 0.0
        %v2503 = vmax.f32 %v2399, 0.0
        %v2504 = vmax.f32 %v2401, 0.0
        %v2505 = vmax.f32 %v2442, 0.0
        %v2506 = vmax.f32 %v2444, 0.0
        %v2507 = vmax.f32 %v2485, 0.0
        %v2508 = vmax.f32 %v2487, 0.0
        %v2509 = vmax.f32 %v2188, 0.0
        %v2510 = vmax.f32 %v2190, 0.0
        %v2511 = vmax.f32 %v2231, 0.0
        %v2512 = vmax.f32 %v2233, 0.0
        %v2513 = vmax.f32 %v2274, 0.0
        %v2514 = vmax.f32 %v2276, 0.0
        %v2515 = vmax.f32 %v2317, 0.0
        %v2516 = vmax.f32 %v2319, 0.0
        %v2517 = vmax.f32 %v2360, 0.0
        %v2518 = vmax.f32 %v2362, 0.0
        %v2519 = vmax.f32 %v2403, 0.0
        %v2520 = vmax.f32 %v2405, 0.0
        %v2521 = vmax.f32 %v2446, 0.0
        %v2522 = vmax.f32 %v2448, 0.0
        %v2523 = vmax.f32 %v2489, 0.0
        %v2524 = vmax.f32 %v2491, 0.0
        %v2525 = vpack.c.bf16 %v2509, %v2493
        %v2526 = vpack.c.bf16 %v2510, %v2494
        %v2527 = vpack.c.bf16 %v2511, %v2495
        %v2528 = vpack.c.bf16 %v2512, %v2496
        %v2529 = vpack.c.bf16 %v2513, %v2497
        %v2530 = vpack.c.bf16 %v2514, %v2498
        %v2531 = vpack.c.bf16 %v2515, %v2499
        %v2532 = vpack.c.bf16 %v2516, %v2500
        %v2533 = vpack.c.bf16 %v2517, %v2501
        %v2534 = vpack.c.bf16 %v2518, %v2502
        %v2535 = vpack.c.bf16 %v2519, %v2503
        %v2536 = vpack.c.bf16 %v2520, %v2504
        %v2537 = vpack.c.bf16 %v2521, %v2505
        %v2538 = vpack.c.bf16 %v2522, %v2506
        %v2539 = vpack.c.bf16 %v2523, %v2507
        %v2540 = vpack.c.bf16 %v2524, %v2508
        %v2541 = vld [vmem:[%s765] sm:$0xff]
        %v2542 = vld [vmem:[%s765 + $0x8] sm:$0xff]
        %v2543 = vld [vmem:[%s765 + $0x10] sm:$0xff]
        %v2544 = vld [vmem:[%s765 + $0x18] sm:$0xff]
        %v2545 = vld [vmem:[%s765 + $0x20] sm:$0xff]
        %v2546 = vld [vmem:[%s765 + $0x28] sm:$0xff]
        %v2547 = vld [vmem:[%s765 + $0x30] sm:$0xff]
        %v2548 = vld [vmem:[%s765 + $0x38] sm:$0xff]
        %v2549 = vld [vmem:[%s773] sm:$0x1]
        %v2551 = vlaneseq
        %v2552 = vshrl.u32 %v2551, 7
        %v2553 = vsub.s32 0, %v2552
        %v2554 = vrot.slane %v2549, %v2553
        %v2564 = vunpack.c.l.b16 %v2541
        %v2565 = vunpack.c.h.b16 %v2541
        %v2566 = vunpack.c.l.b16 %v2542
        %v2567 = vunpack.c.h.b16 %v2542
        %v2568 = vunpack.c.l.b16 %v2543
        %v2569 = vunpack.c.h.b16 %v2543
        %v2570 = vunpack.c.l.b16 %v2544
        %v2571 = vunpack.c.h.b16 %v2544
        %v2572 = vunpack.c.l.b16 %v2545
        %v2573 = vunpack.c.h.b16 %v2545
        %v2574 = vunpack.c.l.b16 %v2546
        %v2575 = vunpack.c.h.b16 %v2546
        %v2576 = vunpack.c.l.b16 %v2547
        %v2577 = vunpack.c.h.b16 %v2547
        %v2578 = vunpack.c.l.b16 %v2548
        %v2579 = vunpack.c.h.b16 %v2548
        %v2580 = vpack.c.b16 %v2564, %v2564
        %v2581 = vpack.c.b16 %v2565, %v2565
        %v2582 = vpack.c.b16 %v2566, %v2566
        %v2583 = vpack.c.b16 %v2567, %v2567
        %v2584 = vpack.c.b16 %v2568, %v2568
        %v2585 = vpack.c.b16 %v2569, %v2569
        %v2586 = vpack.c.b16 %v2570, %v2570
        %v2587 = vpack.c.b16 %v2571, %v2571
        %v2588 = vpack.c.b16 %v2572, %v2572
        %v2589 = vpack.c.b16 %v2573, %v2573
        %v2590 = vpack.c.b16 %v2574, %v2574
        %v2591 = vpack.c.b16 %v2575, %v2575
        %v2592 = vpack.c.b16 %v2576, %v2576
        %v2593 = vpack.c.b16 %v2577, %v2577
        %v2594 = vpack.c.b16 %v2578, %v2578
        %v2595 = vpack.c.b16 %v2579, %v2579
        %2612 = vmatprep.subr.bf16.mxu0 %v2581
        %2613 = vmatpush1.bf16.xpose.msra.mxu0 %v2580
        %2614 = vmatprep.subr.bf16.mxu0 0
        %2615 = vmatpush1.bf16.xpose.msra.mxu0 0
        %2616 = vmatprep.subr.bf16.mxu0 0
        %2617 = vmatpush1.bf16.xpose.msra.mxu0 0
        %2618 = vmatprep.subr.bf16.mxu0 0
        %2619 = vmatpush1.bf16.xpose.msra.mxu0 0
        %2620 = vmatprep.subr.bf16.mxu0 0
        %2621 = vmatpush1.bf16.xpose.msra.mxu0 0
        %2622 = vmatprep.subr.bf16.mxu0 0
        %2623 = vmatpush1.bf16.xpose.msra.mxu0 0
        %2624 = vmatprep.subr.bf16.mxu0 0
        %2625 = vmatpush1.bf16.xpose.msra.mxu0 0
        %2626 = vmatprep.subr.bf16.mxu0 0
        %2627 = vmatpush1.bf16.xpose.msra.mxu0 0
        %2628 = vmatprep.subr.bf16.mxu0 0
        %2629 = vmatpush1.bf16.xpose.msra.mxu0 0
        %2630 = vmatprep.subr.bf16.mxu0 0
        %2631 = vmatpush1.bf16.xpose.msra.mxu0 0
        %2632 = vmatprep.subr.bf16.mxu0 0
        %2633 = vmatpush1.bf16.xpose.msra.mxu0 0
        %2634 = vmatprep.subr.bf16.mxu0 0
        %2635 = vmatpush1.bf16.xpose.msra.mxu0 0
        %2636 = vmatprep.subr.bf16.mxu0 0
        %2637 = vmatpush1.bf16.xpose.msra.mxu0 0
        %2638 = vmatprep.subr.bf16.mxu0 0
        %2639 = vmatpush1.bf16.xpose.msra.mxu0 0
        %2640 = vmatprep.subr.bf16.mxu0 0
        %2641 = vmatpush1.bf16.xpose.msra.mxu0 0
        %2642 = vmatprep.subr.bf16.mxu0 0
        %2643 = vmatpush1.bf16.xpose.msra.mxu0 0
        %2644 = vmatprep.mubr.bf16.mxu0 %v2526
        %2645 = vmatmul.mubr.bf16.gmra.mrb[0].mxu0 %v2525
        %v2646 = vpop.f32.mrb[0].mxu0
        %v2647 = vadd.f32 %v2554, %v2646
        %v2648 = vpop.f32.mrb[0].mxu0
        %v2649 = vpop.f32.mrb[0].mxu0
        %v2650 = vadd.f32 %v2554, %v2649
        %v2651 = vpop.f32.mrb[0].mxu0
        %2652 = vdwg.mxu0
        %2653 = vmatprep.subr.bf16.mxu0 %v2583
        %2654 = vmatpush1.bf16.xpose.msra.mxu0 %v2582
        %2655 = vmatprep.subr.bf16.mxu0 0
        %2656 = vmatpush1.bf16.xpose.msra.mxu0 0
        %2657 = vmatprep.subr.bf16.mxu0 0
        %2658 = vmatpush1.bf16.xpose.msra.mxu0 0
        %2659 = vmatprep.subr.bf16.mxu0 0
        %2660 = vmatpush1.bf16.xpose.msra.mxu0 0
        %2661 = vmatprep.subr.bf16.mxu0 0
        %2662 = vmatpush1.bf16.xpose.msra.mxu0 0
        %2663 = vmatprep.subr.bf16.mxu0 0
        %2664 = vmatpush1.bf16.xpose.msra.mxu0 0
        %2665 = vmatprep.subr.bf16.mxu0 0
        %2666 = vmatpush1.bf16.xpose.msra.mxu0 0
        %2667 = vmatprep.subr.bf16.mxu0 0
        %2668 = vmatpush1.bf16.xpose.msra.mxu0 0
        %2669 = vmatprep.subr.bf16.mxu0 0
        %2670 = vmatpush1.bf16.xpose.msra.mxu0 0
        %2671 = vmatprep.subr.bf16.mxu0 0
        %2672 = vmatpush1.bf16.xpose.msra.mxu0 0
        %2673 = vmatprep.subr.bf16.mxu0 0
        %2674 = vmatpush1.bf16.xpose.msra.mxu0 0
        %2675 = vmatprep.subr.bf16.mxu0 0
        %2676 = vmatpush1.bf16.xpose.msra.mxu0 0
        %2677 = vmatprep.subr.bf16.mxu0 0
        %2678 = vmatpush1.bf16.xpose.msra.mxu0 0
        %2679 = vmatprep.subr.bf16.mxu0 0
        %2680 = vmatpush1.bf16.xpose.msra.mxu0 0
        %2681 = vmatprep.subr.bf16.mxu0 0
        %2682 = vmatpush1.bf16.xpose.msra.mxu0 0
        %2683 = vmatprep.subr.bf16.mxu0 0
        %2684 = vmatpush1.bf16.xpose.msra.mxu0 0
        %2685 = vmatprep.mubr.bf16.mxu0 %v2528
        %2686 = vmatmul.mubr.bf16.gmra.mrb[0].mxu0 %v2527
        %v2687 = vpop.f32.mrb[0].mxu0
        %v2688 = vadd.f32 %v2647, %v2687
        %v2689 = vpop.f32.mrb[0].mxu0
        %v2690 = vpop.f32.mrb[0].mxu0
        %v2691 = vadd.f32 %v2650, %v2690
        %v2692 = vpop.f32.mrb[0].mxu0
        %2693 = vdwg.mxu0
        %2694 = vmatprep.subr.bf16.mxu0 %v2585
        %2695 = vmatpush1.bf16.xpose.msra.mxu0 %v2584
        %2696 = vmatprep.subr.bf16.mxu0 0
        %2697 = vmatpush1.bf16.xpose.msra.mxu0 0
        %2698 = vmatprep.subr.bf16.mxu0 0
        %2699 = vmatpush1.bf16.xpose.msra.mxu0 0
        %2700 = vmatprep.subr.bf16.mxu0 0
        %2701 = vmatpush1.bf16.xpose.msra.mxu0 0
        %2702 = vmatprep.subr.bf16.mxu0 0
        %2703 = vmatpush1.bf16.xpose.msra.mxu0 0
        %2704 = vmatprep.subr.bf16.mxu0 0
        %2705 = vmatpush1.bf16.xpose.msra.mxu0 0
        %2706 = vmatprep.subr.bf16.mxu0 0
        %2707 = vmatpush1.bf16.xpose.msra.mxu0 0
        %2708 = vmatprep.subr.bf16.mxu0 0
        %2709 = vmatpush1.bf16.xpose.msra.mxu0 0
        %2710 = vmatprep.subr.bf16.mxu0 0
        %2711 = vmatpush1.bf16.xpose.msra.mxu0 0
        %2712 = vmatprep.subr.bf16.mxu0 0
        %2713 = vmatpush1.bf16.xpose.msra.mxu0 0
        %2714 = vmatprep.subr.bf16.mxu0 0
        %2715 = vmatpush1.bf16.xpose.msra.mxu0 0
        %2716 = vmatprep.subr.bf16.mxu0 0
        %2717 = vmatpush1.bf16.xpose.msra.mxu0 0
        %2718 = vmatprep.subr.bf16.mxu0 0
        %2719 = vmatpush1.bf16.xpose.msra.mxu0 0
        %2720 = vmatprep.subr.bf16.mxu0 0
        %2721 = vmatpush1.bf16.xpose.msra.mxu0 0
        %2722 = vmatprep.subr.bf16.mxu0 0
        %2723 = vmatpush1.bf16.xpose.msra.mxu0 0
        %2724 = vmatprep.subr.bf16.mxu0 0
        %2725 = vmatpush1.bf16.xpose.msra.mxu0 0
        %2726 = vmatprep.mubr.bf16.mxu0 %v2530
        %2727 = vmatmul.mubr.bf16.gmra.mrb[0].mxu0 %v2529
        %v2728 = vpop.f32.mrb[0].mxu0
        %v2729 = vadd.f32 %v2688, %v2728
        %v2730 = vpop.f32.mrb[0].mxu0
        %v2731 = vpop.f32.mrb[0].mxu0
        %v2732 = vadd.f32 %v2691, %v2731
        %v2733 = vpop.f32.mrb[0].mxu0
        %2734 = vdwg.mxu0
        %2735 = vmatprep.subr.bf16.mxu0 %v2587
        %2736 = vmatpush1.bf16.xpose.msra.mxu0 %v2586
        %2737 = vmatprep.subr.bf16.mxu0 0
        %2738 = vmatpush1.bf16.xpose.msra.mxu0 0
        %2739 = vmatprep.subr.bf16.mxu0 0
        %2740 = vmatpush1.bf16.xpose.msra.mxu0 0
        %2741 = vmatprep.subr.bf16.mxu0 0
        %2742 = vmatpush1.bf16.xpose.msra.mxu0 0
        %2743 = vmatprep.subr.bf16.mxu0 0
        %2744 = vmatpush1.bf16.xpose.msra.mxu0 0
        %2745 = vmatprep.subr.bf16.mxu0 0
        %2746 = vmatpush1.bf16.xpose.msra.mxu0 0
        %2747 = vmatprep.subr.bf16.mxu0 0
        %2748 = vmatpush1.bf16.xpose.msra.mxu0 0
        %2749 = vmatprep.subr.bf16.mxu0 0
        %2750 = vmatpush1.bf16.xpose.msra.mxu0 0
        %2751 = vmatprep.subr.bf16.mxu0 0
        %2752 = vmatpush1.bf16.xpose.msra.mxu0 0
        %2753 = vmatprep.subr.bf16.mxu0 0
        %2754 = vmatpush1.bf16.xpose.msra.mxu0 0
        %2755 = vmatprep.subr.bf16.mxu0 0
        %2756 = vmatpush1.bf16.xpose.msra.mxu0 0
        %2757 = vmatprep.subr.bf16.mxu0 0
        %2758 = vmatpush1.bf16.xpose.msra.mxu0 0
        %2759 = vmatprep.subr.bf16.mxu0 0
        %2760 = vmatpush1.bf16.xpose.msra.mxu0 0
        %2761 = vmatprep.subr.bf16.mxu0 0
        %2762 = vmatpush1.bf16.xpose.msra.mxu0 0
        %2763 = vmatprep.subr.bf16.mxu0 0
        %2764 = vmatpush1.bf16.xpose.msra.mxu0 0
        %2765 = vmatprep.subr.bf16.mxu0 0
        %2766 = vmatpush1.bf16.xpose.msra.mxu0 0
        %2767 = vmatprep.mubr.bf16.mxu0 %v2532
        %2768 = vmatmul.mubr.bf16.gmra.mrb[0].mxu0 %v2531
        %v2769 = vpop.f32.mrb[0].mxu0
        %v2770 = vadd.f32 %v2729, %v2769
        %v2771 = vpop.f32.mrb[0].mxu0
        %v2772 = vpop.f32.mrb[0].mxu0
        %v2773 = vadd.f32 %v2732, %v2772
        %v2774 = vpop.f32.mrb[0].mxu0
        %2775 = vdwg.mxu0
        %2776 = vmatprep.subr.bf16.mxu0 %v2589
        %2777 = vmatpush1.bf16.xpose.msra.mxu0 %v2588
        %2778 = vmatprep.subr.bf16.mxu0 0
        %2779 = vmatpush1.bf16.xpose.msra.mxu0 0
        %2780 = vmatprep.subr.bf16.mxu0 0
        %2781 = vmatpush1.bf16.xpose.msra.mxu0 0
        %2782 = vmatprep.subr.bf16.mxu0 0
        %2783 = vmatpush1.bf16.xpose.msra.mxu0 0
        %2784 = vmatprep.subr.bf16.mxu0 0
        %2785 = vmatpush1.bf16.xpose.msra.mxu0 0
        %2786 = vmatprep.subr.bf16.mxu0 0
        %2787 = vmatpush1.bf16.xpose.msra.mxu0 0
        %2788 = vmatprep.subr.bf16.mxu0 0
        %2789 = vmatpush1.bf16.xpose.msra.mxu0 0
        %2790 = vmatprep.subr.bf16.mxu0 0
        %2791 = vmatpush1.bf16.xpose.msra.mxu0 0
        %2792 = vmatprep.subr.bf16.mxu0 0
        %2793 = vmatpush1.bf16.xpose.msra.mxu0 0
        %2794 = vmatprep.subr.bf16.mxu0 0
        %2795 = vmatpush1.bf16.xpose.msra.mxu0 0
        %2796 = vmatprep.subr.bf16.mxu0 0
        %2797 = vmatpush1.bf16.xpose.msra.mxu0 0
        %2798 = vmatprep.subr.bf16.mxu0 0
        %2799 = vmatpush1.bf16.xpose.msra.mxu0 0
        %2800 = vmatprep.subr.bf16.mxu0 0
        %2801 = vmatpush1.bf16.xpose.msra.mxu0 0
        %2802 = vmatprep.subr.bf16.mxu0 0
        %2803 = vmatpush1.bf16.xpose.msra.mxu0 0
        %2804 = vmatprep.subr.bf16.mxu0 0
        %2805 = vmatpush1.bf16.xpose.msra.mxu0 0
        %2806 = vmatprep.subr.bf16.mxu0 0
        %2807 = vmatpush1.bf16.xpose.msra.mxu0 0
        %2808 = vmatprep.mubr.bf16.mxu0 %v2534
        %2809 = vmatmul.mubr.bf16.gmra.mrb[0].mxu0 %v2533
        %v2810 = vpop.f32.mrb[0].mxu0
        %v2811 = vadd.f32 %v2770, %v2810
        %v2812 = vpop.f32.mrb[0].mxu0
        %v2813 = vpop.f32.mrb[0].mxu0
        %v2814 = vadd.f32 %v2773, %v2813
        %v2815 = vpop.f32.mrb[0].mxu0
        %2816 = vdwg.mxu0
        %2817 = vmatprep.subr.bf16.mxu0 %v2591
        %2818 = vmatpush1.bf16.xpose.msra.mxu0 %v2590
        %2819 = vmatprep.subr.bf16.mxu0 0
        %2820 = vmatpush1.bf16.xpose.msra.mxu0 0
        %2821 = vmatprep.subr.bf16.mxu0 0
        %2822 = vmatpush1.bf16.xpose.msra.mxu0 0
        %2823 = vmatprep.subr.bf16.mxu0 0
        %2824 = vmatpush1.bf16.xpose.msra.mxu0 0
        %2825 = vmatprep.subr.bf16.mxu0 0
        %2826 = vmatpush1.bf16.xpose.msra.mxu0 0
        %2827 = vmatprep.subr.bf16.mxu0 0
        %2828 = vmatpush1.bf16.xpose.msra.mxu0 0
        %2829 = vmatprep.subr.bf16.mxu0 0
        %2830 = vmatpush1.bf16.xpose.msra.mxu0 0
        %2831 = vmatprep.subr.bf16.mxu0 0
        %2832 = vmatpush1.bf16.xpose.msra.mxu0 0
        %2833 = vmatprep.subr.bf16.mxu0 0
        %2834 = vmatpush1.bf16.xpose.msra.mxu0 0
        %2835 = vmatprep.subr.bf16.mxu0 0
        %2836 = vmatpush1.bf16.xpose.msra.mxu0 0
        %2837 = vmatprep.subr.bf16.mxu0 0
        %2838 = vmatpush1.bf16.xpose.msra.mxu0 0
        %2839 = vmatprep.subr.bf16.mxu0 0
        %2840 = vmatpush1.bf16.xpose.msra.mxu0 0
        %2841 = vmatprep.subr.bf16.mxu0 0
        %2842 = vmatpush1.bf16.xpose.msra.mxu0 0
        %2843 = vmatprep.subr.bf16.mxu0 0
        %2844 = vmatpush1.bf16.xpose.msra.mxu0 0
        %2845 = vmatprep.subr.bf16.mxu0 0
        %2846 = vmatpush1.bf16.xpose.msra.mxu0 0
        %2847 = vmatprep.subr.bf16.mxu0 0
        %2848 = vmatpush1.bf16.xpose.msra.mxu0 0
        %2849 = vmatprep.mubr.bf16.mxu0 %v2536
        %2850 = vmatmul.mubr.bf16.gmra.mrb[0].mxu0 %v2535
        %v2851 = vpop.f32.mrb[0].mxu0
        %v2852 = vadd.f32 %v2811, %v2851
        %v2853 = vpop.f32.mrb[0].mxu0
        %v2854 = vpop.f32.mrb[0].mxu0
        %v2855 = vadd.f32 %v2814, %v2854
        %v2856 = vpop.f32.mrb[0].mxu0
        %2857 = vdwg.mxu0
        %2858 = vmatprep.subr.bf16.mxu0 %v2593
        %2859 = vmatpush1.bf16.xpose.msra.mxu0 %v2592
        %2860 = vmatprep.subr.bf16.mxu0 0
        %2861 = vmatpush1.bf16.xpose.msra.mxu0 0
        %2862 = vmatprep.subr.bf16.mxu0 0
        %2863 = vmatpush1.bf16.xpose.msra.mxu0 0
        %2864 = vmatprep.subr.bf16.mxu0 0
        %2865 = vmatpush1.bf16.xpose.msra.mxu0 0
        %2866 = vmatprep.subr.bf16.mxu0 0
        %2867 = vmatpush1.bf16.xpose.msra.mxu0 0
        %2868 = vmatprep.subr.bf16.mxu0 0
        %2869 = vmatpush1.bf16.xpose.msra.mxu0 0
        %2870 = vmatprep.subr.bf16.mxu0 0
        %2871 = vmatpush1.bf16.xpose.msra.mxu0 0
        %2872 = vmatprep.subr.bf16.mxu0 0
        %2873 = vmatpush1.bf16.xpose.msra.mxu0 0
        %2874 = vmatprep.subr.bf16.mxu0 0
        %2875 = vmatpush1.bf16.xpose.msra.mxu0 0
        %2876 = vmatprep.subr.bf16.mxu0 0
        %2877 = vmatpush1.bf16.xpose.msra.mxu0 0
        %2878 = vmatprep.subr.bf16.mxu0 0
        %2879 = vmatpush1.bf16.xpose.msra.mxu0 0
        %2880 = vmatprep.subr.bf16.mxu0 0
        %2881 = vmatpush1.bf16.xpose.msra.mxu0 0
        %2882 = vmatprep.subr.bf16.mxu0 0
        %2883 = vmatpush1.bf16.xpose.msra.mxu0 0
        %2884 = vmatprep.subr.bf16.mxu0 0
        %2885 = vmatpush1.bf16.xpose.msra.mxu0 0
        %2886 = vmatprep.subr.bf16.mxu0 0
        %2887 = vmatpush1.bf16.xpose.msra.mxu0 0
        %2888 = vmatprep.subr.bf16.mxu0 0
        %2889 = vmatpush1.bf16.xpose.msra.mxu0 0
        %2890 = vmatprep.mubr.bf16.mxu0 %v2538
        %2891 = vmatmul.mubr.bf16.gmra.mrb[0].mxu0 %v2537
        %v2892 = vpop.f32.mrb[0].mxu0
        %v2893 = vadd.f32 %v2852, %v2892
        %v2894 = vpop.f32.mrb[0].mxu0
        %v2895 = vpop.f32.mrb[0].mxu0
        %v2896 = vadd.f32 %v2855, %v2895
        %v2897 = vpop.f32.mrb[0].mxu0
        %2898 = vdwg.mxu0
        %2899 = vmatprep.subr.bf16.mxu0 %v2595
        %2900 = vmatpush1.bf16.xpose.msra.mxu0 %v2594
        %2901 = vmatprep.subr.bf16.mxu0 0
        %2902 = vmatpush1.bf16.xpose.msra.mxu0 0
        %2903 = vmatprep.subr.bf16.mxu0 0
        %2904 = vmatpush1.bf16.xpose.msra.mxu0 0
        %2905 = vmatprep.subr.bf16.mxu0 0
        %2906 = vmatpush1.bf16.xpose.msra.mxu0 0
        %2907 = vmatprep.subr.bf16.mxu0 0
        %2908 = vmatpush1.bf16.xpose.msra.mxu0 0
        %2909 = vmatprep.subr.bf16.mxu0 0
        %2910 = vmatpush1.bf16.xpose.msra.mxu0 0
        %2911 = vmatprep.subr.bf16.mxu0 0
        %2912 = vmatpush1.bf16.xpose.msra.mxu0 0
        %2913 = vmatprep.subr.bf16.mxu0 0
        %2914 = vmatpush1.bf16.xpose.msra.mxu0 0
        %2915 = vmatprep.subr.bf16.mxu0 0
        %2916 = vmatpush1.bf16.xpose.msra.mxu0 0
        %2917 = vmatprep.subr.bf16.mxu0 0
        %2918 = vmatpush1.bf16.xpose.msra.mxu0 0
        %2919 = vmatprep.subr.bf16.mxu0 0
        %2920 = vmatpush1.bf16.xpose.msra.mxu0 0
        %2921 = vmatprep.subr.bf16.mxu0 0
        %2922 = vmatpush1.bf16.xpose.msra.mxu0 0
        %2923 = vmatprep.subr.bf16.mxu0 0
        %2924 = vmatpush1.bf16.xpose.msra.mxu0 0
        %2925 = vmatprep.subr.bf16.mxu0 0
        %2926 = vmatpush1.bf16.xpose.msra.mxu0 0
        %2927 = vmatprep.subr.bf16.mxu0 0
        %2928 = vmatpush1.bf16.xpose.msra.mxu0 0
        %2929 = vmatprep.subr.bf16.mxu0 0
        %2930 = vmatpush1.bf16.xpose.msra.mxu0 0
        %2931 = vmatprep.mubr.bf16.mxu0 %v2540
        %2932 = vmatmul.mubr.bf16.gmra.mrb[0].mxu0 %v2539
        %v2933 = vpop.f32.mrb[0].mxu0
        %v2934 = vadd.f32 %v2893, %v2933
        %v2935 = vpop.f32.mrb[0].mxu0
        %v2936 = vpop.f32.mrb[0].mxu0
        %v2937 = vadd.f32 %v2896, %v2936
        %v2938 = vpop.f32.mrb[0].mxu0
        %2939 = vdwg.mxu0
        %v2940 = vadd.f32 %v1963, %v2934
        %v2941 = vadd.f32 %v1964, %v2937
        %v2942 = vld [vmem:[%s739] sm:$0x1]
        %v2943 = vld [vmem:[%s747] sm:$0x1]
        %v2944 = vsel %vm904, %v2940, 0.0
        %2945 = vadd.xlane.f32.xlu0 %v2944
        %v2946 = vpop.xlane.xlu0 %2945
        %v2947 = vsel %vm904, %v2941, 0.0
        %2948 = vadd.xlane.f32.xlu0 %v2947
        %v2949 = vpop.xlane.xlu0 %2948
        %v2950 = vmul.f32 %v2946, %v1928
        %v2951 = vmul.f32 %v2949, %v1928
        %v2952 = vsub.f32 %v2940, %v2950
        %v2953 = vsub.f32 %v2941, %v2951
        %v2954 = vmul.f32 %v2952, %v2952
        %v2955 = vmul.f32 %v2953, %v2953
        %v2956 = vsel %vm904, %v2954, 0.0
        %2957 = vadd.xlane.f32.xlu0 %v2956
        %v2958 = vpop.xlane.xlu0 %2957
        %v2959 = vsel %vm904, %v2955, 0.0
        %2960 = vadd.xlane.f32.xlu0 %v2959
        %v2961 = vpop.xlane.xlu0 %2960
        %v2962 = vmul.f32 %v2958, %v1928
        %v2963 = vmul.f32 %v2961, %v1928
        %v2964 = vadd.f32 %v2962, 1e-05
        %v2965 = vadd.f32 %v2963, 1e-05
        %v2966 = vrsqrt.pop %v2964
        %v2967 = vrsqrt.pop %v2965
        %v2968 = vmul.f32 %v2952, %v2966
        %v2969 = vmul.f32 %v2953, %v2967
        %v2971 = vlaneseq
        %v2972 = vshrl.u32 %v2971, 7
        %v2973 = vsub.s32 0, %v2972
        %v2974 = vrot.slane %v2942, %v2973
        %v2976 = vmul.f32 %v2968, %v2974
        %v2977 = vmul.f32 %v2969, %v2974
        %v2979 = vlaneseq
        %v2980 = vshrl.u32 %v2979, 7
        %v2981 = vsub.s32 0, %v2980
        %v2982 = vrot.slane %v2943, %v2981
        %v2984 = vadd.f32 %v2976, %v2982
        %v2985 = vadd.f32 %v2977, %v2982
        %2986 = vst.msk [vmem:[#allocation2] sm:$0xff] %vm904, %v2984
        %2987 = vst.msk [vmem:[#allocation2 + $0x8] sm:$0xff] %vm904, %v2985
        %p2988 = scmp.eq.s32.totalorder %s44, 2
        // Predicated region
        $region133: #{transformer_forward.1} parent=87 // pred_check
          %p2989 = pneg %p2988
        $region134: #{transformer_forward.1} parent=87 // pred_check_branch
          %2991 = sbr.rel (%p2989) target = $region136
        $region135: #{transformer_forward.1} parent=87 // pred_region
          %v2992 = vpack.c.bf16 %v2985, %v2985
          %v2993 = vld [vmem:[%s13] sm:$0xff]
          %v2994 = vld [vmem:[#allocation17] sm:$0x3]
          %v2996 = vlaneseq
          %v2997 = vshrl.u32 %v2996, 7
          %v2998 = vsub.s32 0, %v2997
          %v2999 = vrot.slane %v2994, %v2998
          %v3000 = vlaneseq
          %v3001 = vshrl.u32 %v3000, 7
          %v3002 = vsub.s32 1, %v3001
          %v3003 = vrot.slane %v2994, %v3002
          %v3007 = vunpack.c.l.b16 %v2993
          %v3008 = vunpack.c.h.b16 %v2993
          %v3009 = vpack.c.b16 %v3007, %v3007
          %v3010 = vpack.c.b16 %v3008, %v3008
          %v3012 = vsel %vm904, %v2992, 0
          %v3015 = vsel %vm908, %v3009, 0
          %v3018 = vsel %vm908, %v3010, 0
          %3020 = vmatprep.subr.bf16.mxu0 %v3018
          %3021 = vmatpush1.bf16.msra.mxu0 %v3015
          %3022 = vmatprep.subr.bf16.mxu0 0
          %3023 = vmatpush1.bf16.msra.mxu0 0
          %3024 = vmatprep.subr.bf16.mxu0 0
          %3025 = vmatpush1.bf16.msra.mxu0 0
          %3026 = vmatprep.subr.bf16.mxu0 0
          %3027 = vmatpush1.bf16.msra.mxu0 0
          %3028 = vmatprep.subr.bf16.mxu0 0
          %3029 = vmatpush1.bf16.msra.mxu0 0
          %3030 = vmatprep.subr.bf16.mxu0 0
          %3031 = vmatpush1.bf16.msra.mxu0 0
          %3032 = vmatprep.subr.bf16.mxu0 0
          %3033 = vmatpush1.bf16.msra.mxu0 0
          %3034 = vmatprep.subr.bf16.mxu0 0
          %3035 = vmatpush1.bf16.msra.mxu0 0
          %3036 = vmatprep.subr.bf16.mxu0 0
          %3037 = vmatpush1.bf16.msra.mxu0 0
          %3038 = vmatprep.subr.bf16.mxu0 0
          %3039 = vmatpush1.bf16.msra.mxu0 0
          %3040 = vmatprep.subr.bf16.mxu0 0
          %3041 = vmatpush1.bf16.msra.mxu0 0
          %3042 = vmatprep.subr.bf16.mxu0 0
          %3043 = vmatpush1.bf16.msra.mxu0 0
          %3044 = vmatprep.subr.bf16.mxu0 0
          %3045 = vmatpush1.bf16.msra.mxu0 0
          %3046 = vmatprep.subr.bf16.mxu0 0
          %3047 = vmatpush1.bf16.msra.mxu0 0
          %3048 = vmatprep.subr.bf16.mxu0 0
          %3049 = vmatpush1.bf16.msra.mxu0 0
          %3050 = vmatprep.subr.bf16.mxu0 0
          %3051 = vmatpush1.bf16.msra.mxu0 0
          %3052 = vmatprep.mubr.bf16.mxu0 0
          %3053 = vmatmul.mubr.bf16.gmra.mrb[0].mxu0 %v3012
          %v3054 = vpop.f32.mrb[0].mxu0
          %v3055 = vadd.f32 %v2999, %v3054
          %v3056 = vpop.f32.mrb[0].mxu0
          %v3057 = vadd.f32 %v3003, %v3056
          %v3058 = vpop.f32.mrb[0].mxu0
          %v3059 = vpop.f32.mrb[0].mxu0
          %3060 = vdwg.mxu0
          %v3061 = vmax.f32 %v3055, 0.0
          %v3062 = vmax.f32 %v3057, 0.0
          %v3063 = vpack.c.bf16 %v3061, %v3061
          %v3064 = vpack.c.bf16 %v3062, %v3062
          %v3065 = vld [vmem:[%s15] sm:$0x77]
          %v3066 = vld [vmem:[%s16] sm:$0x1]
          %v3068 = vlaneseq
          %v3069 = vshrl.u32 %v3068, 7
          %v3070 = vsub.s32 0, %v3069
          %v3071 = vrot.slane %v3066, %v3070
          %v3074 = vunpack.c.l.b16 %v3065
          %v3075 = vunpack.c.h.b16 %v3065
          %v3076 = vpack.c.b16 %v3074, %v3074
          %v3077 = vpack.c.b16 %v3075, %v3075
          %3080 = vmatprep.subr.bf16.mxu0 %v3077
          %3081 = vmatpush1.bf16.xpose.msra.mxu0 %v3076
          %3082 = vmatprep.subr.bf16.mxu0 0
          %3083 = vmatpush1.bf16.xpose.msra.mxu0 0
          %3084 = vmatprep.subr.bf16.mxu0 0
          %3085 = vmatpush1.bf16.xpose.msra.mxu0 0
          %3086 = vmatprep.subr.bf16.mxu0 0
          %3087 = vmatpush1.bf16.xpose.msra.mxu0 0
          %3088 = vmatprep.subr.bf16.mxu0 0
          %3089 = vmatpush1.bf16.xpose.msra.mxu0 0
          %3090 = vmatprep.subr.bf16.mxu0 0
          %3091 = vmatpush1.bf16.xpose.msra.mxu0 0
          %3092 = vmatprep.subr.bf16.mxu0 0
          %3093 = vmatpush1.bf16.xpose.msra.mxu0 0
          %3094 = vmatprep.subr.bf16.mxu0 0
          %3095 = vmatpush1.bf16.xpose.msra.mxu0 0
          %3096 = vmatprep.subr.bf16.mxu0 0
          %3097 = vmatpush1.bf16.xpose.msra.mxu0 0
          %3098 = vmatprep.subr.bf16.mxu0 0
          %3099 = vmatpush1.bf16.xpose.msra.mxu0 0
          %3100 = vmatprep.subr.bf16.mxu0 0
          %3101 = vmatpush1.bf16.xpose.msra.mxu0 0
          %3102 = vmatprep.subr.bf16.mxu0 0
          %3103 = vmatpush1.bf16.xpose.msra.mxu0 0
          %3104 = vmatprep.subr.bf16.mxu0 0
          %3105 = vmatpush1.bf16.xpose.msra.mxu0 0
          %3106 = vmatprep.subr.bf16.mxu0 0
          %3107 = vmatpush1.bf16.xpose.msra.mxu0 0
          %3108 = vmatprep.subr.bf16.mxu0 0
          %3109 = vmatpush1.bf16.xpose.msra.mxu0 0
          %3110 = vmatprep.subr.bf16.mxu0 0
          %3111 = vmatpush1.bf16.xpose.msra.mxu0 0
          %3112 = vmatprep.mubr.bf16.mxu0 %v3064
          %3113 = vmatmul.mubr.bf16.gmra.mrb[0].mxu0 %v3063
          %v3114 = vpop.f32.mrb[0].mxu0
          %v3115 = vadd.f32 %v3071, %v3114
          %v3116 = vpop.f32.mrb[0].mxu0
          %v3117 = vpop.f32.mrb[0].mxu0
          %v3118 = vpop.f32.mrb[0].mxu0
          %3119 = vdwg.mxu0
          %vm3120 = vcmask 23552
          %v3121 = vsel %vm3120, %v3115, -inf
          %3122 = vmax.xlane.f32.xlu0 %v3121
          %v3123 = vpop.xlane.xlu0 %3122
          %v3124 = vsub.f32 %v3115, %v3123
          %v3125 = vmul.f32 %v3124, 1.442695
          %v3126 = vpow.pop %v3125
          %v3127 = vsel %vm3120, %v3126, 0.0
          %3128 = vadd.xlane.f32.xlu0 %v3127
          %v3129 = vpop.xlane.xlu0 %3128
          %v3130 = vrcp.pop %v3129
          %v3131 = vmul.f32 %v3126, %v3130
          %vm3132 = vcmask 48152
          %v3133 = vsel %vm3132, %v3115, -inf
          %3134 = vmax.xlane.f32.xlu0 %v3133
          %v3135 = vpop.xlane.xlu0 %3134
          %v3136 = vsub.f32 %v3115, %v3135
          %v3137 = vmul.f32 %v3136, 1.442695
          %v3138 = vpow.pop %v3137
          %3140 = vrot.lane.b32.xlu0 %v3138, 125
          %v3141 = vpop.permute.xlu0 %3140
          %v3143 = vsel %vm3120, %v3141, 0.0
          %3144 = vadd.xlane.f32.xlu0 %v3143
          %v3145 = vpop.xlane.xlu0 %3144
          %v3146 = vrcp.pop %v3145
          %v3147 = vmul.f32 %v3138, %v3146
          %v3148 = vsel %vm3120, %v3131, %v3147
          %vm3149 = vcmask 48128
          %3150 = vst.msk [vmem:[%s17] sm:$0xff] %vm3149, %v3148
        $region136: #{transformer_forward.1} parent=87 // pred_fallthru
          _
        // Predicated region
        $region137: #{transformer_forward.1} parent=87 // pred_check
          %p3151 = pneg %p474
        $region138: #{transformer_forward.1} parent=87 // pred_check_branch
          %3153 = sbr.rel (%p3151) target = $region140
        $region139: #{transformer_forward.1} parent=87 // pred_region
          _
        $region140: #{transformer_forward.1} parent=87 // pred_fallthru
          _
        // Predicated region
        $region141: #{transformer_forward.1} parent=87 // pred_check
          %p3154 = pneg %p474
        $region142: #{transformer_forward.1} parent=87 // pred_check_branch
          %3156 = sbr.rel (%p3154) target = $region144
        $region143: #{transformer_forward.1} parent=87 // pred_region
          _
        $region144: #{transformer_forward.1} parent=87 // pred_fallthru
          _
      $region88: #{transformer_forward.1} parent=5 // pred_fallthru
        _
      %p3157 = scmp.le.s32.totalorder 2, %s39
      // Predicated region
      $region145: #{transformer_forward.1} parent=5 // pred_check
        %p3158 = pneg %p3157
      $region146: #{transformer_forward.1} parent=5 // pred_check_branch
        %3160 = sbr.rel (%p3158) target = $region148
      $region147: #{transformer_forward.1} parent=5 // pred_region
        %s3161 = ssub.s32 %s39, 2
      $region148: #{transformer_forward.1} parent=5 // pred_fallthru
        _
    $region6: #{transformer_forward.1} parent=1 // loop_footer
      %s43 = sadd.s32 1, %s39
    $region7: #{transformer_forward.1} parent=1 // loop_footer_branch
      %38 = sbr.rel target = $region3
    $region8: #{transformer_forward.1} parent=1 // loop_exit
      _
    %3162 = vsyncpa [#allocation4], 1
    %s3163 = scalar_lea.sflag [#allocation4], 1
    %3164 = vsyncpa %s3163, 1
    %3165 = vsyncpa [#allocation6], 1
    %s3166 = scalar_lea.sflag [#allocation6], 1
    %3167 = vsyncpa %s3166, 1
    %3168 = vsyncpa [#allocation9], 1
    %s3169 = scalar_lea.sflag [#allocation9], 1
    %3170 = vsyncpa %s3169, 1
    %3171 = vsyncpa [#allocation12], 1
    %s3172 = scalar_lea.sflag [#allocation12], 1
    %3173 = vsyncpa %s3172, 1
    %3174 = vsyncpa [#allocation15], 1
    %s3175 = scalar_lea.sflag [#allocation15], 1
    %3176 = vsyncpa %s3175, 1
    %3177 = vsyncpa [#allocation18], 1

</llo_original>
